<compile_context>
chip_gen: v6e
topology: v6e:2x2x1
jax: 0.10.0
libtpu: 0.0.40
codegen_flags: <defaults>
</compile_context>

<pallas_src>
import functools

import jax
import jax.numpy as jnp
from jax.experimental import pallas as pl
from jax.experimental.pallas import tpu as pltpu

NC_PAD = 128  # lane-padded output width


def fusion_kernel(img_ref, txt_ref, wconv_ref, bconv_ref,
                  wimg_ref, wtxt_ref, bout_ref, out_ref, *, H, W):
    # img_ref : (1, H+2, W+2, C)   bf16   (spatially padded NHWC image, one batch element)
    # txt_ref : (1, 1, T)          f32
    # wconv_ref: (9, C, Cmid)      bf16   (tap-major: t = ki*3 + kj)
    # bconv_ref: (1, Cmid)         f32
    # wimg_ref: (Cmid, NC_PAD)     f32    (folded image-path tail; pool scale folded in)
    # wtxt_ref: (T, NC_PAD)        f32    (folded text-path tail)
    # bout_ref: (1, NC_PAD)        f32    (folded bias)
    # out_ref : (1, 1, NC_PAD)     f32
    C = img_ref.shape[3]
    Cmid = wconv_ref.shape[2]

    x = img_ref[0]                                   # (H+2, W+2, C) bf16

    # ---- 3x3 conv (pad=1) as 9 shifted matmuls, f32 accumulation on the MXU ----
    acc = jnp.zeros((H * W, Cmid), jnp.float32)
    for t in range(9):
        ki, kj = t // 3, t % 3
        tap = x[ki:ki + H, kj:kj + W, :].reshape(H * W, C)          # (HW, C) bf16
        acc = acc + jnp.dot(tap, wconv_ref[t],
                            preferred_element_type=jnp.float32)     # (HW, Cmid) f32

    conv = jnp.maximum(acc + bconv_ref[...], 0.0)                   # bias + ReLU (f32)

    # ---- global average pool over HW: take the SUM only; the 1/(H*W) scale is
    #      folded into wimg_ref on the host side (pool and tail are both linear) ----
    pooled = jnp.sum(conv, axis=0, keepdims=True)                   # (1, Cmid) f32

    # ---- folded linear tail: pooled_sum @ Wimg_eff + text @ Wtxt_eff + b_eff ----
    txt = txt_ref[0]                                                 # (1, T) f32
    out = (jnp.dot(pooled, wimg_ref[...], preferred_element_type=jnp.float32)
           + jnp.dot(txt, wtxt_ref[...], preferred_element_type=jnp.float32)
           + bout_ref[...])                                          # (1, NC_PAD)
    out_ref[...] = out[None].astype(out_ref.dtype)                   # (1, 1, NC_PAD)


def fusion_forward(image, text_feat, params, num_classes):
    B, C, H, W = image.shape
    Hp, Wp = H + 2, W + 2

    # --- glue: NCHW -> NHWC, 1-pixel spatial halo, bf16 (dominant HBM traffic) ---
    img = jnp.transpose(image, (0, 2, 3, 1))
    img = jnp.pad(img, ((0, 0), (1, 1), (1, 1), (0, 0))).astype(jnp.bfloat16)

    txt = text_feat.astype(jnp.float32)[:, None, :]                  # (B, 1, T)
    T = txt.shape[2]

    # --- fold the purely-linear tail (no activation between these linears) and the
    #     1/(H*W) global-average-pool scale into the image-path weight ---
    with jax.default_matmul_precision("highest"):
        wimg_eff = (params['wmodel'] @ params['wib'] @ params['w2a']) * (1.0 / (H * W))
        wtxt_eff = params['wt'] @ params['w2b']                      # (T, NC)
        b_eff = (params['bmodel'] @ params['wib'] @ params['w2a']
                 + params['bib'] @ params['w2a']
                 + params['bt'] @ params['w2b']
                 + params['b2'])                                     # (1, NC)

    def padcols(a):                                                  # lane-pad to 128
        return jnp.pad(a, ((0, 0), (0, NC_PAD - a.shape[1]))).astype(jnp.float32)

    wimg_eff, wtxt_eff, b_eff = padcols(wimg_eff), padcols(wtxt_eff), padcols(b_eff)

    wconv = params['wconv'].astype(jnp.bfloat16)                     # (9, C, Cmid)
    bconv = params['bconv'].astype(jnp.float32)                      # (1, Cmid)
    Cmid = wconv.shape[2]

    kernel = functools.partial(fusion_kernel, H=H, W=W)

    out = pl.pallas_call(
        kernel,
        out_shape=jax.ShapeDtypeStruct((B, 1, NC_PAD), jnp.float32),
        grid=(B,),
        in_specs=[
            pl.BlockSpec((1, Hp, Wp, C), lambda b: (b, 0, 0, 0)),    # image (per batch)
            pl.BlockSpec((1, 1, T), lambda b: (b, 0, 0)),            # text  (per batch)
            pl.BlockSpec((9, C, Cmid), lambda b: (0, 0, 0)),         # conv weights
            pl.BlockSpec((1, Cmid), lambda b: (0, 0)),               # conv bias
            pl.BlockSpec((Cmid, NC_PAD), lambda b: (0, 0)),          # folded image tail
            pl.BlockSpec((T, NC_PAD), lambda b: (0, 0)),             # folded text tail
            pl.BlockSpec((1, NC_PAD), lambda b: (0, 0)),             # folded bias
        ],
        out_specs=pl.BlockSpec((1, 1, NC_PAD), lambda b: (b, 0, 0)),
        compiler_params=pltpu.CompilerParams(
            dimension_semantics=("parallel",)),                      # megacore on v7x
    )(img, txt, wconv, bconv, wimg_eff, wtxt_eff, b_eff)

    return out[:, 0, :num_classes]


def make_params(key, C, Cmid, model_ftrs, text_ftrs, num_classes):
    """PyTorch-style uniform(-1/sqrt(fan_in), 1/sqrt(fan_in)) init, f32."""
    min_feat = min(model_ftrs, text_ftrs)
    ks = jax.random.split(key, 10)

    def uni(k, shape, fan_in):
        bound = 1.0 / jnp.sqrt(jnp.float32(fan_in))
        return jax.random.uniform(k, shape, jnp.float32, -bound, bound)

    K = C * 9
    wconv = uni(ks[0], (9, C, Cmid), K)          # tap-major 3x3 conv weight
    bconv = uni(ks[1], (1, Cmid), K)
    wmodel = uni(ks[2], (Cmid, model_ftrs), Cmid)      # trunk's final Linear
    bmodel = uni(ks[3], (1, model_ftrs), Cmid)
    wib = uni(ks[4], (model_ftrs, min_feat), model_ftrs)   # image_branch Linear
    bib = uni(ks[5], (1, min_feat), model_ftrs)
    wt = uni(ks[6], (text_ftrs, min_feat), text_ftrs)      # text_branch Linear
    bt = uni(ks[7], (1, min_feat), text_ftrs)
    w2 = uni(ks[8], (2 * min_feat, num_classes), 2 * min_feat)  # fused_output Linear
    b2 = uni(ks[9], (1, num_classes), 2 * min_feat)
    return dict(wconv=wconv, bconv=bconv, wmodel=wmodel, bmodel=bmodel,
                wib=wib, bib=bib, wt=wt, bt=bt,
                w2a=w2[:min_feat], w2b=w2[min_feat:], b2=b2)


def reference_forward(image, text_feat, params):
    """Pure-JAX reference (unfolded, f32 math) on the same bf16-quantized image /
    conv weights the kernel consumes."""
    with jax.default_matmul_precision("highest"):
        B, C, H, W = image.shape
        img = jnp.transpose(image, (0, 2, 3, 1)).astype(jnp.bfloat16).astype(jnp.float32)
        imgp = jnp.pad(img, ((0, 0), (1, 1), (1, 1), (0, 0)))
        wconv = params['wconv'].astype(jnp.bfloat16).astype(jnp.float32)
        Cmid = wconv.shape[2]

        conv = jnp.zeros((B, H, W, Cmid), jnp.float32)
        for t in range(9):
            ki, kj = t // 3, t % 3
            conv = conv + jnp.einsum('bhwc,cm->bhwm',
                                     imgp[:, ki:ki + H, kj:kj + W, :], wconv[t])
        conv = jnp.maximum(conv + params['bconv'], 0.0)
        pooled = conv.mean(axis=(1, 2))                                # (B, Cmid)

        model_out = pooled @ params['wmodel'] + params['bmodel']       # user model
        img_ft = model_out @ params['wib'] + params['bib']             # image_branch
        txt_ft = text_feat @ params['wt'] + params['bt']               # text_branch
        fused = jnp.concatenate([img_ft, txt_ft], axis=1)              # cat([img, squeeze(txt)])
        w2 = jnp.concatenate([params['w2a'], params['w2b']], axis=0)
        return fused @ w2 + params['b2']


if __name__ == "__main__":
    # Small shapes consistent with the module.
    B, C, H, W = 2, 4, 16, 16
    Cmid = 8
    model_ftrs = 32
    text_ftrs = 64
    num_classes = 5

    key = jax.random.PRNGKey(0)
    k_img, k_txt, k_param = jax.random.split(key, 3)

    image = jax.random.normal(k_img, (B, C, H, W), jnp.float32)
    text_feat = jax.random.normal(k_txt, (B, text_ftrs), jnp.float32)
    params = make_params(k_param, C, Cmid, model_ftrs, text_ftrs, num_classes)

    out = fusion_forward(image, text_feat, params, num_classes)
    out = jax.block_until_ready(out)

    ref = reference_forward(image, text_feat, params)
    assert out.shape == (B, num_classes)
    assert jnp.allclose(out, ref, atol=2e-3, rtol=2e-3), \
        float(jnp.max(jnp.abs(out - ref)))

    print("KERNEL_OK")
</pallas_src>

<mosaic_0001>
module attributes {stable_mosaic.version = 11 : i64} {
  func.func @fusion_kernel(%arg0: i32, %arg1: memref<1x18x18x4xbf16, #tpu.memory_space<vmem>>, %arg2: memref<1x1x64xf32, #tpu.memory_space<vmem>>, %arg3: memref<9x4x8xbf16, #tpu.memory_space<vmem>>, %arg4: memref<1x8xf32, #tpu.memory_space<vmem>>, %arg5: memref<8x128xf32, #tpu.memory_space<vmem>>, %arg6: memref<64x128xf32, #tpu.memory_space<vmem>>, %arg7: memref<1x128xf32, #tpu.memory_space<vmem>>, %arg8: memref<1x1x128xf32, #tpu.memory_space<vmem>>) attributes {dimension_semantics = [#tpu.dimension_semantics<parallel>], iteration_bounds = array<i64: 2>, scalar_prefetch = 0 : i64, scratch_operands = 0 : i64, tpu.core_type = #tpu.core_type<tc>, window_params = [{transform_indices = @transform_0, window_bounds = array<i64: 1, 18, 18, 4>}, {transform_indices = @transform_1, window_bounds = array<i64: 1, 1, 64>}, {pipeline_mode = #tpu.pipeline_mode<synchronous>, transform_indices = @transform_2, window_bounds = array<i64: 9, 4, 8>}, {pipeline_mode = #tpu.pipeline_mode<synchronous>, transform_indices = @transform_3, window_bounds = array<i64: 1, 8>}, {pipeline_mode = #tpu.pipeline_mode<synchronous>, transform_indices = @transform_4, window_bounds = array<i64: 8, 128>}, {pipeline_mode = #tpu.pipeline_mode<synchronous>, transform_indices = @transform_5, window_bounds = array<i64: 64, 128>}, {pipeline_mode = #tpu.pipeline_mode<synchronous>, transform_indices = @transform_6, window_bounds = array<i64: 1, 128>}, {transform_indices = @transform_7, window_bounds = array<i64: 1, 1, 128>}]} {
    %c0 = arith.constant 0 : index
    %c0_0 = arith.constant 0 : index
    %c0_1 = arith.constant 0 : index
    %c0_2 = arith.constant 0 : index
    %0 = vector.load %arg1[%c0, %c0_0, %c0_1, %c0_2] : memref<1x18x18x4xbf16, #tpu.memory_space<vmem>>, vector<1x18x18x4xbf16>
    %1 = vector.shape_cast %0 : vector<1x18x18x4xbf16> to vector<18x18x4xbf16>
    %cst = arith.constant 0.000000e+00 : f32
    %2 = vector.broadcast %cst : f32 to vector<256x8xf32>
    %3 = vector.extract_strided_slice %1 {offsets = [0, 0, 0], sizes = [16, 16, 4], strides = [1, 1, 1]} : vector<18x18x4xbf16> to vector<16x16x4xbf16>
    %4 = vector.shape_cast %3 : vector<16x16x4xbf16> to vector<256x4xbf16>
    %c0_3 = arith.constant 0 : index
    %c0_4 = arith.constant 0 : index
    %c0_5 = arith.constant 0 : index
    %5 = vector.load %arg3[%c0_3, %c0_4, %c0_5] : memref<9x4x8xbf16, #tpu.memory_space<vmem>>, vector<1x4x8xbf16>
    %6 = vector.shape_cast %5 : vector<1x4x8xbf16> to vector<4x8xbf16>
    %cst_6 = arith.constant dense<0.000000e+00> : vector<256x8xf32>
    %7 = tpu.matmul %4, %6, %cst_6 {dimension_numbers = #tpu.dot_dimension_numbers<[1], [0], [0], [1], [0, 0, 1, 1], [], []>} : vector<256x4xbf16>, vector<4x8xbf16>, vector<256x8xf32> -> vector<256x8xf32>
    %8 = arith.addf %2, %7 : vector<256x8xf32>
    %9 = vector.extract_strided_slice %1 {offsets = [0, 1, 0], sizes = [16, 16, 4], strides = [1, 1, 1]} : vector<18x18x4xbf16> to vector<16x16x4xbf16>
    %10 = vector.shape_cast %9 : vector<16x16x4xbf16> to vector<256x4xbf16>
    %c1 = arith.constant 1 : index
    %c0_7 = arith.constant 0 : index
    %c0_8 = arith.constant 0 : index
    %11 = vector.load %arg3[%c1, %c0_7, %c0_8] : memref<9x4x8xbf16, #tpu.memory_space<vmem>>, vector<1x4x8xbf16>
    %12 = vector.shape_cast %11 : vector<1x4x8xbf16> to vector<4x8xbf16>
    %cst_9 = arith.constant dense<0.000000e+00> : vector<256x8xf32>
    %13 = tpu.matmul %10, %12, %cst_9 {dimension_numbers = #tpu.dot_dimension_numbers<[1], [0], [0], [1], [0, 0, 1, 1], [], []>} : vector<256x4xbf16>, vector<4x8xbf16>, vector<256x8xf32> -> vector<256x8xf32>
    %14 = arith.addf %8, %13 : vector<256x8xf32>
    %15 = vector.extract_strided_slice %1 {offsets = [0, 2, 0], sizes = [16, 16, 4], strides = [1, 1, 1]} : vector<18x18x4xbf16> to vector<16x16x4xbf16>
    %16 = vector.shape_cast %15 : vector<16x16x4xbf16> to vector<256x4xbf16>
    %c2 = arith.constant 2 : index
    %c0_10 = arith.constant 0 : index
    %c0_11 = arith.constant 0 : index
    %17 = vector.load %arg3[%c2, %c0_10, %c0_11] : memref<9x4x8xbf16, #tpu.memory_space<vmem>>, vector<1x4x8xbf16>
    %18 = vector.shape_cast %17 : vector<1x4x8xbf16> to vector<4x8xbf16>
    %cst_12 = arith.constant dense<0.000000e+00> : vector<256x8xf32>
    %19 = tpu.matmul %16, %18, %cst_12 {dimension_numbers = #tpu.dot_dimension_numbers<[1], [0], [0], [1], [0, 0, 1, 1], [], []>} : vector<256x4xbf16>, vector<4x8xbf16>, vector<256x8xf32> -> vector<256x8xf32>
    %20 = arith.addf %14, %19 : vector<256x8xf32>
    %21 = vector.extract_strided_slice %1 {offsets = [1, 0, 0], sizes = [16, 16, 4], strides = [1, 1, 1]} : vector<18x18x4xbf16> to vector<16x16x4xbf16>
    %22 = vector.shape_cast %21 : vector<16x16x4xbf16> to vector<256x4xbf16>
    %c3 = arith.constant 3 : index
    %c0_13 = arith.constant 0 : index
    %c0_14 = arith.constant 0 : index
    %23 = vector.load %arg3[%c3, %c0_13, %c0_14] : memref<9x4x8xbf16, #tpu.memory_space<vmem>>, vector<1x4x8xbf16>
    %24 = vector.shape_cast %23 : vector<1x4x8xbf16> to vector<4x8xbf16>
    %cst_15 = arith.constant dense<0.000000e+00> : vector<256x8xf32>
    %25 = tpu.matmul %22, %24, %cst_15 {dimension_numbers = #tpu.dot_dimension_numbers<[1], [0], [0], [1], [0, 0, 1, 1], [], []>} : vector<256x4xbf16>, vector<4x8xbf16>, vector<256x8xf32> -> vector<256x8xf32>
    %26 = arith.addf %20, %25 : vector<256x8xf32>
    %27 = vector.extract_strided_slice %1 {offsets = [1, 1, 0], sizes = [16, 16, 4], strides = [1, 1, 1]} : vector<18x18x4xbf16> to vector<16x16x4xbf16>
    %28 = vector.shape_cast %27 : vector<16x16x4xbf16> to vector<256x4xbf16>
    %c4 = arith.constant 4 : index
    %c0_16 = arith.constant 0 : index
    %c0_17 = arith.constant 0 : index
    %29 = vector.load %arg3[%c4, %c0_16, %c0_17] : memref<9x4x8xbf16, #tpu.memory_space<vmem>>, vector<1x4x8xbf16>
    %30 = vector.shape_cast %29 : vector<1x4x8xbf16> to vector<4x8xbf16>
    %cst_18 = arith.constant dense<0.000000e+00> : vector<256x8xf32>
    %31 = tpu.matmul %28, %30, %cst_18 {dimension_numbers = #tpu.dot_dimension_numbers<[1], [0], [0], [1], [0, 0, 1, 1], [], []>} : vector<256x4xbf16>, vector<4x8xbf16>, vector<256x8xf32> -> vector<256x8xf32>
    %32 = arith.addf %26, %31 : vector<256x8xf32>
    %33 = vector.extract_strided_slice %1 {offsets = [1, 2, 0], sizes = [16, 16, 4], strides = [1, 1, 1]} : vector<18x18x4xbf16> to vector<16x16x4xbf16>
    %34 = vector.shape_cast %33 : vector<16x16x4xbf16> to vector<256x4xbf16>
    %c5 = arith.constant 5 : index
    %c0_19 = arith.constant 0 : index
    %c0_20 = arith.constant 0 : index
    %35 = vector.load %arg3[%c5, %c0_19, %c0_20] : memref<9x4x8xbf16, #tpu.memory_space<vmem>>, vector<1x4x8xbf16>
    %36 = vector.shape_cast %35 : vector<1x4x8xbf16> to vector<4x8xbf16>
    %cst_21 = arith.constant dense<0.000000e+00> : vector<256x8xf32>
    %37 = tpu.matmul %34, %36, %cst_21 {dimension_numbers = #tpu.dot_dimension_numbers<[1], [0], [0], [1], [0, 0, 1, 1], [], []>} : vector<256x4xbf16>, vector<4x8xbf16>, vector<256x8xf32> -> vector<256x8xf32>
    %38 = arith.addf %32, %37 : vector<256x8xf32>
    %39 = vector.extract_strided_slice %1 {offsets = [2, 0, 0], sizes = [16, 16, 4], strides = [1, 1, 1]} : vector<18x18x4xbf16> to vector<16x16x4xbf16>
    %40 = vector.shape_cast %39 : vector<16x16x4xbf16> to vector<256x4xbf16>
    %c6 = arith.constant 6 : index
    %c0_22 = arith.constant 0 : index
    %c0_23 = arith.constant 0 : index
    %41 = vector.load %arg3[%c6, %c0_22, %c0_23] : memref<9x4x8xbf16, #tpu.memory_space<vmem>>, vector<1x4x8xbf16>
    %42 = vector.shape_cast %41 : vector<1x4x8xbf16> to vector<4x8xbf16>
    %cst_24 = arith.constant dense<0.000000e+00> : vector<256x8xf32>
    %43 = tpu.matmul %40, %42, %cst_24 {dimension_numbers = #tpu.dot_dimension_numbers<[1], [0], [0], [1], [0, 0, 1, 1], [], []>} : vector<256x4xbf16>, vector<4x8xbf16>, vector<256x8xf32> -> vector<256x8xf32>
    %44 = arith.addf %38, %43 : vector<256x8xf32>
    %45 = vector.extract_strided_slice %1 {offsets = [2, 1, 0], sizes = [16, 16, 4], strides = [1, 1, 1]} : vector<18x18x4xbf16> to vector<16x16x4xbf16>
    %46 = vector.shape_cast %45 : vector<16x16x4xbf16> to vector<256x4xbf16>
    %c7 = arith.constant 7 : index
    %c0_25 = arith.constant 0 : index
    %c0_26 = arith.constant 0 : index
    %47 = vector.load %arg3[%c7, %c0_25, %c0_26] : memref<9x4x8xbf16, #tpu.memory_space<vmem>>, vector<1x4x8xbf16>
    %48 = vector.shape_cast %47 : vector<1x4x8xbf16> to vector<4x8xbf16>
    %cst_27 = arith.constant dense<0.000000e+00> : vector<256x8xf32>
    %49 = tpu.matmul %46, %48, %cst_27 {dimension_numbers = #tpu.dot_dimension_numbers<[1], [0], [0], [1], [0, 0, 1, 1], [], []>} : vector<256x4xbf16>, vector<4x8xbf16>, vector<256x8xf32> -> vector<256x8xf32>
    %50 = arith.addf %44, %49 : vector<256x8xf32>
    %51 = vector.extract_strided_slice %1 {offsets = [2, 2, 0], sizes = [16, 16, 4], strides = [1, 1, 1]} : vector<18x18x4xbf16> to vector<16x16x4xbf16>
    %52 = vector.shape_cast %51 : vector<16x16x4xbf16> to vector<256x4xbf16>
    %c8 = arith.constant 8 : index
    %c0_28 = arith.constant 0 : index
    %c0_29 = arith.constant 0 : index
    %53 = vector.load %arg3[%c8, %c0_28, %c0_29] : memref<9x4x8xbf16, #tpu.memory_space<vmem>>, vector<1x4x8xbf16>
    %54 = vector.shape_cast %53 : vector<1x4x8xbf16> to vector<4x8xbf16>
    %cst_30 = arith.constant dense<0.000000e+00> : vector<256x8xf32>
    %55 = tpu.matmul %52, %54, %cst_30 {dimension_numbers = #tpu.dot_dimension_numbers<[1], [0], [0], [1], [0, 0, 1, 1], [], []>} : vector<256x4xbf16>, vector<4x8xbf16>, vector<256x8xf32> -> vector<256x8xf32>
    %56 = arith.addf %50, %55 : vector<256x8xf32>
    %c0_31 = arith.constant 0 : index
    %c0_32 = arith.constant 0 : index
    %57 = vector.load %arg4[%c0_31, %c0_32] : memref<1x8xf32, #tpu.memory_space<vmem>>, vector<1x8xf32>
    %58 = vector.broadcast %57 : vector<1x8xf32> to vector<256x8xf32>
    %59 = arith.addf %56, %58 : vector<256x8xf32>
    %cst_33 = arith.constant 0.000000e+00 : f32
    %60 = vector.broadcast %cst_33 : f32 to vector<256x8xf32>
    %61 = arith.maximumf %59, %60 : vector<256x8xf32>
    %cst_34 = arith.constant dense<0.000000e+00> : vector<8xf32>
    %62 = vector.multi_reduction <add>, %61, %cst_34 [0] : vector<256x8xf32> to vector<8xf32>
    %63 = vector.shape_cast %62 : vector<8xf32> to vector<1x8xf32>
    %c0_35 = arith.constant 0 : index
    %c0_36 = arith.constant 0 : index
    %c0_37 = arith.constant 0 : index
    %64 = vector.load %arg2[%c0_35, %c0_36, %c0_37] : memref<1x1x64xf32, #tpu.memory_space<vmem>>, vector<1x1x64xf32>
    %65 = vector.shape_cast %64 : vector<1x1x64xf32> to vector<1x64xf32>
    %c0_38 = arith.constant 0 : index
    %c0_39 = arith.constant 0 : index
    %66 = vector.load %arg5[%c0_38, %c0_39] : memref<8x128xf32, #tpu.memory_space<vmem>>, vector<8x128xf32>
    %cst_40 = arith.constant dense<0.000000e+00> : vector<1x128xf32>
    %67 = tpu.matmul %63, %66, %cst_40 {dimension_numbers = #tpu.dot_dimension_numbers<[1], [0], [0], [1], [0, 0, 1, 1], [], []>} : vector<1x8xf32>, vector<8x128xf32>, vector<1x128xf32> -> vector<1x128xf32>
    %c0_41 = arith.constant 0 : index
    %c0_42 = arith.constant 0 : index
    %68 = vector.load %arg6[%c0_41, %c0_42] : memref<64x128xf32, #tpu.memory_space<vmem>>, vector<64x128xf32>
    %cst_43 = arith.constant dense<0.000000e+00> : vector<1x128xf32>
    %69 = tpu.matmul %65, %68, %cst_43 {dimension_numbers = #tpu.dot_dimension_numbers<[1], [0], [0], [1], [0, 0, 1, 1], [], []>} : vector<1x64xf32>, vector<64x128xf32>, vector<1x128xf32> -> vector<1x128xf32>
    %70 = arith.addf %67, %69 : vector<1x128xf32>
    %c0_44 = arith.constant 0 : index
    %c0_45 = arith.constant 0 : index
    %71 = vector.load %arg7[%c0_44, %c0_45] : memref<1x128xf32, #tpu.memory_space<vmem>>, vector<1x128xf32>
    %72 = arith.addf %70, %71 : vector<1x128xf32>
    %73 = vector.shape_cast %72 : vector<1x128xf32> to vector<1x1x128xf32>
    %c0_46 = arith.constant 0 : index
    %c0_47 = arith.constant 0 : index
    %c0_48 = arith.constant 0 : index
    %74 = vector.load %arg8[%c0_46, %c0_47, %c0_48] : memref<1x1x128xf32, #tpu.memory_space<vmem>>, vector<1x1x128xf32>
    tpu.vector_store %arg8[%c0_46, %c0_47, %c0_48], %73 {strides = array<i32>} : memref<1x1x128xf32, #tpu.memory_space<vmem>>, vector<1x1x128xf32>,
    return
  }
  func.func @transform_0(%arg0: i32) -> (i32, i32, i32, i32) {
    %c0_i32 = arith.constant 0 : i32
    %c0_i32_0 = arith.constant 0 : i32
    %c0_i32_1 = arith.constant 0 : i32
    %c0_i32_2 = arith.constant 0 : i32
    return %arg0, %c0_i32, %c0_i32_0, %c0_i32_1 : i32, i32, i32, i32
  }
  func.func @transform_1(%arg0: i32) -> (i32, i32, i32) {
    %c0_i32 = arith.constant 0 : i32
    %c0_i32_0 = arith.constant 0 : i32
    %c0_i32_1 = arith.constant 0 : i32
    return %arg0, %c0_i32, %c0_i32_0 : i32, i32, i32
  }
  func.func @transform_2(%arg0: i32) -> (i32, i32, i32) {
    %c0_i32 = arith.constant 0 : i32
    %c0_i32_0 = arith.constant 0 : i32
    %c0_i32_1 = arith.constant 0 : i32
    %c0_i32_2 = arith.constant 0 : i32
    return %c0_i32, %c0_i32_0, %c0_i32_1 : i32, i32, i32
  }
  func.func @transform_3(%arg0: i32) -> (i32, i32) {
    %c0_i32 = arith.constant 0 : i32
    %c0_i32_0 = arith.constant 0 : i32
    %c0_i32_1 = arith.constant 0 : i32
    return %c0_i32, %c0_i32_0 : i32, i32
  }
  func.func @transform_4(%arg0: i32) -> (i32, i32) {
    %c0_i32 = arith.constant 0 : i32
    %c0_i32_0 = arith.constant 0 : i32
    %c0_i32_1 = arith.constant 0 : i32
    return %c0_i32, %c0_i32_0 : i32, i32
  }
  func.func @transform_5(%arg0: i32) -> (i32, i32) {
    %c0_i32 = arith.constant 0 : i32
    %c0_i32_0 = arith.constant 0 : i32
    %c0_i32_1 = arith.constant 0 : i32
    return %c0_i32, %c0_i32_0 : i32, i32
  }
  func.func @transform_6(%arg0: i32) -> (i32, i32) {
    %c0_i32 = arith.constant 0 : i32
    %c0_i32_0 = arith.constant 0 : i32
    %c0_i32_1 = arith.constant 0 : i32
    return %c0_i32, %c0_i32_0 : i32, i32
  }
  func.func @transform_7(%arg0: i32) -> (i32, i32, i32) {
    %c0_i32 = arith.constant 0 : i32
    %c0_i32_0 = arith.constant 0 : i32
    %c0_i32_1 = arith.constant 0 : i32
    return %arg0, %c0_i32, %c0_i32_0 : i32, i32, i32
  }
}

</mosaic_0001>

<llo_original>
// kernel: tpu_custom_call.1
$region0: #{tpu_custom_call.1}
  #allocation0 [shape = 'u32[]', space=smem, size = 0x4, offset = 0x4, fixed_abs, tag = 'smem constant byte address 0x4 - core index']
  #allocation1 [shape = 'u32[144,128]{1,0:T(1,128)}', space=vmem, size = 0x12000, scoped, tag = 'internal scratch']
  %s0 = inlined_call_operand.vmem [shape: bf16[2,18,18,4], index: 0, kind: input, shape index: {}]
  %s1 = inlined_call_operand.vmem [shape: f32[2,1,64], index: 1, kind: input, shape index: {}]
  %s2 = inlined_call_operand.vmem [shape: bf16[9,4,8], index: 2, kind: input, shape index: {}]
  %s3 = inlined_call_operand.vmem [shape: f32[1,8], index: 3, kind: input, shape index: {}]
  %s4 = inlined_call_operand.vmem [shape: f32[8,128], index: 4, kind: input, shape index: {}]
  %s5 = inlined_call_operand.vmem [shape: f32[64,128], index: 5, kind: input, shape index: {}]
  %s6 = inlined_call_operand.vmem [shape: f32[1,128], index: 6, kind: input, shape index: {}]
  %s7 = inlined_call_operand.hbm [shape: f32[2,1,128], index: 7, kind: output, shape index: {}]
  %s8 = sld [smem:[#allocation0]]
  $region61: #{tpu_custom_call.1} parent=0
    _
  %s10 = ssub.s32 1, %s8
  %s11 = scalar_select 0, %s10, %s8
  $region1: #{tpu_custom_call.1} parent=0
    #allocation2 [shape = 'u8[1024]{0}', space=vmem, size = 0x400, scoped, tag = 'output window, operand 0']
    #allocation3 [shape = 's32[2]{0}', space=sflag, size = 0x8, scoped, tag = 'scoped memory for tpu_custom_call.1']
    %12 = vsyncpa [#allocation3], 0
    %s13 = scalar_lea.sflag [#allocation3], 1
    %14 = vsyncpa %s13, 0
    loop: start=0, step=1, limit=4
    $region2: #{tpu_custom_call.1} parent=1 // loop_pre_header
      _
    $region3: #{tpu_custom_call.1} parent=1 // loop_header
      %s16 = sphi 0, %s20
      %p17 = scmp.ge.s32.totalorder %s16, 4
      %s26 = sphi 0, %s28
      %s29 = sphi 0, %s26
      %s30 = sphi 0, %s29
      %s46 = sphi 0, %s30
      %s52 = sphi 0, %s54
      %s55 = sphi 0, %s52
      %s56 = sphi 0, %s55
      %s72 = sphi 0, %s56
      %s76 = sphi 0, %s76
      %s78 = sphi 0, %s76
      %s79 = sphi 0, %s78
      %s93 = sphi 0, %s79
      %s97 = sphi 0, %s97
      %s99 = sphi 0, %s97
      %s100 = sphi 0, %s99
      %s114 = sphi 0, %s100
      %s118 = sphi 0, %s118
      %s120 = sphi 0, %s118
      %s121 = sphi 0, %s120
      %s135 = sphi 0, %s121
      %s139 = sphi 0, %s139
      %s141 = sphi 0, %s139
      %s142 = sphi 0, %s141
      %s156 = sphi 0, %s142
      %s160 = sphi 0, %s160
      %s162 = sphi 0, %s160
      %s163 = sphi 0, %s162
      %s177 = sphi 0, %s163
      %s183 = sphi 0, %s185
      %s186 = sphi 0, %s183
      %s187 = sphi 0, %s186
      %s203 = sphi 0, %s187
    $region4: #{tpu_custom_call.1} parent=1 // loop_header_branch
      %19 = sbr.rel (%p17) target = $region8
    $region5: #{tpu_custom_call.1} parent=1 // loop_body
      %s21 = ssub.s32 %s16, 1
      %s22 = ssub.s32 %s16, 2
      %s23 = sadd.s32 %s16, 1
      %s24 = ssub.s32 %s16, %s23
      %p25 = scmp.eq.s32.totalorder %s24, 0
      %s27 = sadd.s32 %s26, 1
      %s28 = scalar_select %p25, %s26, %s27
      %p31 = pneg %p25
      %p32 = scmp.eq.s32.totalorder %s16, 1
      %p33 = por %p31, %p32
      %p34 = scmp.ne.s32.totalorder %s26, %s29
      %p35 = scmp.eq.s32.totalorder %s16, 0
      %p36 = por %p34, %p35
      %p37 = scmp.ne.s32.totalorder %s26, %s29
      %p38 = scmp.eq.s32.totalorder %s21, 1
      %p39 = por %p37, %p38
      %p40 = scmp.ne.s32.totalorder %s29, %s30
      %p41 = scmp.eq.s32.totalorder %s21, 0
      %p42 = por %p40, %p41
      %p43 = scmp.ne.s32.totalorder %s29, %s30
      %p44 = scmp.eq.s32.totalorder %s22, 1
      %p45 = por %p43, %p44
      %p47 = scmp.ne.s32.totalorder %s30, %s46
      %p48 = scmp.eq.s32.totalorder %s22, 0
      %p49 = por %p47, %p48
      %s50 = ssub.s32 %s16, %s23
      %p51 = scmp.eq.s32.totalorder %s50, 0
      %s53 = sadd.s32 %s52, 1
      %s54 = scalar_select %p51, %s52, %s53
      %p57 = pneg %p51
      %p58 = scmp.eq.s32.totalorder %s16, 1
      %p59 = por %p57, %p58
      %p60 = scmp.ne.s32.totalorder %s52, %s55
      %p61 = scmp.eq.s32.totalorder %s16, 0
      %p62 = por %p60, %p61
      %p63 = scmp.ne.s32.totalorder %s52, %s55
      %p64 = scmp.eq.s32.totalorder %s21, 1
      %p65 = por %p63, %p64
      %p66 = scmp.ne.s32.totalorder %s55, %s56
      %p67 = scmp.eq.s32.totalorder %s21, 0
      %p68 = por %p66, %p67
      %p69 = scmp.ne.s32.totalorder %s55, %s56
      %p70 = scmp.eq.s32.totalorder %s22, 1
      %p71 = por %p69, %p70
      %p73 = scmp.ne.s32.totalorder %s56, %s72
      %p74 = scmp.eq.s32.totalorder %s22, 0
      %p75 = por %p73, %p74
      %s77 = sadd.s32 %s76, 1
      %p80 = scmp.eq.s32.totalorder %s16, 1
      %p81 = scmp.ne.s32.totalorder %s76, %s78
      %p82 = scmp.eq.s32.totalorder %s16, 0
      %p83 = por %p81, %p82
      %p84 = scmp.ne.s32.totalorder %s76, %s78
      %p85 = scmp.eq.s32.totalorder %s21, 1
      %p86 = por %p84, %p85
      %p87 = scmp.ne.s32.totalorder %s78, %s79
      %p88 = scmp.eq.s32.totalorder %s21, 0
      %p89 = por %p87, %p88
      %p90 = scmp.ne.s32.totalorder %s78, %s79
      %p91 = scmp.eq.s32.totalorder %s22, 1
      %p92 = por %p90, %p91
      %p94 = scmp.ne.s32.totalorder %s79, %s93
      %p95 = scmp.eq.s32.totalorder %s22, 0
      %p96 = por %p94, %p95
      %s98 = sadd.s32 %s97, 1
      %p101 = scmp.eq.s32.totalorder %s16, 1
      %p102 = scmp.ne.s32.totalorder %s97, %s99
      %p103 = scmp.eq.s32.totalorder %s16, 0
      %p104 = por %p102, %p103
      %p105 = scmp.ne.s32.totalorder %s97, %s99
      %p106 = scmp.eq.s32.totalorder %s21, 1
      %p107 = por %p105, %p106
      %p108 = scmp.ne.s32.totalorder %s99, %s100
      %p109 = scmp.eq.s32.totalorder %s21, 0
      %p110 = por %p108, %p109
      %p111 = scmp.ne.s32.totalorder %s99, %s100
      %p112 = scmp.eq.s32.totalorder %s22, 1
      %p113 = por %p111, %p112
      %p115 = scmp.ne.s32.totalorder %s100, %s114
      %p116 = scmp.eq.s32.totalorder %s22, 0
      %p117 = por %p115, %p116
      %s119 = sadd.s32 %s118, 1
      %p122 = scmp.eq.s32.totalorder %s16, 1
      %p123 = scmp.ne.s32.totalorder %s118, %s120
      %p124 = scmp.eq.s32.totalorder %s16, 0
      %p125 = por %p123, %p124
      %p126 = scmp.ne.s32.totalorder %s118, %s120
      %p127 = scmp.eq.s32.totalorder %s21, 1
      %p128 = por %p126, %p127
      %p129 = scmp.ne.s32.totalorder %s120, %s121
      %p130 = scmp.eq.s32.totalorder %s21, 0
      %p131 = por %p129, %p130
      %p132 = scmp.ne.s32.totalorder %s120, %s121
      %p133 = scmp.eq.s32.totalorder %s22, 1
      %p134 = por %p132, %p133
      %p136 = scmp.ne.s32.totalorder %s121, %s135
      %p137 = scmp.eq.s32.totalorder %s22, 0
      %p138 = por %p136, %p137
      %s140 = sadd.s32 %s139, 1
      %p143 = scmp.eq.s32.totalorder %s16, 1
      %p144 = scmp.ne.s32.totalorder %s139, %s141
      %p145 = scmp.eq.s32.totalorder %s16, 0
      %p146 = por %p144, %p145
      %p147 = scmp.ne.s32.totalorder %s139, %s141
      %p148 = scmp.eq.s32.totalorder %s21, 1
      %p149 = por %p147, %p148
      %p150 = scmp.ne.s32.totalorder %s141, %s142
      %p151 = scmp.eq.s32.totalorder %s21, 0
      %p152 = por %p150, %p151
      %p153 = scmp.ne.s32.totalorder %s141, %s142
      %p154 = scmp.eq.s32.totalorder %s22, 1
      %p155 = por %p153, %p154
      %p157 = scmp.ne.s32.totalorder %s142, %s156
      %p158 = scmp.eq.s32.totalorder %s22, 0
      %p159 = por %p157, %p158
      %s161 = sadd.s32 %s160, 1
      %p164 = scmp.eq.s32.totalorder %s16, 1
      %p165 = scmp.ne.s32.totalorder %s160, %s162
      %p166 = scmp.eq.s32.totalorder %s16, 0
      %p167 = por %p165, %p166
      %p168 = scmp.ne.s32.totalorder %s160, %s162
      %p169 = scmp.eq.s32.totalorder %s21, 1
      %p170 = por %p168, %p169
      %p171 = scmp.ne.s32.totalorder %s162, %s163
      %p172 = scmp.eq.s32.totalorder %s21, 0
      %p173 = por %p171, %p172
      %p174 = scmp.ne.s32.totalorder %s162, %s163
      %p175 = scmp.eq.s32.totalorder %s22, 1
      %p176 = por %p174, %p175
      %p178 = scmp.ne.s32.totalorder %s163, %s177
      %p179 = scmp.eq.s32.totalorder %s22, 0
      %p180 = por %p178, %p179
      %s181 = ssub.s32 %s16, %s23
      %p182 = scmp.eq.s32.totalorder %s181, 0
      %s184 = sadd.s32 %s183, 1
      %s185 = scalar_select %p182, %s183, %s184
      %p188 = pneg %p182
      %p189 = scmp.eq.s32.totalorder %s16, 1
      %p190 = por %p188, %p189
      %p191 = scmp.ne.s32.totalorder %s183, %s186
      %p192 = scmp.eq.s32.totalorder %s16, 0
      %p193 = por %p191, %p192
      %p194 = scmp.ne.s32.totalorder %s183, %s186
      %p195 = scmp.eq.s32.totalorder %s21, 1
      %p196 = por %p194, %p195
      %p197 = scmp.ne.s32.totalorder %s186, %s187
      %p198 = scmp.eq.s32.totalorder %s21, 0
      %p199 = por %p197, %p198
      %p200 = scmp.ne.s32.totalorder %s186, %s187
      %p201 = scmp.eq.s32.totalorder %s22, 1
      %p202 = por %p200, %p201
      %p204 = scmp.ne.s32.totalorder %s187, %s203
      %p205 = scmp.eq.s32.totalorder %s22, 0
      %p206 = por %p204, %p205
      %p207 = scmp.le.s32.totalorder 1, %s16
      %p208 = scmp.lt.s32.totalorder %s16, 3
      %p209 = pnand %p207, %p208
      %p210 = pneg %p209
      // Predicated region
      $region9: #{tpu_custom_call.1} parent=5 // pred_check
        _
      $region10: #{tpu_custom_call.1} parent=5 // pred_check_branch
        %212 = sbr.rel (%p209) target = $region12
      $region11: #{tpu_custom_call.1} parent=5 // pred_region
        %s213 = ssub.s32 %s16, 1
        // Predicated region
        $region13: #{tpu_custom_call.1} parent=11 // pred_check
          %p214 = pneg %p89
        $region14: #{tpu_custom_call.1} parent=11 // pred_check_branch
          %216 = sbr.rel (%p214) target = $region16
        $region15: #{tpu_custom_call.1} parent=11 // pred_region
          _
        $region16: #{tpu_custom_call.1} parent=11 // pred_fallthru
          _
        // Predicated region
        $region17: #{tpu_custom_call.1} parent=11 // pred_check
          %p217 = pneg %p110
        $region18: #{tpu_custom_call.1} parent=11 // pred_check_branch
          %219 = sbr.rel (%p217) target = $region20
        $region19: #{tpu_custom_call.1} parent=11 // pred_region
          _
        $region20: #{tpu_custom_call.1} parent=11 // pred_fallthru
          _
        // Predicated region
        $region21: #{tpu_custom_call.1} parent=11 // pred_check
          %p220 = pneg %p131
        $region22: #{tpu_custom_call.1} parent=11 // pred_check_branch
          %222 = sbr.rel (%p220) target = $region24
        $region23: #{tpu_custom_call.1} parent=11 // pred_region
          _
        $region24: #{tpu_custom_call.1} parent=11 // pred_fallthru
          _
        // Predicated region
        $region25: #{tpu_custom_call.1} parent=11 // pred_check
          %p223 = pneg %p152
        $region26: #{tpu_custom_call.1} parent=11 // pred_check_branch
          %225 = sbr.rel (%p223) target = $region28
        $region27: #{tpu_custom_call.1} parent=11 // pred_region
          _
        $region28: #{tpu_custom_call.1} parent=11 // pred_fallthru
          _
        // Predicated region
        $region29: #{tpu_custom_call.1} parent=11 // pred_check
          %p226 = pneg %p173
        $region30: #{tpu_custom_call.1} parent=11 // pred_check_branch
          %228 = sbr.rel (%p226) target = $region32
        $region31: #{tpu_custom_call.1} parent=11 // pred_region
          _
        $region32: #{tpu_custom_call.1} parent=11 // pred_fallthru
          _
      $region12: #{tpu_custom_call.1} parent=5 // pred_fallthru
        _
      %p229 = scmp.lt.s32.totalorder %s16, 2
      // Predicated region
      $region33: #{tpu_custom_call.1} parent=5 // pred_check
        %p230 = pneg %p229
      $region34: #{tpu_custom_call.1} parent=5 // pred_check_branch
        %232 = sbr.rel (%p230) target = $region36
      $region35: #{tpu_custom_call.1} parent=5 // pred_region
        // Predicated region
        $region37: #{tpu_custom_call.1} parent=35 // pred_check
          %p233 = pneg %p36
        $region38: #{tpu_custom_call.1} parent=35 // pred_check_branch
          %235 = sbr.rel (%p233) target = $region40
        $region39: #{tpu_custom_call.1} parent=35 // pred_region
          %p236 = scmp.lt.s32.totalorder %s16, 1
          %s237 = scalar_select %p236, %s16, 1
          %s238 = smul.addr %s237, 54
          %s239 = smul.addr %s238, 4
          %s240 = scalar_lea.vmem %s0, %s239
        $region40: #{tpu_custom_call.1} parent=35 // pred_fallthru
          _
        // Predicated region
        $region41: #{tpu_custom_call.1} parent=35 // pred_check
          %p241 = pneg %p62
        $region42: #{tpu_custom_call.1} parent=35 // pred_check_branch
          %243 = sbr.rel (%p241) target = $region44
        $region43: #{tpu_custom_call.1} parent=35 // pred_region
          %p244 = scmp.lt.s32.totalorder %s16, 1
          %s245 = scalar_select %p244, %s16, 1
          %s246 = scalar_lea.vmem %s1, %s245
        $region44: #{tpu_custom_call.1} parent=35 // pred_fallthru
          _
      $region36: #{tpu_custom_call.1} parent=5 // pred_fallthru
        _
      %p247 = scmp.le.s32.totalorder 1, %s16
      %p248 = scmp.lt.s32.totalorder %s16, 3
      %p249 = pnand %p247, %p248
      %p250 = pneg %p249
      // Predicated region
      $region45: #{tpu_custom_call.1} parent=5 // pred_check
        _
      $region46: #{tpu_custom_call.1} parent=5 // pred_check_branch
        %252 = sbr.rel (%p249) target = $region48
      $region47: #{tpu_custom_call.1} parent=5 // pred_region
        %s253 = ssub.s32 %s16, 1
        %p254 = scmp.lt.s32.totalorder %s21, 1
        %s255 = scalar_select %p254, %s21, 1
        %s256 = smul.addr %s255, 54
        %s257 = smul.addr %s256, 4
        %s258 = scalar_lea.vmem %s0, %s257
        %p259 = pneg %p42
        %p260 = pneg %p39
        %p261 = scmp.lt.s32.totalorder %s21, 1
        %s262 = scalar_select %p261, %s21, 1
        %s263 = scalar_lea.vmem %s1, %s262
        %p264 = pneg %p68
        %p265 = pneg %p65
        %p266 = pneg %p89
        %p267 = pneg %p86
        %p268 = pneg %p110
        %p269 = pneg %p107
        %p270 = pneg %p131
        %p271 = pneg %p128
        %p272 = pneg %p152
        %p273 = pneg %p149
        %p274 = pneg %p173
        %p275 = pneg %p170
        %p276 = pneg %p199
        %p277 = pneg %p196
        %s278 = sand.u32 %s186, 1
        %s279 = scalar_lea.sflag [#allocation3], %s278
        %s280 = sand.u32 %s186, 1
        %s281 = scalar_lea.vmem [#allocation2], %s280
        %p282 = scmp.lt.s32.totalorder %s21, 1
        %s283 = scalar_select %p282, %s21, 1
        %s284 = smul.addr %s283, 54
        %s285 = smul.addr %s284, 4
        %s286 = scalar_lea.vmem %s0, %s285
        %p287 = scmp.lt.s32.totalorder %s21, 1
        %s288 = scalar_select %p287, %s21, 1
        %s289 = scalar_lea.vmem %s1, %s288
        %v291 = vld [vmem:[%s286] sm:$0xf]
        %v292 = vld [vmem:[%s286 + $0x4] sm:$0xf]
        %v293 = vld [vmem:[%s286 + $0x8] sm:$0x1]
        %v294 = vld [vmem:[%s286 + $0xc] sm:$0xf]
        %v295 = vld [vmem:[%s286 + $0x10] sm:$0xf]
        %v296 = vld [vmem:[%s286 + $0x14] sm:$0x1]
        %v297 = vld [vmem:[%s286 + $0x18] sm:$0xf]
        %v298 = vld [vmem:[%s286 + $0x1c] sm:$0xf]
        %v299 = vld [vmem:[%s286 + $0x20] sm:$0x1]
        %v300 = vld [vmem:[%s286 + $0x24] sm:$0xf]
        %v301 = vld [vmem:[%s286 + $0x28] sm:$0xf]
        %v302 = vld [vmem:[%s286 + $0x2c] sm:$0x1]
        %v303 = vld [vmem:[%s286 + $0x30] sm:$0xf]
        %v304 = vld [vmem:[%s286 + $0x34] sm:$0xf]
        %v305 = vld [vmem:[%s286 + $0x38] sm:$0x1]
        %v306 = vld [vmem:[%s286 + $0x3c] sm:$0xf]
        %v307 = vld [vmem:[%s286 + $0x40] sm:$0xf]
        %v308 = vld [vmem:[%s286 + $0x44] sm:$0x1]
        %v309 = vld [vmem:[%s286 + $0x48] sm:$0xf]
        %v310 = vld [vmem:[%s286 + $0x4c] sm:$0xf]
        %v311 = vld [vmem:[%s286 + $0x50] sm:$0x1]
        %v312 = vld [vmem:[%s286 + $0x54] sm:$0xf]
        %v313 = vld [vmem:[%s286 + $0x58] sm:$0xf]
        %v314 = vld [vmem:[%s286 + $0x5c] sm:$0x1]
        %v315 = vld [vmem:[%s286 + $0x60] sm:$0xf]
        %v316 = vld [vmem:[%s286 + $0x64] sm:$0xf]
        %v317 = vld [vmem:[%s286 + $0x68] sm:$0x1]
        %v318 = vld [vmem:[%s286 + $0x6c] sm:$0xf]
        %v319 = vld [vmem:[%s286 + $0x70] sm:$0xf]
        %v320 = vld [vmem:[%s286 + $0x74] sm:$0x1]
        %v321 = vld [vmem:[%s286 + $0x78] sm:$0xf]
        %v322 = vld [vmem:[%s286 + $0x7c] sm:$0xf]
        %v323 = vld [vmem:[%s286 + $0x80] sm:$0x1]
        %v324 = vld [vmem:[%s286 + $0x84] sm:$0xf]
        %v325 = vld [vmem:[%s286 + $0x88] sm:$0xf]
        %v326 = vld [vmem:[%s286 + $0x8c] sm:$0x1]
        %v327 = vld [vmem:[%s286 + $0x90] sm:$0xf]
        %v328 = vld [vmem:[%s286 + $0x94] sm:$0xf]
        %v329 = vld [vmem:[%s286 + $0x98] sm:$0x1]
        %v330 = vld [vmem:[%s286 + $0x9c] sm:$0xf]
        %v331 = vld [vmem:[%s286 + $0xa0] sm:$0xf]
        %v332 = vld [vmem:[%s286 + $0xa4] sm:$0x1]
        %v333 = vld [vmem:[%s286 + $0xa8] sm:$0xf]
        %v334 = vld [vmem:[%s286 + $0xac] sm:$0xf]
        %v335 = vld [vmem:[%s286 + $0xb0] sm:$0x1]
        %v336 = vld [vmem:[%s286 + $0xb4] sm:$0xf]
        %v337 = vld [vmem:[%s286 + $0xb8] sm:$0xf]
        %v338 = vld [vmem:[%s286 + $0xbc] sm:$0x1]
        %v339 = vld [vmem:[%s286 + $0xc0] sm:$0xf]
        %v340 = vld [vmem:[%s286 + $0xc4] sm:$0xf]
        %v341 = vld [vmem:[%s286 + $0xc8] sm:$0x1]
        %v342 = vld [vmem:[%s286 + $0xcc] sm:$0xf]
        %v343 = vld [vmem:[%s286 + $0xd0] sm:$0xf]
        %v344 = vld [vmem:[%s286 + $0xd4] sm:$0x1]
        %v345 = vld [vmem:[%s2] sm:$0x3]
        %vm346 = vsmask.f32 3328
        %vm347 = vsmask.f32 7440
        %vm348 = vmor %vm346, %vm347
        %v350 = vshrl.u32 %v291, 16
        %v352 = vrot.slane %v350, 4
        %v353 = vshll.u32 %v291, 16
        %v355 = vrot.slane %v353, 5
        %v356 = vor.u32 %v352, %v355
        %v357 = vrot.slane %v356, 4
        %v359 = vshll.u32 %v292, 16
        %v361 = vrot.slane %v359, 5
        %v362 = vsel %vm348, %v357, %v361
        %v363 = vshrl.u32 %v292, 16
        %v365 = vrot.slane %v363, 4
        %v366 = vor.u32 %v365, %v361
        %v367 = vrot.slane %v366, 4
        %v369 = vshll.u32 %v293, 16
        %v371 = vrot.slane %v369, 5
        %v372 = vsel %vm348, %v367, %v371
        %v374 = vshrl.u32 %v294, 16
        %v376 = vrot.slane %v374, 4
        %v377 = vshll.u32 %v294, 16
        %v379 = vrot.slane %v377, 5
        %v380 = vor.u32 %v376, %v379
        %v381 = vrot.slane %v380, 4
        %v383 = vshll.u32 %v295, 16
        %v385 = vrot.slane %v383, 5
        %v386 = vsel %vm348, %v381, %v385
        %v387 = vshrl.u32 %v295, 16
        %v389 = vrot.slane %v387, 4
        %v390 = vor.u32 %v389, %v385
        %v391 = vrot.slane %v390, 4
        %v393 = vshll.u32 %v296, 16
        %v395 = vrot.slane %v393, 5
        %v396 = vsel %vm348, %v391, %v395
        %v398 = vshrl.u32 %v297, 16
        %v400 = vrot.slane %v398, 4
        %v401 = vshll.u32 %v297, 16
        %v403 = vrot.slane %v401, 5
        %v404 = vor.u32 %v400, %v403
        %v405 = vrot.slane %v404, 4
        %v407 = vshll.u32 %v298, 16
        %v409 = vrot.slane %v407, 5
        %v410 = vsel %vm348, %v405, %v409
        %v411 = vshrl.u32 %v298, 16
        %v413 = vrot.slane %v411, 4
        %v414 = vor.u32 %v413, %v409
        %v415 = vrot.slane %v414, 4
        %v417 = vshll.u32 %v299, 16
        %v419 = vrot.slane %v417, 5
        %v420 = vsel %vm348, %v415, %v419
        %v422 = vshrl.u32 %v300, 16
        %v424 = vrot.slane %v422, 4
        %v425 = vshll.u32 %v300, 16
        %v427 = vrot.slane %v425, 5
        %v428 = vor.u32 %v424, %v427
        %v429 = vrot.slane %v428, 4
        %v431 = vshll.u32 %v301, 16
        %v433 = vrot.slane %v431, 5
        %v434 = vsel %vm348, %v429, %v433
        %v435 = vshrl.u32 %v301, 16
        %v437 = vrot.slane %v435, 4
        %v438 = vor.u32 %v437, %v433
        %v439 = vrot.slane %v438, 4
        %v441 = vshll.u32 %v302, 16
        %v443 = vrot.slane %v441, 5
        %v444 = vsel %vm348, %v439, %v443
        %v446 = vshrl.u32 %v303, 16
        %v448 = vrot.slane %v446, 4
        %v449 = vshll.u32 %v303, 16
        %v451 = vrot.slane %v449, 5
        %v452 = vor.u32 %v448, %v451
        %v453 = vrot.slane %v452, 4
        %v455 = vshll.u32 %v304, 16
        %v457 = vrot.slane %v455, 5
        %v458 = vsel %vm348, %v453, %v457
        %v459 = vshrl.u32 %v304, 16
        %v461 = vrot.slane %v459, 4
        %v462 = vor.u32 %v461, %v457
        %v463 = vrot.slane %v462, 4
        %v465 = vshll.u32 %v305, 16
        %v467 = vrot.slane %v465, 5
        %v468 = vsel %vm348, %v463, %v467
        %v470 = vshrl.u32 %v306, 16
        %v472 = vrot.slane %v470, 4
        %v473 = vshll.u32 %v306, 16
        %v475 = vrot.slane %v473, 5
        %v476 = vor.u32 %v472, %v475
        %v477 = vrot.slane %v476, 4
        %v479 = vshll.u32 %v307, 16
        %v481 = vrot.slane %v479, 5
        %v482 = vsel %vm348, %v477, %v481
        %v483 = vshrl.u32 %v307, 16
        %v485 = vrot.slane %v483, 4
        %v486 = vor.u32 %v485, %v481
        %v487 = vrot.slane %v486, 4
        %v489 = vshll.u32 %v308, 16
        %v491 = vrot.slane %v489, 5
        %v492 = vsel %vm348, %v487, %v491
        %v494 = vshrl.u32 %v309, 16
        %v496 = vrot.slane %v494, 4
        %v497 = vshll.u32 %v309, 16
        %v499 = vrot.slane %v497, 5
        %v500 = vor.u32 %v496, %v499
        %v501 = vrot.slane %v500, 4
        %v503 = vshll.u32 %v310, 16
        %v505 = vrot.slane %v503, 5
        %v506 = vsel %vm348, %v501, %v505
        %v507 = vshrl.u32 %v310, 16
        %v509 = vrot.slane %v507, 4
        %v510 = vor.u32 %v509, %v505
        %v511 = vrot.slane %v510, 4
        %v513 = vshll.u32 %v311, 16
        %v515 = vrot.slane %v513, 5
        %v516 = vsel %vm348, %v511, %v515
        %v518 = vshrl.u32 %v312, 16
        %v520 = vrot.slane %v518, 4
        %v521 = vshll.u32 %v312, 16
        %v523 = vrot.slane %v521, 5
        %v524 = vor.u32 %v520, %v523
        %v525 = vrot.slane %v524, 4
        %v527 = vshll.u32 %v313, 16
        %v529 = vrot.slane %v527, 5
        %v530 = vsel %vm348, %v525, %v529
        %v531 = vshrl.u32 %v313, 16
        %v533 = vrot.slane %v531, 4
        %v534 = vor.u32 %v533, %v529
        %v535 = vrot.slane %v534, 4
        %v537 = vshll.u32 %v314, 16
        %v539 = vrot.slane %v537, 5
        %v540 = vsel %vm348, %v535, %v539
        %v542 = vshrl.u32 %v315, 16
        %v544 = vrot.slane %v542, 4
        %v545 = vshll.u32 %v315, 16
        %v547 = vrot.slane %v545, 5
        %v548 = vor.u32 %v544, %v547
        %v549 = vrot.slane %v548, 4
        %v551 = vshll.u32 %v316, 16
        %v553 = vrot.slane %v551, 5
        %v554 = vsel %vm348, %v549, %v553
        %v555 = vshrl.u32 %v316, 16
        %v557 = vrot.slane %v555, 4
        %v558 = vor.u32 %v557, %v553
        %v559 = vrot.slane %v558, 4
        %v561 = vshll.u32 %v317, 16
        %v563 = vrot.slane %v561, 5
        %v564 = vsel %vm348, %v559, %v563
        %v566 = vshrl.u32 %v318, 16
        %v568 = vrot.slane %v566, 4
        %v569 = vshll.u32 %v318, 16
        %v571 = vrot.slane %v569, 5
        %v572 = vor.u32 %v568, %v571
        %v573 = vrot.slane %v572, 4
        %v575 = vshll.u32 %v319, 16
        %v577 = vrot.slane %v575, 5
        %v578 = vsel %vm348, %v573, %v577
        %v579 = vshrl.u32 %v319, 16
        %v581 = vrot.slane %v579, 4
        %v582 = vor.u32 %v581, %v577
        %v583 = vrot.slane %v582, 4
        %v585 = vshll.u32 %v320, 16
        %v587 = vrot.slane %v585, 5
        %v588 = vsel %vm348, %v583, %v587
        %v590 = vshrl.u32 %v321, 16
        %v592 = vrot.slane %v590, 4
        %v593 = vshll.u32 %v321, 16
        %v595 = vrot.slane %v593, 5
        %v596 = vor.u32 %v592, %v595
        %v597 = vrot.slane %v596, 4
        %v599 = vshll.u32 %v322, 16
        %v601 = vrot.slane %v599, 5
        %v602 = vsel %vm348, %v597, %v601
        %v603 = vshrl.u32 %v322, 16
        %v605 = vrot.slane %v603, 4
        %v606 = vor.u32 %v605, %v601
        %v607 = vrot.slane %v606, 4
        %v609 = vshll.u32 %v323, 16
        %v611 = vrot.slane %v609, 5
        %v612 = vsel %vm348, %v607, %v611
        %v614 = vshrl.u32 %v324, 16
        %v616 = vrot.slane %v614, 4
        %v617 = vshll.u32 %v324, 16
        %v619 = vrot.slane %v617, 5
        %v620 = vor.u32 %v616, %v619
        %v621 = vrot.slane %v620, 4
        %v623 = vshll.u32 %v325, 16
        %v625 = vrot.slane %v623, 5
        %v626 = vsel %vm348, %v621, %v625
        %v627 = vshrl.u32 %v325, 16
        %v629 = vrot.slane %v627, 4
        %v630 = vor.u32 %v629, %v625
        %v631 = vrot.slane %v630, 4
        %v633 = vshll.u32 %v326, 16
        %v635 = vrot.slane %v633, 5
        %v636 = vsel %vm348, %v631, %v635
        %v638 = vshrl.u32 %v327, 16
        %v640 = vrot.slane %v638, 4
        %v641 = vshll.u32 %v327, 16
        %v643 = vrot.slane %v641, 5
        %v644 = vor.u32 %v640, %v643
        %v645 = vrot.slane %v644, 4
        %v647 = vshll.u32 %v328, 16
        %v649 = vrot.slane %v647, 5
        %v650 = vsel %vm348, %v645, %v649
        %v651 = vshrl.u32 %v328, 16
        %v653 = vrot.slane %v651, 4
        %v654 = vor.u32 %v653, %v649
        %v655 = vrot.slane %v654, 4
        %v657 = vshll.u32 %v329, 16
        %v659 = vrot.slane %v657, 5
        %v660 = vsel %vm348, %v655, %v659
        %v662 = vshrl.u32 %v330, 16
        %v664 = vrot.slane %v662, 4
        %v665 = vshll.u32 %v330, 16
        %v667 = vrot.slane %v665, 5
        %v668 = vor.u32 %v664, %v667
        %v669 = vrot.slane %v668, 4
        %v671 = vshll.u32 %v331, 16
        %v673 = vrot.slane %v671, 5
        %v674 = vsel %vm348, %v669, %v673
        %v675 = vshrl.u32 %v331, 16
        %v677 = vrot.slane %v675, 4
        %v678 = vor.u32 %v677, %v673
        %v679 = vrot.slane %v678, 4
        %v681 = vshll.u32 %v332, 16
        %v683 = vrot.slane %v681, 5
        %v684 = vsel %vm348, %v679, %v683
        %v686 = vshrl.u32 %v333, 16
        %v688 = vrot.slane %v686, 4
        %v689 = vshll.u32 %v333, 16
        %v691 = vrot.slane %v689, 5
        %v692 = vor.u32 %v688, %v691
        %v693 = vrot.slane %v692, 4
        %v695 = vshll.u32 %v334, 16
        %v697 = vrot.slane %v695, 5
        %v698 = vsel %vm348, %v693, %v697
        %v699 = vshrl.u32 %v334, 16
        %v701 = vrot.slane %v699, 4
        %v702 = vor.u32 %v701, %v697
        %v703 = vrot.slane %v702, 4
        %v705 = vshll.u32 %v335, 16
        %v707 = vrot.slane %v705, 5
        %v708 = vsel %vm348, %v703, %v707
        %v710 = vshrl.u32 %v336, 16
        %v712 = vrot.slane %v710, 4
        %v713 = vshll.u32 %v336, 16
        %v715 = vrot.slane %v713, 5
        %v716 = vor.u32 %v712, %v715
        %v717 = vrot.slane %v716, 4
        %v719 = vshll.u32 %v337, 16
        %v721 = vrot.slane %v719, 5
        %v722 = vsel %vm348, %v717, %v721
        %v723 = vshrl.u32 %v337, 16
        %v725 = vrot.slane %v723, 4
        %v726 = vor.u32 %v725, %v721
        %v727 = vrot.slane %v726, 4
        %v729 = vshll.u32 %v338, 16
        %v731 = vrot.slane %v729, 5
        %v732 = vsel %vm348, %v727, %v731
        %s733 = scalar_lea.vmem %s2, 2
        %v734 = vld [vmem:[%s733] sm:$0x3]
        %v735 = vunpack.c.l.b16 %v362
        %v736 = vunpack.c.l.b16 %v372
        %v737 = vunpack.c.l.b16 %v386
        %v738 = vunpack.c.l.b16 %v396
        %v739 = vunpack.c.l.b16 %v410
        %v740 = vunpack.c.l.b16 %v420
        %v741 = vunpack.c.l.b16 %v434
        %v742 = vunpack.c.l.b16 %v444
        %v743 = vunpack.c.l.b16 %v458
        %v744 = vunpack.c.l.b16 %v468
        %v745 = vunpack.c.l.b16 %v482
        %v746 = vunpack.c.l.b16 %v492
        %v747 = vunpack.c.l.b16 %v506
        %v748 = vunpack.c.l.b16 %v516
        %v749 = vunpack.c.l.b16 %v530
        %v750 = vunpack.c.l.b16 %v540
        %v751 = vunpack.c.l.b16 %v554
        %v752 = vunpack.c.l.b16 %v564
        %v753 = vunpack.c.l.b16 %v578
        %v754 = vunpack.c.l.b16 %v588
        %v755 = vunpack.c.l.b16 %v602
        %v756 = vunpack.c.l.b16 %v612
        %v757 = vunpack.c.l.b16 %v626
        %v758 = vunpack.c.l.b16 %v636
        %v759 = vunpack.c.l.b16 %v650
        %v760 = vunpack.c.l.b16 %v660
        %v761 = vunpack.c.l.b16 %v674
        %v762 = vunpack.c.l.b16 %v684
        %v763 = vunpack.c.l.b16 %v698
        %v764 = vunpack.c.l.b16 %v708
        %v765 = vunpack.c.l.b16 %v722
        %v766 = vunpack.c.l.b16 %v732
        %v767 = vpack.c.b16 %v736, %v735
        %v768 = vpack.c.b16 %v738, %v737
        %v769 = vpack.c.b16 %v740, %v739
        %v770 = vpack.c.b16 %v742, %v741
        %v771 = vpack.c.b16 %v744, %v743
        %v772 = vpack.c.b16 %v746, %v745
        %v773 = vpack.c.b16 %v748, %v747
        %v774 = vpack.c.b16 %v750, %v749
        %v775 = vpack.c.b16 %v752, %v751
        %v776 = vpack.c.b16 %v754, %v753
        %v777 = vpack.c.b16 %v756, %v755
        %v778 = vpack.c.b16 %v758, %v757
        %v779 = vpack.c.b16 %v760, %v759
        %v780 = vpack.c.b16 %v762, %v761
        %v781 = vpack.c.b16 %v764, %v763
        %v782 = vpack.c.b16 %v766, %v765
        %vm783 = vcmask 31744
        %v785 = vsel %vm783, %v767, 0
        %v788 = vsel %vm783, %v768, 0
        %v791 = vsel %vm783, %v769, 0
        %v794 = vsel %vm783, %v770, 0
        %v797 = vsel %vm783, %v771, 0
        %v800 = vsel %vm783, %v772, 0
        %v803 = vsel %vm783, %v773, 0
        %v806 = vsel %vm783, %v774, 0
        %v809 = vsel %vm783, %v775, 0
        %v812 = vsel %vm783, %v776, 0
        %v815 = vsel %vm783, %v777, 0
        %v818 = vsel %vm783, %v778, 0
        %v821 = vsel %vm783, %v779, 0
        %v824 = vsel %vm783, %v780, 0
        %v827 = vsel %vm783, %v781, 0
        %v830 = vsel %vm783, %v782, 0
        %vm832 = vcmask 1041408
        %v834 = vsel %vm832, %v734, 0
        %836 = vmatprep.subr.bf16.mxu0 0
        %837 = vmatpush1.bf16.msra.mxu0 0
        %838 = vmatprep.subr.bf16.mxu0 0
        %839 = vmatpush1.bf16.msra.mxu0 0
        %840 = vmatprep.subr.bf16.mxu0 0
        %841 = vmatpush1.bf16.msra.mxu0 0
        %842 = vmatprep.subr.bf16.mxu0 0
        %843 = vmatpush1.bf16.msra.mxu0 0
        %844 = vmatprep.subr.bf16.mxu0 0
        %845 = vmatpush1.bf16.msra.mxu0 0
        %846 = vmatprep.subr.bf16.mxu0 0
        %847 = vmatpush1.bf16.msra.mxu0 0
        %848 = vmatprep.subr.bf16.mxu0 0
        %849 = vmatpush1.bf16.msra.mxu0 0
        %850 = vmatprep.subr.bf16.mxu0 0
        %851 = vmatpush1.bf16.msra.mxu0 %v834
        %852 = vmatprep.subr.bf16.mxu0 0
        %853 = vmatpush2.bf16.msra.mxu0 0
        %854 = vmatprep.subr.bf16.mxu0 0
        %855 = vmatpush2.bf16.msra.mxu0 0
        %856 = vmatprep.subr.bf16.mxu0 0
        %857 = vmatpush2.bf16.msra.mxu0 0
        %858 = vmatprep.subr.bf16.mxu0 0
        %859 = vmatpush2.bf16.msra.mxu0 0
        %860 = vmatprep.subr.bf16.mxu0 0
        %861 = vmatpush2.bf16.msra.mxu0 0
        %862 = vmatprep.subr.bf16.mxu0 0
        %863 = vmatpush2.bf16.msra.mxu0 0
        %864 = vmatprep.subr.bf16.mxu0 0
        %865 = vmatpush2.bf16.msra.mxu0 0
        %866 = vmatprep.subr.bf16.mxu0 0
        %867 = vmatpush2.bf16.msra.mxu0 0
        %868 = vmatprep.mubr.bf16.mxu0 0
        %869 = vmatmul.mubr.bf16.gmra.mxu0 %v785
        %v870 = vpop.f32.mrf.mxu0
        %v871 = vadd.f32 0.0, %v870
        %v872 = vpop.f32.mrf.mxu0
        %v873 = vpop.f32.mrf.mxu0
        %v874 = vadd.f32 0.0, %v873
        %v875 = vpop.f32.mrf.mxu0
        %876 = vmatprep.mubr.bf16.mxu0 0
        %877 = vmatmul.mubr.bf16.gmra.mxu0 %v788
        %v878 = vpop.f32.mrf.mxu0
        %v879 = vadd.f32 0.0, %v878
        %v880 = vpop.f32.mrf.mxu0
        %v881 = vpop.f32.mrf.mxu0
        %v882 = vadd.f32 0.0, %v881
        %v883 = vpop.f32.mrf.mxu0
        %884 = vmatprep.mubr.bf16.mxu0 0
        %885 = vmatmul.mubr.bf16.gmra.mxu0 %v791
        %v886 = vpop.f32.mrf.mxu0
        %v887 = vadd.f32 0.0, %v886
        %v888 = vpop.f32.mrf.mxu0
        %v889 = vpop.f32.mrf.mxu0
        %v890 = vadd.f32 0.0, %v889
        %v891 = vpop.f32.mrf.mxu0
        %892 = vmatprep.mubr.bf16.mxu0 0
        %893 = vmatmul.mubr.bf16.gmra.mxu0 %v794
        %v894 = vpop.f32.mrf.mxu0
        %v895 = vadd.f32 0.0, %v894
        %v896 = vpop.f32.mrf.mxu0
        %v897 = vpop.f32.mrf.mxu0
        %v898 = vadd.f32 0.0, %v897
        %v899 = vpop.f32.mrf.mxu0
        %900 = vmatprep.mubr.bf16.mxu0 0
        %901 = vmatmul.mubr.bf16.gmra.mxu0 %v797
        %v902 = vpop.f32.mrf.mxu0
        %v903 = vadd.f32 0.0, %v902
        %v904 = vpop.f32.mrf.mxu0
        %v905 = vpop.f32.mrf.mxu0
        %v906 = vadd.f32 0.0, %v905
        %v907 = vpop.f32.mrf.mxu0
        %908 = vmatprep.mubr.bf16.mxu0 0
        %909 = vmatmul.mubr.bf16.gmra.mxu0 %v800
        %v910 = vpop.f32.mrf.mxu0
        %v911 = vadd.f32 0.0, %v910
        %v912 = vpop.f32.mrf.mxu0
        %v913 = vpop.f32.mrf.mxu0
        %v914 = vadd.f32 0.0, %v913
        %v915 = vpop.f32.mrf.mxu0
        %916 = vmatprep.mubr.bf16.mxu0 0
        %917 = vmatmul.mubr.bf16.gmra.mxu0 %v803
        %v918 = vpop.f32.mrf.mxu0
        %v919 = vadd.f32 0.0, %v918
        %v920 = vpop.f32.mrf.mxu0
        %v921 = vpop.f32.mrf.mxu0
        %v922 = vadd.f32 0.0, %v921
        %v923 = vpop.f32.mrf.mxu0
        %924 = vmatprep.mubr.bf16.mxu0 0
        %925 = vmatmul.mubr.bf16.gmra.mxu0 %v806
        %v926 = vpop.f32.mrf.mxu0
        %v927 = vadd.f32 0.0, %v926
        %v928 = vpop.f32.mrf.mxu0
        %v929 = vpop.f32.mrf.mxu0
        %v930 = vadd.f32 0.0, %v929
        %v931 = vpop.f32.mrf.mxu0
        %932 = vmatprep.mubr.bf16.mxu0 0
        %933 = vmatmul.mubr.bf16.gmra.mxu0 %v809
        %v934 = vpop.f32.mrf.mxu0
        %v935 = vadd.f32 0.0, %v934
        %v936 = vpop.f32.mrf.mxu0
        %v937 = vpop.f32.mrf.mxu0
        %v938 = vadd.f32 0.0, %v937
        %v939 = vpop.f32.mrf.mxu0
        %940 = vmatprep.mubr.bf16.mxu0 0
        %941 = vmatmul.mubr.bf16.gmra.mxu0 %v812
        %v942 = vpop.f32.mrf.mxu0
        %v943 = vadd.f32 0.0, %v942
        %v944 = vpop.f32.mrf.mxu0
        %v945 = vpop.f32.mrf.mxu0
        %v946 = vadd.f32 0.0, %v945
        %v947 = vpop.f32.mrf.mxu0
        %948 = vmatprep.mubr.bf16.mxu0 0
        %949 = vmatmul.mubr.bf16.gmra.mxu0 %v815
        %v950 = vpop.f32.mrf.mxu0
        %v951 = vadd.f32 0.0, %v950
        %v952 = vpop.f32.mrf.mxu0
        %v953 = vpop.f32.mrf.mxu0
        %v954 = vadd.f32 0.0, %v953
        %v955 = vpop.f32.mrf.mxu0
        %956 = vmatprep.mubr.bf16.mxu0 0
        %957 = vmatmul.mubr.bf16.gmra.mxu0 %v818
        %v958 = vpop.f32.mrf.mxu0
        %v959 = vadd.f32 0.0, %v958
        %v960 = vpop.f32.mrf.mxu0
        %v961 = vpop.f32.mrf.mxu0
        %v962 = vadd.f32 0.0, %v961
        %v963 = vpop.f32.mrf.mxu0
        %964 = vmatprep.mubr.bf16.mxu0 0
        %965 = vmatmul.mubr.bf16.gmra.mxu0 %v821
        %v966 = vpop.f32.mrf.mxu0
        %v967 = vadd.f32 0.0, %v966
        %v968 = vpop.f32.mrf.mxu0
        %v969 = vpop.f32.mrf.mxu0
        %v970 = vadd.f32 0.0, %v969
        %v971 = vpop.f32.mrf.mxu0
        %972 = vmatprep.mubr.bf16.mxu0 0
        %973 = vmatmul.mubr.bf16.gmra.mxu0 %v824
        %v974 = vpop.f32.mrf.mxu0
        %v975 = vadd.f32 0.0, %v974
        %v976 = vpop.f32.mrf.mxu0
        %v977 = vpop.f32.mrf.mxu0
        %v978 = vadd.f32 0.0, %v977
        %v979 = vpop.f32.mrf.mxu0
        %980 = vmatprep.mubr.bf16.mxu0 0
        %981 = vmatmul.mubr.bf16.gmra.mxu0 %v827
        %v982 = vpop.f32.mrf.mxu0
        %v983 = vadd.f32 0.0, %v982
        %v984 = vpop.f32.mrf.mxu0
        %v985 = vpop.f32.mrf.mxu0
        %v986 = vadd.f32 0.0, %v985
        %v987 = vpop.f32.mrf.mxu0
        %988 = vmatprep.mubr.bf16.mxu0 0
        %989 = vmatmul.mubr.bf16.gmra.mxu0 %v830
        %v990 = vpop.f32.mrf.mxu0
        %v991 = vadd.f32 0.0, %v990
        %v992 = vpop.f32.mrf.mxu0
        %v993 = vpop.f32.mrf.mxu0
        %v994 = vadd.f32 0.0, %v993
        %v995 = vpop.f32.mrf.mxu0
        %996 = vdwg.mxu0
        %v1029 = vunpack.c.l.b16 %v291
        %v1030 = vunpack.c.l.b16 %v292
        %v1031 = vunpack.c.l.b16 %v294
        %v1032 = vunpack.c.l.b16 %v295
        %v1033 = vunpack.c.l.b16 %v297
        %v1034 = vunpack.c.l.b16 %v298
        %v1035 = vunpack.c.l.b16 %v300
        %v1036 = vunpack.c.l.b16 %v301
        %v1037 = vunpack.c.l.b16 %v303
        %v1038 = vunpack.c.l.b16 %v304
        %v1039 = vunpack.c.l.b16 %v306
        %v1040 = vunpack.c.l.b16 %v307
        %v1041 = vunpack.c.l.b16 %v309
        %v1042 = vunpack.c.l.b16 %v310
        %v1043 = vunpack.c.l.b16 %v312
        %v1044 = vunpack.c.l.b16 %v313
        %v1045 = vunpack.c.l.b16 %v315
        %v1046 = vunpack.c.l.b16 %v316
        %v1047 = vunpack.c.l.b16 %v318
        %v1048 = vunpack.c.l.b16 %v319
        %v1049 = vunpack.c.l.b16 %v321
        %v1050 = vunpack.c.l.b16 %v322
        %v1051 = vunpack.c.l.b16 %v324
        %v1052 = vunpack.c.l.b16 %v325
        %v1053 = vunpack.c.l.b16 %v327
        %v1054 = vunpack.c.l.b16 %v328
        %v1055 = vunpack.c.l.b16 %v330
        %v1056 = vunpack.c.l.b16 %v331
        %v1057 = vunpack.c.l.b16 %v333
        %v1058 = vunpack.c.l.b16 %v334
        %v1059 = vunpack.c.l.b16 %v336
        %v1060 = vunpack.c.l.b16 %v337
        %v1061 = vpack.c.b16 %v1030, %v1029
        %v1062 = vpack.c.b16 %v1032, %v1031
        %v1063 = vpack.c.b16 %v1034, %v1033
        %v1064 = vpack.c.b16 %v1036, %v1035
        %v1065 = vpack.c.b16 %v1038, %v1037
        %v1066 = vpack.c.b16 %v1040, %v1039
        %v1067 = vpack.c.b16 %v1042, %v1041
        %v1068 = vpack.c.b16 %v1044, %v1043
        %v1069 = vpack.c.b16 %v1046, %v1045
        %v1070 = vpack.c.b16 %v1048, %v1047
        %v1071 = vpack.c.b16 %v1050, %v1049
        %v1072 = vpack.c.b16 %v1052, %v1051
        %v1073 = vpack.c.b16 %v1054, %v1053
        %v1074 = vpack.c.b16 %v1056, %v1055
        %v1075 = vpack.c.b16 %v1058, %v1057
        %v1076 = vpack.c.b16 %v1060, %v1059
        %v1078 = vsel %vm783, %v1061, 0
        %v1081 = vsel %vm783, %v1062, 0
        %v1084 = vsel %vm783, %v1063, 0
        %v1087 = vsel %vm783, %v1064, 0
        %v1090 = vsel %vm783, %v1065, 0
        %v1093 = vsel %vm783, %v1066, 0
        %v1096 = vsel %vm783, %v1067, 0
        %v1099 = vsel %vm783, %v1068, 0
        %v1102 = vsel %vm783, %v1069, 0
        %v1105 = vsel %vm783, %v1070, 0
        %v1108 = vsel %vm783, %v1071, 0
        %v1111 = vsel %vm783, %v1072, 0
        %v1114 = vsel %vm783, %v1073, 0
        %v1117 = vsel %vm783, %v1074, 0
        %v1120 = vsel %vm783, %v1075, 0
        %v1123 = vsel %vm783, %v1076, 0
        %v1126 = vsel %vm832, %v345, 0
        %1128 = vmatprep.subr.bf16.mxu0 0
        %1129 = vmatpush1.bf16.msra.mxu0 0
        %1130 = vmatprep.subr.bf16.mxu0 0
        %1131 = vmatpush1.bf16.msra.mxu0 0
        %1132 = vmatprep.subr.bf16.mxu0 0
        %1133 = vmatpush1.bf16.msra.mxu0 0
        %1134 = vmatprep.subr.bf16.mxu0 0
        %1135 = vmatpush1.bf16.msra.mxu0 0
        %1136 = vmatprep.subr.bf16.mxu0 0
        %1137 = vmatpush1.bf16.msra.mxu0 0
        %1138 = vmatprep.subr.bf16.mxu0 0
        %1139 = vmatpush1.bf16.msra.mxu0 0
        %1140 = vmatprep.subr.bf16.mxu0 0
        %1141 = vmatpush1.bf16.msra.mxu0 0
        %1142 = vmatprep.subr.bf16.mxu0 0
        %1143 = vmatpush1.bf16.msra.mxu0 %v1126
        %1144 = vmatprep.subr.bf16.mxu0 0
        %1145 = vmatpush2.bf16.msra.mxu0 0
        %1146 = vmatprep.subr.bf16.mxu0 0
        %1147 = vmatpush2.bf16.msra.mxu0 0
        %1148 = vmatprep.subr.bf16.mxu0 0
        %1149 = vmatpush2.bf16.msra.mxu0 0
        %1150 = vmatprep.subr.bf16.mxu0 0
        %1151 = vmatpush2.bf16.msra.mxu0 0
        %1152 = vmatprep.subr.bf16.mxu0 0
        %1153 = vmatpush2.bf16.msra.mxu0 0
        %1154 = vmatprep.subr.bf16.mxu0 0
        %1155 = vmatpush2.bf16.msra.mxu0 0
        %1156 = vmatprep.subr.bf16.mxu0 0
        %1157 = vmatpush2.bf16.msra.mxu0 0
        %1158 = vmatprep.subr.bf16.mxu0 0
        %1159 = vmatpush2.bf16.msra.mxu0 0
        %1160 = vmatprep.mubr.bf16.mxu0 0
        %1161 = vmatmul.mubr.bf16.gmra.mxu0 %v1078
        %v1162 = vpop.f32.mrf.mxu0
        %v1163 = vadd.f32 %v871, %v1162
        %v1164 = vpop.f32.mrf.mxu0
        %v1165 = vpop.f32.mrf.mxu0
        %v1166 = vadd.f32 %v874, %v1165
        %v1167 = vpop.f32.mrf.mxu0
        %1168 = vmatprep.mubr.bf16.mxu0 0
        %1169 = vmatmul.mubr.bf16.gmra.mxu0 %v1081
        %v1170 = vpop.f32.mrf.mxu0
        %v1171 = vadd.f32 %v879, %v1170
        %v1172 = vpop.f32.mrf.mxu0
        %v1173 = vpop.f32.mrf.mxu0
        %v1174 = vadd.f32 %v882, %v1173
        %v1175 = vpop.f32.mrf.mxu0
        %1176 = vmatprep.mubr.bf16.mxu0 0
        %1177 = vmatmul.mubr.bf16.gmra.mxu0 %v1084
        %v1178 = vpop.f32.mrf.mxu0
        %v1179 = vadd.f32 %v887, %v1178
        %v1180 = vpop.f32.mrf.mxu0
        %v1181 = vpop.f32.mrf.mxu0
        %v1182 = vadd.f32 %v890, %v1181
        %v1183 = vpop.f32.mrf.mxu0
        %1184 = vmatprep.mubr.bf16.mxu0 0
        %1185 = vmatmul.mubr.bf16.gmra.mxu0 %v1087
        %v1186 = vpop.f32.mrf.mxu0
        %v1187 = vadd.f32 %v895, %v1186
        %v1188 = vpop.f32.mrf.mxu0
        %v1189 = vpop.f32.mrf.mxu0
        %v1190 = vadd.f32 %v898, %v1189
        %v1191 = vpop.f32.mrf.mxu0
        %1192 = vmatprep.mubr.bf16.mxu0 0
        %1193 = vmatmul.mubr.bf16.gmra.mxu0 %v1090
        %v1194 = vpop.f32.mrf.mxu0
        %v1195 = vadd.f32 %v903, %v1194
        %v1196 = vpop.f32.mrf.mxu0
        %v1197 = vpop.f32.mrf.mxu0
        %v1198 = vadd.f32 %v906, %v1197
        %v1199 = vpop.f32.mrf.mxu0
        %1200 = vmatprep.mubr.bf16.mxu0 0
        %1201 = vmatmul.mubr.bf16.gmra.mxu0 %v1093
        %v1202 = vpop.f32.mrf.mxu0
        %v1203 = vadd.f32 %v911, %v1202
        %v1204 = vpop.f32.mrf.mxu0
        %v1205 = vpop.f32.mrf.mxu0
        %v1206 = vadd.f32 %v914, %v1205
        %v1207 = vpop.f32.mrf.mxu0
        %1208 = vmatprep.mubr.bf16.mxu0 0
        %1209 = vmatmul.mubr.bf16.gmra.mxu0 %v1096
        %v1210 = vpop.f32.mrf.mxu0
        %v1211 = vadd.f32 %v919, %v1210
        %v1212 = vpop.f32.mrf.mxu0
        %v1213 = vpop.f32.mrf.mxu0
        %v1214 = vadd.f32 %v922, %v1213
        %v1215 = vpop.f32.mrf.mxu0
        %1216 = vmatprep.mubr.bf16.mxu0 0
        %1217 = vmatmul.mubr.bf16.gmra.mxu0 %v1099
        %v1218 = vpop.f32.mrf.mxu0
        %v1219 = vadd.f32 %v927, %v1218
        %v1220 = vpop.f32.mrf.mxu0
        %v1221 = vpop.f32.mrf.mxu0
        %v1222 = vadd.f32 %v930, %v1221
        %v1223 = vpop.f32.mrf.mxu0
        %1224 = vmatprep.mubr.bf16.mxu0 0
        %1225 = vmatmul.mubr.bf16.gmra.mxu0 %v1102
        %v1226 = vpop.f32.mrf.mxu0
        %v1227 = vadd.f32 %v935, %v1226
        %v1228 = vpop.f32.mrf.mxu0
        %v1229 = vpop.f32.mrf.mxu0
        %v1230 = vadd.f32 %v938, %v1229
        %v1231 = vpop.f32.mrf.mxu0
        %1232 = vmatprep.mubr.bf16.mxu0 0
        %1233 = vmatmul.mubr.bf16.gmra.mxu0 %v1105
        %v1234 = vpop.f32.mrf.mxu0
        %v1235 = vadd.f32 %v943, %v1234
        %v1236 = vpop.f32.mrf.mxu0
        %v1237 = vpop.f32.mrf.mxu0
        %v1238 = vadd.f32 %v946, %v1237
        %v1239 = vpop.f32.mrf.mxu0
        %1240 = vmatprep.mubr.bf16.mxu0 0
        %1241 = vmatmul.mubr.bf16.gmra.mxu0 %v1108
        %v1242 = vpop.f32.mrf.mxu0
        %v1243 = vadd.f32 %v951, %v1242
        %v1244 = vpop.f32.mrf.mxu0
        %v1245 = vpop.f32.mrf.mxu0
        %v1246 = vadd.f32 %v954, %v1245
        %v1247 = vpop.f32.mrf.mxu0
        %1248 = vmatprep.mubr.bf16.mxu0 0
        %1249 = vmatmul.mubr.bf16.gmra.mxu0 %v1111
        %v1250 = vpop.f32.mrf.mxu0
        %v1251 = vadd.f32 %v959, %v1250
        %v1252 = vpop.f32.mrf.mxu0
        %v1253 = vpop.f32.mrf.mxu0
        %v1254 = vadd.f32 %v962, %v1253
        %v1255 = vpop.f32.mrf.mxu0
        %1256 = vmatprep.mubr.bf16.mxu0 0
        %1257 = vmatmul.mubr.bf16.gmra.mxu0 %v1114
        %v1258 = vpop.f32.mrf.mxu0
        %v1259 = vadd.f32 %v967, %v1258
        %v1260 = vpop.f32.mrf.mxu0
        %v1261 = vpop.f32.mrf.mxu0
        %v1262 = vadd.f32 %v970, %v1261
        %v1263 = vpop.f32.mrf.mxu0
        %1264 = vmatprep.mubr.bf16.mxu0 0
        %1265 = vmatmul.mubr.bf16.gmra.mxu0 %v1117
        %v1266 = vpop.f32.mrf.mxu0
        %v1267 = vadd.f32 %v975, %v1266
        %v1268 = vpop.f32.mrf.mxu0
        %v1269 = vpop.f32.mrf.mxu0
        %v1270 = vadd.f32 %v978, %v1269
        %v1271 = vpop.f32.mrf.mxu0
        %1272 = vmatprep.mubr.bf16.mxu0 0
        %1273 = vmatmul.mubr.bf16.gmra.mxu0 %v1120
        %v1274 = vpop.f32.mrf.mxu0
        %v1275 = vadd.f32 %v983, %v1274
        %v1276 = vpop.f32.mrf.mxu0
        %v1277 = vpop.f32.mrf.mxu0
        %v1278 = vadd.f32 %v986, %v1277
        %v1279 = vpop.f32.mrf.mxu0
        %1280 = vmatprep.mubr.bf16.mxu0 0
        %1281 = vmatmul.mubr.bf16.gmra.mxu0 %v1123
        %v1282 = vpop.f32.mrf.mxu0
        %v1283 = vadd.f32 %v991, %v1282
        %v1284 = vpop.f32.mrf.mxu0
        %v1285 = vpop.f32.mrf.mxu0
        %v1286 = vadd.f32 %v994, %v1285
        %v1287 = vpop.f32.mrf.mxu0
        %1288 = vdwg.mxu0
        %vm1305 = vcmask 1042432
        %vm1306 = vcmask 1046532
        %vm1307 = vmor %vm1305, %vm1306
        %v1308 = vrot.slane %v291, 5
        %v1309 = vrot.slane %v1308, 4
        %v1310 = vrot.slane %v292, 5
        %v1311 = vsel %vm1307, %v1309, %v1310
        %v1312 = vrot.slane %v1310, 4
        %v1313 = vrot.slane %v293, 5
        %v1314 = vsel %vm1307, %v1312, %v1313
        %v1315 = vrot.slane %v294, 5
        %v1316 = vrot.slane %v1315, 4
        %v1317 = vrot.slane %v295, 5
        %v1318 = vsel %vm1307, %v1316, %v1317
        %v1319 = vrot.slane %v1317, 4
        %v1320 = vrot.slane %v296, 5
        %v1321 = vsel %vm1307, %v1319, %v1320
        %v1322 = vrot.slane %v297, 5
        %v1323 = vrot.slane %v1322, 4
        %v1324 = vrot.slane %v298, 5
        %v1325 = vsel %vm1307, %v1323, %v1324
        %v1326 = vrot.slane %v1324, 4
        %v1327 = vrot.slane %v299, 5
        %v1328 = vsel %vm1307, %v1326, %v1327
        %v1329 = vrot.slane %v300, 5
        %v1330 = vrot.slane %v1329, 4
        %v1331 = vrot.slane %v301, 5
        %v1332 = vsel %vm1307, %v1330, %v1331
        %v1333 = vrot.slane %v1331, 4
        %v1334 = vrot.slane %v302, 5
        %v1335 = vsel %vm1307, %v1333, %v1334
        %v1336 = vrot.slane %v303, 5
        %v1337 = vrot.slane %v1336, 4
        %v1338 = vrot.slane %v304, 5
        %v1339 = vsel %vm1307, %v1337, %v1338
        %v1340 = vrot.slane %v1338, 4
        %v1341 = vrot.slane %v305, 5
        %v1342 = vsel %vm1307, %v1340, %v1341
        %v1343 = vrot.slane %v306, 5
        %v1344 = vrot.slane %v1343, 4
        %v1345 = vrot.slane %v307, 5
        %v1346 = vsel %vm1307, %v1344, %v1345
        %v1347 = vrot.slane %v1345, 4
        %v1348 = vrot.slane %v308, 5
        %v1349 = vsel %vm1307, %v1347, %v1348
        %v1350 = vrot.slane %v309, 5
        %v1351 = vrot.slane %v1350, 4
        %v1352 = vrot.slane %v310, 5
        %v1353 = vsel %vm1307, %v1351, %v1352
        %v1354 = vrot.slane %v1352, 4
        %v1355 = vrot.slane %v311, 5
        %v1356 = vsel %vm1307, %v1354, %v1355
        %v1357 = vrot.slane %v312, 5
        %v1358 = vrot.slane %v1357, 4
        %v1359 = vrot.slane %v313, 5
        %v1360 = vsel %vm1307, %v1358, %v1359
        %v1361 = vrot.slane %v1359, 4
        %v1362 = vrot.slane %v314, 5
        %v1363 = vsel %vm1307, %v1361, %v1362
        %v1364 = vrot.slane %v315, 5
        %v1365 = vrot.slane %v1364, 4
        %v1366 = vrot.slane %v316, 5
        %v1367 = vsel %vm1307, %v1365, %v1366
        %v1368 = vrot.slane %v1366, 4
        %v1369 = vrot.slane %v317, 5
        %v1370 = vsel %vm1307, %v1368, %v1369
        %v1371 = vrot.slane %v318, 5
        %v1372 = vrot.slane %v1371, 4
        %v1373 = vrot.slane %v319, 5
        %v1374 = vsel %vm1307, %v1372, %v1373
        %v1375 = vrot.slane %v1373, 4
        %v1376 = vrot.slane %v320, 5
        %v1377 = vsel %vm1307, %v1375, %v1376
        %v1378 = vrot.slane %v321, 5
        %v1379 = vrot.slane %v1378, 4
        %v1380 = vrot.slane %v322, 5
        %v1381 = vsel %vm1307, %v1379, %v1380
        %v1382 = vrot.slane %v1380, 4
        %v1383 = vrot.slane %v323, 5
        %v1384 = vsel %vm1307, %v1382, %v1383
        %v1385 = vrot.slane %v324, 5
        %v1386 = vrot.slane %v1385, 4
        %v1387 = vrot.slane %v325, 5
        %v1388 = vsel %vm1307, %v1386, %v1387
        %v1389 = vrot.slane %v1387, 4
        %v1390 = vrot.slane %v326, 5
        %v1391 = vsel %vm1307, %v1389, %v1390
        %v1392 = vrot.slane %v327, 5
        %v1393 = vrot.slane %v1392, 4
        %v1394 = vrot.slane %v328, 5
        %v1395 = vsel %vm1307, %v1393, %v1394
        %v1396 = vrot.slane %v1394, 4
        %v1397 = vrot.slane %v329, 5
        %v1398 = vsel %vm1307, %v1396, %v1397
        %v1399 = vrot.slane %v330, 5
        %v1400 = vrot.slane %v1399, 4
        %v1401 = vrot.slane %v331, 5
        %v1402 = vsel %vm1307, %v1400, %v1401
        %v1403 = vrot.slane %v1401, 4
        %v1404 = vrot.slane %v332, 5
        %v1405 = vsel %vm1307, %v1403, %v1404
        %v1406 = vrot.slane %v333, 5
        %v1407 = vrot.slane %v1406, 4
        %v1408 = vrot.slane %v334, 5
        %v1409 = vsel %vm1307, %v1407, %v1408
        %v1410 = vrot.slane %v1408, 4
        %v1411 = vrot.slane %v335, 5
        %v1412 = vsel %vm1307, %v1410, %v1411
        %v1413 = vrot.slane %v336, 5
        %v1414 = vrot.slane %v1413, 4
        %v1415 = vrot.slane %v337, 5
        %v1416 = vsel %vm1307, %v1414, %v1415
        %v1417 = vrot.slane %v1415, 4
        %v1418 = vrot.slane %v338, 5
        %v1419 = vsel %vm1307, %v1417, %v1418
        %s1420 = scalar_lea.vmem %s2, 4
        %v1421 = vld [vmem:[%s1420] sm:$0x3]
        %v1422 = vunpack.c.l.b16 %v1311
        %v1423 = vunpack.c.l.b16 %v1314
        %v1424 = vunpack.c.l.b16 %v1318
        %v1425 = vunpack.c.l.b16 %v1321
        %v1426 = vunpack.c.l.b16 %v1325
        %v1427 = vunpack.c.l.b16 %v1328
        %v1428 = vunpack.c.l.b16 %v1332
        %v1429 = vunpack.c.l.b16 %v1335
        %v1430 = vunpack.c.l.b16 %v1339
        %v1431 = vunpack.c.l.b16 %v1342
        %v1432 = vunpack.c.l.b16 %v1346
        %v1433 = vunpack.c.l.b16 %v1349
        %v1434 = vunpack.c.l.b16 %v1353
        %v1435 = vunpack.c.l.b16 %v1356
        %v1436 = vunpack.c.l.b16 %v1360
        %v1437 = vunpack.c.l.b16 %v1363
        %v1438 = vunpack.c.l.b16 %v1367
        %v1439 = vunpack.c.l.b16 %v1370
        %v1440 = vunpack.c.l.b16 %v1374
        %v1441 = vunpack.c.l.b16 %v1377
        %v1442 = vunpack.c.l.b16 %v1381
        %v1443 = vunpack.c.l.b16 %v1384
        %v1444 = vunpack.c.l.b16 %v1388
        %v1445 = vunpack.c.l.b16 %v1391
        %v1446 = vunpack.c.l.b16 %v1395
        %v1447 = vunpack.c.l.b16 %v1398
        %v1448 = vunpack.c.l.b16 %v1402
        %v1449 = vunpack.c.l.b16 %v1405
        %v1450 = vunpack.c.l.b16 %v1409
        %v1451 = vunpack.c.l.b16 %v1412
        %v1452 = vunpack.c.l.b16 %v1416
        %v1453 = vunpack.c.l.b16 %v1419
        %v1454 = vpack.c.b16 %v1423, %v1422
        %v1455 = vpack.c.b16 %v1425, %v1424
        %v1456 = vpack.c.b16 %v1427, %v1426
        %v1457 = vpack.c.b16 %v1429, %v1428
        %v1458 = vpack.c.b16 %v1431, %v1430
        %v1459 = vpack.c.b16 %v1433, %v1432
        %v1460 = vpack.c.b16 %v1435, %v1434
        %v1461 = vpack.c.b16 %v1437, %v1436
        %v1462 = vpack.c.b16 %v1439, %v1438
        %v1463 = vpack.c.b16 %v1441, %v1440
        %v1464 = vpack.c.b16 %v1443, %v1442
        %v1465 = vpack.c.b16 %v1445, %v1444
        %v1466 = vpack.c.b16 %v1447, %v1446
        %v1467 = vpack.c.b16 %v1449, %v1448
        %v1468 = vpack.c.b16 %v1451, %v1450
        %v1469 = vpack.c.b16 %v1453, %v1452
        %v1471 = vsel %vm783, %v1454, 0
        %v1474 = vsel %vm783, %v1455, 0
        %v1477 = vsel %vm783, %v1456, 0
        %v1480 = vsel %vm783, %v1457, 0
        %v1483 = vsel %vm783, %v1458, 0
        %v1486 = vsel %vm783, %v1459, 0
        %v1489 = vsel %vm783, %v1460, 0
        %v1492 = vsel %vm783, %v1461, 0
        %v1495 = vsel %vm783, %v1462, 0
        %v1498 = vsel %vm783, %v1463, 0
        %v1501 = vsel %vm783, %v1464, 0
        %v1504 = vsel %vm783, %v1465, 0
        %v1507 = vsel %vm783, %v1466, 0
        %v1510 = vsel %vm783, %v1467, 0
        %v1513 = vsel %vm783, %v1468, 0
        %v1516 = vsel %vm783, %v1469, 0
        %v1519 = vsel %vm832, %v1421, 0
        %1521 = vmatprep.subr.bf16.mxu0 0
        %1522 = vmatpush1.bf16.msra.mxu0 0
        %1523 = vmatprep.subr.bf16.mxu0 0
        %1524 = vmatpush1.bf16.msra.mxu0 0
        %1525 = vmatprep.subr.bf16.mxu0 0
        %1526 = vmatpush1.bf16.msra.mxu0 0
        %1527 = vmatprep.subr.bf16.mxu0 0
        %1528 = vmatpush1.bf16.msra.mxu0 0
        %1529 = vmatprep.subr.bf16.mxu0 0
        %1530 = vmatpush1.bf16.msra.mxu0 0
        %1531 = vmatprep.subr.bf16.mxu0 0
        %1532 = vmatpush1.bf16.msra.mxu0 0
        %1533 = vmatprep.subr.bf16.mxu0 0
        %1534 = vmatpush1.bf16.msra.mxu0 0
        %1535 = vmatprep.subr.bf16.mxu0 0
        %1536 = vmatpush1.bf16.msra.mxu0 %v1519
        %1537 = vmatprep.subr.bf16.mxu0 0
        %1538 = vmatpush2.bf16.msra.mxu0 0
        %1539 = vmatprep.subr.bf16.mxu0 0
        %1540 = vmatpush2.bf16.msra.mxu0 0
        %1541 = vmatprep.subr.bf16.mxu0 0
        %1542 = vmatpush2.bf16.msra.mxu0 0
        %1543 = vmatprep.subr.bf16.mxu0 0
        %1544 = vmatpush2.bf16.msra.mxu0 0
        %1545 = vmatprep.subr.bf16.mxu0 0
        %1546 = vmatpush2.bf16.msra.mxu0 0
        %1547 = vmatprep.subr.bf16.mxu0 0
        %1548 = vmatpush2.bf16.msra.mxu0 0
        %1549 = vmatprep.subr.bf16.mxu0 0
        %1550 = vmatpush2.bf16.msra.mxu0 0
        %1551 = vmatprep.subr.bf16.mxu0 0
        %1552 = vmatpush2.bf16.msra.mxu0 0
        %1553 = vmatprep.mubr.bf16.mxu0 0
        %1554 = vmatmul.mubr.bf16.gmra.mxu0 %v1471
        %v1555 = vpop.f32.mrf.mxu0
        %v1556 = vadd.f32 0.0, %v1555
        %v1557 = vpop.f32.mrf.mxu0
        %v1558 = vpop.f32.mrf.mxu0
        %v1559 = vadd.f32 0.0, %v1558
        %v1560 = vpop.f32.mrf.mxu0
        %1561 = vmatprep.mubr.bf16.mxu0 0
        %1562 = vmatmul.mubr.bf16.gmra.mxu0 %v1474
        %v1563 = vpop.f32.mrf.mxu0
        %v1564 = vadd.f32 0.0, %v1563
        %v1565 = vpop.f32.mrf.mxu0
        %v1566 = vpop.f32.mrf.mxu0
        %v1567 = vadd.f32 0.0, %v1566
        %v1568 = vpop.f32.mrf.mxu0
        %1569 = vmatprep.mubr.bf16.mxu0 0
        %1570 = vmatmul.mubr.bf16.gmra.mxu0 %v1477
        %v1571 = vpop.f32.mrf.mxu0
        %v1572 = vadd.f32 0.0, %v1571
        %v1573 = vpop.f32.mrf.mxu0
        %v1574 = vpop.f32.mrf.mxu0
        %v1575 = vadd.f32 0.0, %v1574
        %v1576 = vpop.f32.mrf.mxu0
        %1577 = vmatprep.mubr.bf16.mxu0 0
        %1578 = vmatmul.mubr.bf16.gmra.mxu0 %v1480
        %v1579 = vpop.f32.mrf.mxu0
        %v1580 = vadd.f32 0.0, %v1579
        %v1581 = vpop.f32.mrf.mxu0
        %v1582 = vpop.f32.mrf.mxu0
        %v1583 = vadd.f32 0.0, %v1582
        %v1584 = vpop.f32.mrf.mxu0
        %1585 = vmatprep.mubr.bf16.mxu0 0
        %1586 = vmatmul.mubr.bf16.gmra.mxu0 %v1483
        %v1587 = vpop.f32.mrf.mxu0
        %v1588 = vadd.f32 0.0, %v1587
        %v1589 = vpop.f32.mrf.mxu0
        %v1590 = vpop.f32.mrf.mxu0
        %v1591 = vadd.f32 0.0, %v1590
        %v1592 = vpop.f32.mrf.mxu0
        %1593 = vmatprep.mubr.bf16.mxu0 0
        %1594 = vmatmul.mubr.bf16.gmra.mxu0 %v1486
        %v1595 = vpop.f32.mrf.mxu0
        %v1596 = vadd.f32 0.0, %v1595
        %v1597 = vpop.f32.mrf.mxu0
        %v1598 = vpop.f32.mrf.mxu0
        %v1599 = vadd.f32 0.0, %v1598
        %v1600 = vpop.f32.mrf.mxu0
        %1601 = vmatprep.mubr.bf16.mxu0 0
        %1602 = vmatmul.mubr.bf16.gmra.mxu0 %v1489
        %v1603 = vpop.f32.mrf.mxu0
        %v1604 = vadd.f32 0.0, %v1603
        %v1605 = vpop.f32.mrf.mxu0
        %v1606 = vpop.f32.mrf.mxu0
        %v1607 = vadd.f32 0.0, %v1606
        %v1608 = vpop.f32.mrf.mxu0
        %1609 = vmatprep.mubr.bf16.mxu0 0
        %1610 = vmatmul.mubr.bf16.gmra.mxu0 %v1492
        %v1611 = vpop.f32.mrf.mxu0
        %v1612 = vadd.f32 0.0, %v1611
        %v1613 = vpop.f32.mrf.mxu0
        %v1614 = vpop.f32.mrf.mxu0
        %v1615 = vadd.f32 0.0, %v1614
        %v1616 = vpop.f32.mrf.mxu0
        %1617 = vmatprep.mubr.bf16.mxu0 0
        %1618 = vmatmul.mubr.bf16.gmra.mxu0 %v1495
        %v1619 = vpop.f32.mrf.mxu0
        %v1620 = vadd.f32 0.0, %v1619
        %v1621 = vpop.f32.mrf.mxu0
        %v1622 = vpop.f32.mrf.mxu0
        %v1623 = vadd.f32 0.0, %v1622
        %v1624 = vpop.f32.mrf.mxu0
        %1625 = vmatprep.mubr.bf16.mxu0 0
        %1626 = vmatmul.mubr.bf16.gmra.mxu0 %v1498
        %v1627 = vpop.f32.mrf.mxu0
        %v1628 = vadd.f32 0.0, %v1627
        %v1629 = vpop.f32.mrf.mxu0
        %v1630 = vpop.f32.mrf.mxu0
        %v1631 = vadd.f32 0.0, %v1630
        %v1632 = vpop.f32.mrf.mxu0
        %1633 = vmatprep.mubr.bf16.mxu0 0
        %1634 = vmatmul.mubr.bf16.gmra.mxu0 %v1501
        %v1635 = vpop.f32.mrf.mxu0
        %v1636 = vadd.f32 0.0, %v1635
        %v1637 = vpop.f32.mrf.mxu0
        %v1638 = vpop.f32.mrf.mxu0
        %v1639 = vadd.f32 0.0, %v1638
        %v1640 = vpop.f32.mrf.mxu0
        %1641 = vmatprep.mubr.bf16.mxu0 0
        %1642 = vmatmul.mubr.bf16.gmra.mxu0 %v1504
        %v1643 = vpop.f32.mrf.mxu0
        %v1644 = vadd.f32 0.0, %v1643
        %v1645 = vpop.f32.mrf.mxu0
        %v1646 = vpop.f32.mrf.mxu0
        %v1647 = vadd.f32 0.0, %v1646
        %v1648 = vpop.f32.mrf.mxu0
        %1649 = vmatprep.mubr.bf16.mxu0 0
        %1650 = vmatmul.mubr.bf16.gmra.mxu0 %v1507
        %v1651 = vpop.f32.mrf.mxu0
        %v1652 = vadd.f32 0.0, %v1651
        %v1653 = vpop.f32.mrf.mxu0
        %v1654 = vpop.f32.mrf.mxu0
        %v1655 = vadd.f32 0.0, %v1654
        %v1656 = vpop.f32.mrf.mxu0
        %1657 = vmatprep.mubr.bf16.mxu0 0
        %1658 = vmatmul.mubr.bf16.gmra.mxu0 %v1510
        %v1659 = vpop.f32.mrf.mxu0
        %v1660 = vadd.f32 0.0, %v1659
        %v1661 = vpop.f32.mrf.mxu0
        %v1662 = vpop.f32.mrf.mxu0
        %v1663 = vadd.f32 0.0, %v1662
        %v1664 = vpop.f32.mrf.mxu0
        %1665 = vmatprep.mubr.bf16.mxu0 0
        %1666 = vmatmul.mubr.bf16.gmra.mxu0 %v1513
        %v1667 = vpop.f32.mrf.mxu0
        %v1668 = vadd.f32 0.0, %v1667
        %v1669 = vpop.f32.mrf.mxu0
        %v1670 = vpop.f32.mrf.mxu0
        %v1671 = vadd.f32 0.0, %v1670
        %v1672 = vpop.f32.mrf.mxu0
        %1673 = vmatprep.mubr.bf16.mxu0 0
        %1674 = vmatmul.mubr.bf16.gmra.mxu0 %v1516
        %v1675 = vpop.f32.mrf.mxu0
        %v1676 = vadd.f32 0.0, %v1675
        %v1677 = vpop.f32.mrf.mxu0
        %v1678 = vpop.f32.mrf.mxu0
        %v1679 = vadd.f32 0.0, %v1678
        %v1680 = vpop.f32.mrf.mxu0
        %1681 = vdwg.mxu0
        %v1682 = vadd.f32 %v1163, %v1556
        %v1683 = vadd.f32 %v1166, %v1559
        %v1684 = vadd.f32 %v1171, %v1564
        %v1685 = vadd.f32 %v1174, %v1567
        %v1686 = vadd.f32 %v1179, %v1572
        %v1687 = vadd.f32 %v1182, %v1575
        %v1688 = vadd.f32 %v1187, %v1580
        %v1689 = vadd.f32 %v1190, %v1583
        %v1690 = vadd.f32 %v1195, %v1588
        %v1691 = vadd.f32 %v1198, %v1591
        %v1692 = vadd.f32 %v1203, %v1596
        %v1693 = vadd.f32 %v1206, %v1599
        %v1694 = vadd.f32 %v1211, %v1604
        %v1695 = vadd.f32 %v1214, %v1607
        %v1696 = vadd.f32 %v1219, %v1612
        %v1697 = vadd.f32 %v1222, %v1615
        %v1698 = vadd.f32 %v1227, %v1620
        %v1699 = vadd.f32 %v1230, %v1623
        %v1700 = vadd.f32 %v1235, %v1628
        %v1701 = vadd.f32 %v1238, %v1631
        %v1702 = vadd.f32 %v1243, %v1636
        %v1703 = vadd.f32 %v1246, %v1639
        %v1704 = vadd.f32 %v1251, %v1644
        %v1705 = vadd.f32 %v1254, %v1647
        %v1706 = vadd.f32 %v1259, %v1652
        %v1707 = vadd.f32 %v1262, %v1655
        %v1708 = vadd.f32 %v1267, %v1660
        %v1709 = vadd.f32 %v1270, %v1663
        %v1710 = vadd.f32 %v1275, %v1668
        %v1711 = vadd.f32 %v1278, %v1671
        %v1712 = vadd.f32 %v1283, %v1676
        %v1713 = vadd.f32 %v1286, %v1679
        %s1714 = scalar_lea.vmem %s2, 6
        %v1715 = vld [vmem:[%s1714] sm:$0x3]
        %v1718 = vunpack.c.l.b16 %v339
        %v1719 = vunpack.c.l.b16 %v340
        %v1720 = vpack.c.b16 %v1719, %v1718
        %v1722 = vsel %vm783, %v1720, 0
        %v1725 = vsel %vm832, %v1715, 0
        %1727 = vmatprep.subr.bf16.mxu0 0
        %1728 = vmatpush1.bf16.msra.mxu0 0
        %1729 = vmatprep.subr.bf16.mxu0 0
        %1730 = vmatpush1.bf16.msra.mxu0 0
        %1731 = vmatprep.subr.bf16.mxu0 0
        %1732 = vmatpush1.bf16.msra.mxu0 0
        %1733 = vmatprep.subr.bf16.mxu0 0
        %1734 = vmatpush1.bf16.msra.mxu0 0
        %1735 = vmatprep.subr.bf16.mxu0 0
        %1736 = vmatpush1.bf16.msra.mxu0 0
        %1737 = vmatprep.subr.bf16.mxu0 0
        %1738 = vmatpush1.bf16.msra.mxu0 0
        %1739 = vmatprep.subr.bf16.mxu0 0
        %1740 = vmatpush1.bf16.msra.mxu0 0
        %1741 = vmatprep.subr.bf16.mxu0 0
        %1742 = vmatpush1.bf16.msra.mxu0 %v1725
        %1743 = vmatprep.subr.bf16.mxu0 0
        %1744 = vmatpush2.bf16.msra.mxu0 0
        %1745 = vmatprep.subr.bf16.mxu0 0
        %1746 = vmatpush2.bf16.msra.mxu0 0
        %1747 = vmatprep.subr.bf16.mxu0 0
        %1748 = vmatpush2.bf16.msra.mxu0 0
        %1749 = vmatprep.subr.bf16.mxu0 0
        %1750 = vmatpush2.bf16.msra.mxu0 0
        %1751 = vmatprep.subr.bf16.mxu0 0
        %1752 = vmatpush2.bf16.msra.mxu0 0
        %1753 = vmatprep.subr.bf16.mxu0 0
        %1754 = vmatpush2.bf16.msra.mxu0 0
        %1755 = vmatprep.subr.bf16.mxu0 0
        %1756 = vmatpush2.bf16.msra.mxu0 0
        %1757 = vmatprep.subr.bf16.mxu0 0
        %1758 = vmatpush2.bf16.msra.mxu0 0
        %1759 = vmatprep.mubr.bf16.mxu0 0
        %1760 = vmatmul.mubr.bf16.gmra.mxu0 %v1081
        %v1761 = vpop.f32.mrf.mxu0
        %v1762 = vadd.f32 0.0, %v1761
        %v1763 = vpop.f32.mrf.mxu0
        %v1764 = vpop.f32.mrf.mxu0
        %v1765 = vadd.f32 0.0, %v1764
        %v1766 = vpop.f32.mrf.mxu0
        %1767 = vmatprep.mubr.bf16.mxu0 0
        %1768 = vmatmul.mubr.bf16.gmra.mxu0 %v1084
        %v1769 = vpop.f32.mrf.mxu0
        %v1770 = vadd.f32 0.0, %v1769
        %v1771 = vpop.f32.mrf.mxu0
        %v1772 = vpop.f32.mrf.mxu0
        %v1773 = vadd.f32 0.0, %v1772
        %v1774 = vpop.f32.mrf.mxu0
        %1775 = vmatprep.mubr.bf16.mxu0 0
        %1776 = vmatmul.mubr.bf16.gmra.mxu0 %v1087
        %v1777 = vpop.f32.mrf.mxu0
        %v1778 = vadd.f32 0.0, %v1777
        %v1779 = vpop.f32.mrf.mxu0
        %v1780 = vpop.f32.mrf.mxu0
        %v1781 = vadd.f32 0.0, %v1780
        %v1782 = vpop.f32.mrf.mxu0
        %1783 = vmatprep.mubr.bf16.mxu0 0
        %1784 = vmatmul.mubr.bf16.gmra.mxu0 %v1090
        %v1785 = vpop.f32.mrf.mxu0
        %v1786 = vadd.f32 0.0, %v1785
        %v1787 = vpop.f32.mrf.mxu0
        %v1788 = vpop.f32.mrf.mxu0
        %v1789 = vadd.f32 0.0, %v1788
        %v1790 = vpop.f32.mrf.mxu0
        %1791 = vmatprep.mubr.bf16.mxu0 0
        %1792 = vmatmul.mubr.bf16.gmra.mxu0 %v1093
        %v1793 = vpop.f32.mrf.mxu0
        %v1794 = vadd.f32 0.0, %v1793
        %v1795 = vpop.f32.mrf.mxu0
        %v1796 = vpop.f32.mrf.mxu0
        %v1797 = vadd.f32 0.0, %v1796
        %v1798 = vpop.f32.mrf.mxu0
        %1799 = vmatprep.mubr.bf16.mxu0 0
        %1800 = vmatmul.mubr.bf16.gmra.mxu0 %v1096
        %v1801 = vpop.f32.mrf.mxu0
        %v1802 = vadd.f32 0.0, %v1801
        %v1803 = vpop.f32.mrf.mxu0
        %v1804 = vpop.f32.mrf.mxu0
        %v1805 = vadd.f32 0.0, %v1804
        %v1806 = vpop.f32.mrf.mxu0
        %1807 = vmatprep.mubr.bf16.mxu0 0
        %1808 = vmatmul.mubr.bf16.gmra.mxu0 %v1099
        %v1809 = vpop.f32.mrf.mxu0
        %v1810 = vadd.f32 0.0, %v1809
        %v1811 = vpop.f32.mrf.mxu0
        %v1812 = vpop.f32.mrf.mxu0
        %v1813 = vadd.f32 0.0, %v1812
        %v1814 = vpop.f32.mrf.mxu0
        %1815 = vmatprep.mubr.bf16.mxu0 0
        %1816 = vmatmul.mubr.bf16.gmra.mxu0 %v1102
        %v1817 = vpop.f32.mrf.mxu0
        %v1818 = vadd.f32 0.0, %v1817
        %v1819 = vpop.f32.mrf.mxu0
        %v1820 = vpop.f32.mrf.mxu0
        %v1821 = vadd.f32 0.0, %v1820
        %v1822 = vpop.f32.mrf.mxu0
        %1823 = vmatprep.mubr.bf16.mxu0 0
        %1824 = vmatmul.mubr.bf16.gmra.mxu0 %v1105
        %v1825 = vpop.f32.mrf.mxu0
        %v1826 = vadd.f32 0.0, %v1825
        %v1827 = vpop.f32.mrf.mxu0
        %v1828 = vpop.f32.mrf.mxu0
        %v1829 = vadd.f32 0.0, %v1828
        %v1830 = vpop.f32.mrf.mxu0
        %1831 = vmatprep.mubr.bf16.mxu0 0
        %1832 = vmatmul.mubr.bf16.gmra.mxu0 %v1108
        %v1833 = vpop.f32.mrf.mxu0
        %v1834 = vadd.f32 0.0, %v1833
        %v1835 = vpop.f32.mrf.mxu0
        %v1836 = vpop.f32.mrf.mxu0
        %v1837 = vadd.f32 0.0, %v1836
        %v1838 = vpop.f32.mrf.mxu0
        %1839 = vmatprep.mubr.bf16.mxu0 0
        %1840 = vmatmul.mubr.bf16.gmra.mxu0 %v1111
        %v1841 = vpop.f32.mrf.mxu0
        %v1842 = vadd.f32 0.0, %v1841
        %v1843 = vpop.f32.mrf.mxu0
        %v1844 = vpop.f32.mrf.mxu0
        %v1845 = vadd.f32 0.0, %v1844
        %v1846 = vpop.f32.mrf.mxu0
        %1847 = vmatprep.mubr.bf16.mxu0 0
        %1848 = vmatmul.mubr.bf16.gmra.mxu0 %v1114
        %v1849 = vpop.f32.mrf.mxu0
        %v1850 = vadd.f32 0.0, %v1849
        %v1851 = vpop.f32.mrf.mxu0
        %v1852 = vpop.f32.mrf.mxu0
        %v1853 = vadd.f32 0.0, %v1852
        %v1854 = vpop.f32.mrf.mxu0
        %1855 = vmatprep.mubr.bf16.mxu0 0
        %1856 = vmatmul.mubr.bf16.gmra.mxu0 %v1117
        %v1857 = vpop.f32.mrf.mxu0
        %v1858 = vadd.f32 0.0, %v1857
        %v1859 = vpop.f32.mrf.mxu0
        %v1860 = vpop.f32.mrf.mxu0
        %v1861 = vadd.f32 0.0, %v1860
        %v1862 = vpop.f32.mrf.mxu0
        %1863 = vmatprep.mubr.bf16.mxu0 0
        %1864 = vmatmul.mubr.bf16.gmra.mxu0 %v1120
        %v1865 = vpop.f32.mrf.mxu0
        %v1866 = vadd.f32 0.0, %v1865
        %v1867 = vpop.f32.mrf.mxu0
        %v1868 = vpop.f32.mrf.mxu0
        %v1869 = vadd.f32 0.0, %v1868
        %v1870 = vpop.f32.mrf.mxu0
        %1871 = vmatprep.mubr.bf16.mxu0 0
        %1872 = vmatmul.mubr.bf16.gmra.mxu0 %v1123
        %v1873 = vpop.f32.mrf.mxu0
        %v1874 = vadd.f32 0.0, %v1873
        %v1875 = vpop.f32.mrf.mxu0
        %v1876 = vpop.f32.mrf.mxu0
        %v1877 = vadd.f32 0.0, %v1876
        %v1878 = vpop.f32.mrf.mxu0
        %1879 = vmatprep.mubr.bf16.mxu0 0
        %1880 = vmatmul.mubr.bf16.gmra.mxu0 %v1722
        %v1881 = vpop.f32.mrf.mxu0
        %v1882 = vadd.f32 0.0, %v1881
        %v1883 = vpop.f32.mrf.mxu0
        %v1884 = vpop.f32.mrf.mxu0
        %v1885 = vadd.f32 0.0, %v1884
        %v1886 = vpop.f32.mrf.mxu0
        %1887 = vdwg.mxu0
        %v1888 = vadd.f32 %v1682, %v1762
        %v1889 = vadd.f32 %v1683, %v1765
        %v1890 = vadd.f32 %v1684, %v1770
        %v1891 = vadd.f32 %v1685, %v1773
        %v1892 = vadd.f32 %v1686, %v1778
        %v1893 = vadd.f32 %v1687, %v1781
        %v1894 = vadd.f32 %v1688, %v1786
        %v1895 = vadd.f32 %v1689, %v1789
        %v1896 = vadd.f32 %v1690, %v1794
        %v1897 = vadd.f32 %v1691, %v1797
        %v1898 = vadd.f32 %v1692, %v1802
        %v1899 = vadd.f32 %v1693, %v1805
        %v1900 = vadd.f32 %v1694, %v1810
        %v1901 = vadd.f32 %v1695, %v1813
        %v1902 = vadd.f32 %v1696, %v1818
        %v1903 = vadd.f32 %v1697, %v1821
        %v1904 = vadd.f32 %v1698, %v1826
        %v1905 = vadd.f32 %v1699, %v1829
        %v1906 = vadd.f32 %v1700, %v1834
        %v1907 = vadd.f32 %v1701, %v1837
        %v1908 = vadd.f32 %v1702, %v1842
        %v1909 = vadd.f32 %v1703, %v1845
        %v1910 = vadd.f32 %v1704, %v1850
        %v1911 = vadd.f32 %v1705, %v1853
        %v1912 = vadd.f32 %v1706, %v1858
        %v1913 = vadd.f32 %v1707, %v1861
        %v1914 = vadd.f32 %v1708, %v1866
        %v1915 = vadd.f32 %v1709, %v1869
        %v1916 = vadd.f32 %v1710, %v1874
        %v1917 = vadd.f32 %v1711, %v1877
        %v1918 = vadd.f32 %v1712, %v1882
        %v1919 = vadd.f32 %v1713, %v1885
        %v1921 = vshrl.u32 %v339, 16
        %v1923 = vrot.slane %v1921, 4
        %v1924 = vshll.u32 %v339, 16
        %v1926 = vrot.slane %v1924, 5
        %v1927 = vor.u32 %v1923, %v1926
        %v1928 = vrot.slane %v1927, 4
        %v1930 = vshll.u32 %v340, 16
        %v1932 = vrot.slane %v1930, 5
        %v1933 = vsel %vm348, %v1928, %v1932
        %v1934 = vshrl.u32 %v340, 16
        %v1936 = vrot.slane %v1934, 4
        %v1937 = vor.u32 %v1936, %v1932
        %v1938 = vrot.slane %v1937, 4
        %v1940 = vshll.u32 %v341, 16
        %v1942 = vrot.slane %v1940, 5
        %v1943 = vsel %vm348, %v1938, %v1942
        %s1944 = scalar_lea.vmem %s2, 8
        %v1945 = vld [vmem:[%s1944] sm:$0x3]
        %v1946 = vunpack.c.l.b16 %v1933
        %v1947 = vunpack.c.l.b16 %v1943
        %v1948 = vpack.c.b16 %v1947, %v1946
        %v1950 = vsel %vm783, %v1948, 0
        %v1953 = vsel %vm832, %v1945, 0
        %1955 = vmatprep.subr.bf16.mxu0 0
        %1956 = vmatpush1.bf16.msra.mxu0 0
        %1957 = vmatprep.subr.bf16.mxu0 0
        %1958 = vmatpush1.bf16.msra.mxu0 0
        %1959 = vmatprep.subr.bf16.mxu0 0
        %1960 = vmatpush1.bf16.msra.mxu0 0
        %1961 = vmatprep.subr.bf16.mxu0 0
        %1962 = vmatpush1.bf16.msra.mxu0 0
        %1963 = vmatprep.subr.bf16.mxu0 0
        %1964 = vmatpush1.bf16.msra.mxu0 0
        %1965 = vmatprep.subr.bf16.mxu0 0
        %1966 = vmatpush1.bf16.msra.mxu0 0
        %1967 = vmatprep.subr.bf16.mxu0 0
        %1968 = vmatpush1.bf16.msra.mxu0 0
        %1969 = vmatprep.subr.bf16.mxu0 0
        %1970 = vmatpush1.bf16.msra.mxu0 %v1953
        %1971 = vmatprep.subr.bf16.mxu0 0
        %1972 = vmatpush2.bf16.msra.mxu0 0
        %1973 = vmatprep.subr.bf16.mxu0 0
        %1974 = vmatpush2.bf16.msra.mxu0 0
        %1975 = vmatprep.subr.bf16.mxu0 0
        %1976 = vmatpush2.bf16.msra.mxu0 0
        %1977 = vmatprep.subr.bf16.mxu0 0
        %1978 = vmatpush2.bf16.msra.mxu0 0
        %1979 = vmatprep.subr.bf16.mxu0 0
        %1980 = vmatpush2.bf16.msra.mxu0 0
        %1981 = vmatprep.subr.bf16.mxu0 0
        %1982 = vmatpush2.bf16.msra.mxu0 0
        %1983 = vmatprep.subr.bf16.mxu0 0
        %1984 = vmatpush2.bf16.msra.mxu0 0
        %1985 = vmatprep.subr.bf16.mxu0 0
        %1986 = vmatpush2.bf16.msra.mxu0 0
        %1987 = vmatprep.mubr.bf16.mxu0 0
        %1988 = vmatmul.mubr.bf16.gmra.mxu0 %v788
        %v1989 = vpop.f32.mrf.mxu0
        %v1990 = vadd.f32 0.0, %v1989
        %v1991 = vpop.f32.mrf.mxu0
        %v1992 = vpop.f32.mrf.mxu0
        %v1993 = vadd.f32 0.0, %v1992
        %v1994 = vpop.f32.mrf.mxu0
        %1995 = vmatprep.mubr.bf16.mxu0 0
        %1996 = vmatmul.mubr.bf16.gmra.mxu0 %v791
        %v1997 = vpop.f32.mrf.mxu0
        %v1998 = vadd.f32 0.0, %v1997
        %v1999 = vpop.f32.mrf.mxu0
        %v2000 = vpop.f32.mrf.mxu0
        %v2001 = vadd.f32 0.0, %v2000
        %v2002 = vpop.f32.mrf.mxu0
        %2003 = vmatprep.mubr.bf16.mxu0 0
        %2004 = vmatmul.mubr.bf16.gmra.mxu0 %v794
        %v2005 = vpop.f32.mrf.mxu0
        %v2006 = vadd.f32 0.0, %v2005
        %v2007 = vpop.f32.mrf.mxu0
        %v2008 = vpop.f32.mrf.mxu0
        %v2009 = vadd.f32 0.0, %v2008
        %v2010 = vpop.f32.mrf.mxu0
        %2011 = vmatprep.mubr.bf16.mxu0 0
        %2012 = vmatmul.mubr.bf16.gmra.mxu0 %v797
        %v2013 = vpop.f32.mrf.mxu0
        %v2014 = vadd.f32 0.0, %v2013
        %v2015 = vpop.f32.mrf.mxu0
        %v2016 = vpop.f32.mrf.mxu0
        %v2017 = vadd.f32 0.0, %v2016
        %v2018 = vpop.f32.mrf.mxu0
        %2019 = vmatprep.mubr.bf16.mxu0 0
        %2020 = vmatmul.mubr.bf16.gmra.mxu0 %v800
        %v2021 = vpop.f32.mrf.mxu0
        %v2022 = vadd.f32 0.0, %v2021
        %v2023 = vpop.f32.mrf.mxu0
        %v2024 = vpop.f32.mrf.mxu0
        %v2025 = vadd.f32 0.0, %v2024
        %v2026 = vpop.f32.mrf.mxu0
        %2027 = vmatprep.mubr.bf16.mxu0 0
        %2028 = vmatmul.mubr.bf16.gmra.mxu0 %v803
        %v2029 = vpop.f32.mrf.mxu0
        %v2030 = vadd.f32 0.0, %v2029
        %v2031 = vpop.f32.mrf.mxu0
        %v2032 = vpop.f32.mrf.mxu0
        %v2033 = vadd.f32 0.0, %v2032
        %v2034 = vpop.f32.mrf.mxu0
        %2035 = vmatprep.mubr.bf16.mxu0 0
        %2036 = vmatmul.mubr.bf16.gmra.mxu0 %v806
        %v2037 = vpop.f32.mrf.mxu0
        %v2038 = vadd.f32 0.0, %v2037
        %v2039 = vpop.f32.mrf.mxu0
        %v2040 = vpop.f32.mrf.mxu0
        %v2041 = vadd.f32 0.0, %v2040
        %v2042 = vpop.f32.mrf.mxu0
        %2043 = vmatprep.mubr.bf16.mxu0 0
        %2044 = vmatmul.mubr.bf16.gmra.mxu0 %v809
        %v2045 = vpop.f32.mrf.mxu0
        %v2046 = vadd.f32 0.0, %v2045
        %v2047 = vpop.f32.mrf.mxu0
        %v2048 = vpop.f32.mrf.mxu0
        %v2049 = vadd.f32 0.0, %v2048
        %v2050 = vpop.f32.mrf.mxu0
        %2051 = vmatprep.mubr.bf16.mxu0 0
        %2052 = vmatmul.mubr.bf16.gmra.mxu0 %v812
        %v2053 = vpop.f32.mrf.mxu0
        %v2054 = vadd.f32 0.0, %v2053
        %v2055 = vpop.f32.mrf.mxu0
        %v2056 = vpop.f32.mrf.mxu0
        %v2057 = vadd.f32 0.0, %v2056
        %v2058 = vpop.f32.mrf.mxu0
        %2059 = vmatprep.mubr.bf16.mxu0 0
        %2060 = vmatmul.mubr.bf16.gmra.mxu0 %v815
        %v2061 = vpop.f32.mrf.mxu0
        %v2062 = vadd.f32 0.0, %v2061
        %v2063 = vpop.f32.mrf.mxu0
        %v2064 = vpop.f32.mrf.mxu0
        %v2065 = vadd.f32 0.0, %v2064
        %v2066 = vpop.f32.mrf.mxu0
        %2067 = vmatprep.mubr.bf16.mxu0 0
        %2068 = vmatmul.mubr.bf16.gmra.mxu0 %v818
        %v2069 = vpop.f32.mrf.mxu0
        %v2070 = vadd.f32 0.0, %v2069
        %v2071 = vpop.f32.mrf.mxu0
        %v2072 = vpop.f32.mrf.mxu0
        %v2073 = vadd.f32 0.0, %v2072
        %v2074 = vpop.f32.mrf.mxu0
        %2075 = vmatprep.mubr.bf16.mxu0 0
        %2076 = vmatmul.mubr.bf16.gmra.mxu0 %v821
        %v2077 = vpop.f32.mrf.mxu0
        %v2078 = vadd.f32 0.0, %v2077
        %v2079 = vpop.f32.mrf.mxu0
        %v2080 = vpop.f32.mrf.mxu0
        %v2081 = vadd.f32 0.0, %v2080
        %v2082 = vpop.f32.mrf.mxu0
        %2083 = vmatprep.mubr.bf16.mxu0 0
        %2084 = vmatmul.mubr.bf16.gmra.mxu0 %v824
        %v2085 = vpop.f32.mrf.mxu0
        %v2086 = vadd.f32 0.0, %v2085
        %v2087 = vpop.f32.mrf.mxu0
        %v2088 = vpop.f32.mrf.mxu0
        %v2089 = vadd.f32 0.0, %v2088
        %v2090 = vpop.f32.mrf.mxu0
        %2091 = vmatprep.mubr.bf16.mxu0 0
        %2092 = vmatmul.mubr.bf16.gmra.mxu0 %v827
        %v2093 = vpop.f32.mrf.mxu0
        %v2094 = vadd.f32 0.0, %v2093
        %v2095 = vpop.f32.mrf.mxu0
        %v2096 = vpop.f32.mrf.mxu0
        %v2097 = vadd.f32 0.0, %v2096
        %v2098 = vpop.f32.mrf.mxu0
        %2099 = vmatprep.mubr.bf16.mxu0 0
        %2100 = vmatmul.mubr.bf16.gmra.mxu0 %v830
        %v2101 = vpop.f32.mrf.mxu0
        %v2102 = vadd.f32 0.0, %v2101
        %v2103 = vpop.f32.mrf.mxu0
        %v2104 = vpop.f32.mrf.mxu0
        %v2105 = vadd.f32 0.0, %v2104
        %v2106 = vpop.f32.mrf.mxu0
        %2107 = vmatprep.mubr.bf16.mxu0 0
        %2108 = vmatmul.mubr.bf16.gmra.mxu0 %v1950
        %v2109 = vpop.f32.mrf.mxu0
        %v2110 = vadd.f32 0.0, %v2109
        %v2111 = vpop.f32.mrf.mxu0
        %v2112 = vpop.f32.mrf.mxu0
        %v2113 = vadd.f32 0.0, %v2112
        %v2114 = vpop.f32.mrf.mxu0
        %2115 = vdwg.mxu0
        %v2116 = vadd.f32 %v1888, %v1990
        %v2117 = vadd.f32 %v1889, %v1993
        %v2118 = vadd.f32 %v1890, %v1998
        %v2119 = vadd.f32 %v1891, %v2001
        %v2120 = vadd.f32 %v1892, %v2006
        %v2121 = vadd.f32 %v1893, %v2009
        %v2122 = vadd.f32 %v1894, %v2014
        %v2123 = vadd.f32 %v1895, %v2017
        %v2124 = vadd.f32 %v1896, %v2022
        %v2125 = vadd.f32 %v1897, %v2025
        %v2126 = vadd.f32 %v1898, %v2030
        %v2127 = vadd.f32 %v1899, %v2033
        %v2128 = vadd.f32 %v1900, %v2038
        %v2129 = vadd.f32 %v1901, %v2041
        %v2130 = vadd.f32 %v1902, %v2046
        %v2131 = vadd.f32 %v1903, %v2049
        %v2132 = vadd.f32 %v1904, %v2054
        %v2133 = vadd.f32 %v1905, %v2057
        %v2134 = vadd.f32 %v1906, %v2062
        %v2135 = vadd.f32 %v1907, %v2065
        %v2136 = vadd.f32 %v1908, %v2070
        %v2137 = vadd.f32 %v1909, %v2073
        %v2138 = vadd.f32 %v1910, %v2078
        %v2139 = vadd.f32 %v1911, %v2081
        %v2140 = vadd.f32 %v1912, %v2086
        %v2141 = vadd.f32 %v1913, %v2089
        %v2142 = vadd.f32 %v1914, %v2094
        %v2143 = vadd.f32 %v1915, %v2097
        %v2144 = vadd.f32 %v1916, %v2102
        %v2145 = vadd.f32 %v1917, %v2105
        %v2146 = vadd.f32 %v1918, %v2110
        %v2147 = vadd.f32 %v1919, %v2113
        %v2149 = vrot.slane %v339, 5
        %v2150 = vrot.slane %v2149, 4
        %v2151 = vrot.slane %v340, 5
        %v2152 = vsel %vm1307, %v2150, %v2151
        %v2153 = vrot.slane %v2151, 4
        %v2154 = vrot.slane %v341, 5
        %v2155 = vsel %vm1307, %v2153, %v2154
        %s2156 = scalar_lea.vmem %s2, 10
        %v2157 = vld [vmem:[%s2156] sm:$0x3]
        %v2158 = vunpack.c.l.b16 %v2152
        %v2159 = vunpack.c.l.b16 %v2155
        %v2160 = vpack.c.b16 %v2159, %v2158
        %v2162 = vsel %vm783, %v2160, 0
        %v2165 = vsel %vm832, %v2157, 0
        %2167 = vmatprep.subr.bf16.mxu0 0
        %2168 = vmatpush1.bf16.msra.mxu0 0
        %2169 = vmatprep.subr.bf16.mxu0 0
        %2170 = vmatpush1.bf16.msra.mxu0 0
        %2171 = vmatprep.subr.bf16.mxu0 0
        %2172 = vmatpush1.bf16.msra.mxu0 0
        %2173 = vmatprep.subr.bf16.mxu0 0
        %2174 = vmatpush1.bf16.msra.mxu0 0
        %2175 = vmatprep.subr.bf16.mxu0 0
        %2176 = vmatpush1.bf16.msra.mxu0 0
        %2177 = vmatprep.subr.bf16.mxu0 0
        %2178 = vmatpush1.bf16.msra.mxu0 0
        %2179 = vmatprep.subr.bf16.mxu0 0
        %2180 = vmatpush1.bf16.msra.mxu0 0
        %2181 = vmatprep.subr.bf16.mxu0 0
        %2182 = vmatpush1.bf16.msra.mxu0 %v2165
        %2183 = vmatprep.subr.bf16.mxu0 0
        %2184 = vmatpush2.bf16.msra.mxu0 0
        %2185 = vmatprep.subr.bf16.mxu0 0
        %2186 = vmatpush2.bf16.msra.mxu0 0
        %2187 = vmatprep.subr.bf16.mxu0 0
        %2188 = vmatpush2.bf16.msra.mxu0 0
        %2189 = vmatprep.subr.bf16.mxu0 0
        %2190 = vmatpush2.bf16.msra.mxu0 0
        %2191 = vmatprep.subr.bf16.mxu0 0
        %2192 = vmatpush2.bf16.msra.mxu0 0
        %2193 = vmatprep.subr.bf16.mxu0 0
        %2194 = vmatpush2.bf16.msra.mxu0 0
        %2195 = vmatprep.subr.bf16.mxu0 0
        %2196 = vmatpush2.bf16.msra.mxu0 0
        %2197 = vmatprep.subr.bf16.mxu0 0
        %2198 = vmatpush2.bf16.msra.mxu0 0
        %2199 = vmatprep.mubr.bf16.mxu0 0
        %2200 = vmatmul.mubr.bf16.gmra.mxu0 %v1474
        %v2201 = vpop.f32.mrf.mxu0
        %v2202 = vadd.f32 0.0, %v2201
        %v2203 = vpop.f32.mrf.mxu0
        %v2204 = vpop.f32.mrf.mxu0
        %v2205 = vadd.f32 0.0, %v2204
        %v2206 = vpop.f32.mrf.mxu0
        %2207 = vmatprep.mubr.bf16.mxu0 0
        %2208 = vmatmul.mubr.bf16.gmra.mxu0 %v1477
        %v2209 = vpop.f32.mrf.mxu0
        %v2210 = vadd.f32 0.0, %v2209
        %v2211 = vpop.f32.mrf.mxu0
        %v2212 = vpop.f32.mrf.mxu0
        %v2213 = vadd.f32 0.0, %v2212
        %v2214 = vpop.f32.mrf.mxu0
        %2215 = vmatprep.mubr.bf16.mxu0 0
        %2216 = vmatmul.mubr.bf16.gmra.mxu0 %v1480
        %v2217 = vpop.f32.mrf.mxu0
        %v2218 = vadd.f32 0.0, %v2217
        %v2219 = vpop.f32.mrf.mxu0
        %v2220 = vpop.f32.mrf.mxu0
        %v2221 = vadd.f32 0.0, %v2220
        %v2222 = vpop.f32.mrf.mxu0
        %2223 = vmatprep.mubr.bf16.mxu0 0
        %2224 = vmatmul.mubr.bf16.gmra.mxu0 %v1483
        %v2225 = vpop.f32.mrf.mxu0
        %v2226 = vadd.f32 0.0, %v2225
        %v2227 = vpop.f32.mrf.mxu0
        %v2228 = vpop.f32.mrf.mxu0
        %v2229 = vadd.f32 0.0, %v2228
        %v2230 = vpop.f32.mrf.mxu0
        %2231 = vmatprep.mubr.bf16.mxu0 0
        %2232 = vmatmul.mubr.bf16.gmra.mxu0 %v1486
        %v2233 = vpop.f32.mrf.mxu0
        %v2234 = vadd.f32 0.0, %v2233
        %v2235 = vpop.f32.mrf.mxu0
        %v2236 = vpop.f32.mrf.mxu0
        %v2237 = vadd.f32 0.0, %v2236
        %v2238 = vpop.f32.mrf.mxu0
        %2239 = vmatprep.mubr.bf16.mxu0 0
        %2240 = vmatmul.mubr.bf16.gmra.mxu0 %v1489
        %v2241 = vpop.f32.mrf.mxu0
        %v2242 = vadd.f32 0.0, %v2241
        %v2243 = vpop.f32.mrf.mxu0
        %v2244 = vpop.f32.mrf.mxu0
        %v2245 = vadd.f32 0.0, %v2244
        %v2246 = vpop.f32.mrf.mxu0
        %2247 = vmatprep.mubr.bf16.mxu0 0
        %2248 = vmatmul.mubr.bf16.gmra.mxu0 %v1492
        %v2249 = vpop.f32.mrf.mxu0
        %v2250 = vadd.f32 0.0, %v2249
        %v2251 = vpop.f32.mrf.mxu0
        %v2252 = vpop.f32.mrf.mxu0
        %v2253 = vadd.f32 0.0, %v2252
        %v2254 = vpop.f32.mrf.mxu0
        %2255 = vmatprep.mubr.bf16.mxu0 0
        %2256 = vmatmul.mubr.bf16.gmra.mxu0 %v1495
        %v2257 = vpop.f32.mrf.mxu0
        %v2258 = vadd.f32 0.0, %v2257
        %v2259 = vpop.f32.mrf.mxu0
        %v2260 = vpop.f32.mrf.mxu0
        %v2261 = vadd.f32 0.0, %v2260
        %v2262 = vpop.f32.mrf.mxu0
        %2263 = vmatprep.mubr.bf16.mxu0 0
        %2264 = vmatmul.mubr.bf16.gmra.mxu0 %v1498
        %v2265 = vpop.f32.mrf.mxu0
        %v2266 = vadd.f32 0.0, %v2265
        %v2267 = vpop.f32.mrf.mxu0
        %v2268 = vpop.f32.mrf.mxu0
        %v2269 = vadd.f32 0.0, %v2268
        %v2270 = vpop.f32.mrf.mxu0
        %2271 = vmatprep.mubr.bf16.mxu0 0
        %2272 = vmatmul.mubr.bf16.gmra.mxu0 %v1501
        %v2273 = vpop.f32.mrf.mxu0
        %v2274 = vadd.f32 0.0, %v2273
        %v2275 = vpop.f32.mrf.mxu0
        %v2276 = vpop.f32.mrf.mxu0
        %v2277 = vadd.f32 0.0, %v2276
        %v2278 = vpop.f32.mrf.mxu0
        %2279 = vmatprep.mubr.bf16.mxu0 0
        %2280 = vmatmul.mubr.bf16.gmra.mxu0 %v1504
        %v2281 = vpop.f32.mrf.mxu0
        %v2282 = vadd.f32 0.0, %v2281
        %v2283 = vpop.f32.mrf.mxu0
        %v2284 = vpop.f32.mrf.mxu0
        %v2285 = vadd.f32 0.0, %v2284
        %v2286 = vpop.f32.mrf.mxu0
        %2287 = vmatprep.mubr.bf16.mxu0 0
        %2288 = vmatmul.mubr.bf16.gmra.mxu0 %v1507
        %v2289 = vpop.f32.mrf.mxu0
        %v2290 = vadd.f32 0.0, %v2289
        %v2291 = vpop.f32.mrf.mxu0
        %v2292 = vpop.f32.mrf.mxu0
        %v2293 = vadd.f32 0.0, %v2292
        %v2294 = vpop.f32.mrf.mxu0
        %2295 = vmatprep.mubr.bf16.mxu0 0
        %2296 = vmatmul.mubr.bf16.gmra.mxu0 %v1510
        %v2297 = vpop.f32.mrf.mxu0
        %v2298 = vadd.f32 0.0, %v2297
        %v2299 = vpop.f32.mrf.mxu0
        %v2300 = vpop.f32.mrf.mxu0
        %v2301 = vadd.f32 0.0, %v2300
        %v2302 = vpop.f32.mrf.mxu0
        %2303 = vmatprep.mubr.bf16.mxu0 0
        %2304 = vmatmul.mubr.bf16.gmra.mxu0 %v1513
        %v2305 = vpop.f32.mrf.mxu0
        %v2306 = vadd.f32 0.0, %v2305
        %v2307 = vpop.f32.mrf.mxu0
        %v2308 = vpop.f32.mrf.mxu0
        %v2309 = vadd.f32 0.0, %v2308
        %v2310 = vpop.f32.mrf.mxu0
        %2311 = vmatprep.mubr.bf16.mxu0 0
        %2312 = vmatmul.mubr.bf16.gmra.mxu0 %v1516
        %v2313 = vpop.f32.mrf.mxu0
        %v2314 = vadd.f32 0.0, %v2313
        %v2315 = vpop.f32.mrf.mxu0
        %v2316 = vpop.f32.mrf.mxu0
        %v2317 = vadd.f32 0.0, %v2316
        %v2318 = vpop.f32.mrf.mxu0
        %2319 = vmatprep.mubr.bf16.mxu0 0
        %2320 = vmatmul.mubr.bf16.gmra.mxu0 %v2162
        %v2321 = vpop.f32.mrf.mxu0
        %v2322 = vadd.f32 0.0, %v2321
        %v2323 = vpop.f32.mrf.mxu0
        %v2324 = vpop.f32.mrf.mxu0
        %v2325 = vadd.f32 0.0, %v2324
        %v2326 = vpop.f32.mrf.mxu0
        %2327 = vdwg.mxu0
        %v2328 = vadd.f32 %v2116, %v2202
        %v2329 = vadd.f32 %v2117, %v2205
        %v2330 = vadd.f32 %v2118, %v2210
        %v2331 = vadd.f32 %v2119, %v2213
        %v2332 = vadd.f32 %v2120, %v2218
        %v2333 = vadd.f32 %v2121, %v2221
        %v2334 = vadd.f32 %v2122, %v2226
        %v2335 = vadd.f32 %v2123, %v2229
        %v2336 = vadd.f32 %v2124, %v2234
        %v2337 = vadd.f32 %v2125, %v2237
        %v2338 = vadd.f32 %v2126, %v2242
        %v2339 = vadd.f32 %v2127, %v2245
        %v2340 = vadd.f32 %v2128, %v2250
        %v2341 = vadd.f32 %v2129, %v2253
        %v2342 = vadd.f32 %v2130, %v2258
        %v2343 = vadd.f32 %v2131, %v2261
        %v2344 = vadd.f32 %v2132, %v2266
        %v2345 = vadd.f32 %v2133, %v2269
        %v2346 = vadd.f32 %v2134, %v2274
        %v2347 = vadd.f32 %v2135, %v2277
        %v2348 = vadd.f32 %v2136, %v2282
        %v2349 = vadd.f32 %v2137, %v2285
        %v2350 = vadd.f32 %v2138, %v2290
        %v2351 = vadd.f32 %v2139, %v2293
        %v2352 = vadd.f32 %v2140, %v2298
        %v2353 = vadd.f32 %v2141, %v2301
        %v2354 = vadd.f32 %v2142, %v2306
        %v2355 = vadd.f32 %v2143, %v2309
        %v2356 = vadd.f32 %v2144, %v2314
        %v2357 = vadd.f32 %v2145, %v2317
        %v2358 = vadd.f32 %v2146, %v2322
        %v2359 = vadd.f32 %v2147, %v2325
        %s2360 = scalar_lea.vmem %s2, 12
        %v2361 = vld [vmem:[%s2360] sm:$0x3]
        %v2364 = vunpack.c.l.b16 %v342
        %v2365 = vunpack.c.l.b16 %v343
        %v2366 = vpack.c.b16 %v2365, %v2364
        %v2368 = vsel %vm783, %v2366, 0
        %v2371 = vsel %vm832, %v2361, 0
        %2373 = vmatprep.subr.bf16.mxu0 0
        %2374 = vmatpush1.bf16.msra.mxu0 0
        %2375 = vmatprep.subr.bf16.mxu0 0
        %2376 = vmatpush1.bf16.msra.mxu0 0
        %2377 = vmatprep.subr.bf16.mxu0 0
        %2378 = vmatpush1.bf16.msra.mxu0 0
        %2379 = vmatprep.subr.bf16.mxu0 0
        %2380 = vmatpush1.bf16.msra.mxu0 0
        %2381 = vmatprep.subr.bf16.mxu0 0
        %2382 = vmatpush1.bf16.msra.mxu0 0
        %2383 = vmatprep.subr.bf16.mxu0 0
        %2384 = vmatpush1.bf16.msra.mxu0 0
        %2385 = vmatprep.subr.bf16.mxu0 0
        %2386 = vmatpush1.bf16.msra.mxu0 0
        %2387 = vmatprep.subr.bf16.mxu0 0
        %2388 = vmatpush1.bf16.msra.mxu0 %v2371
        %2389 = vmatprep.subr.bf16.mxu0 0
        %2390 = vmatpush2.bf16.msra.mxu0 0
        %2391 = vmatprep.subr.bf16.mxu0 0
        %2392 = vmatpush2.bf16.msra.mxu0 0
        %2393 = vmatprep.subr.bf16.mxu0 0
        %2394 = vmatpush2.bf16.msra.mxu0 0
        %2395 = vmatprep.subr.bf16.mxu0 0
        %2396 = vmatpush2.bf16.msra.mxu0 0
        %2397 = vmatprep.subr.bf16.mxu0 0
        %2398 = vmatpush2.bf16.msra.mxu0 0
        %2399 = vmatprep.subr.bf16.mxu0 0
        %2400 = vmatpush2.bf16.msra.mxu0 0
        %2401 = vmatprep.subr.bf16.mxu0 0
        %2402 = vmatpush2.bf16.msra.mxu0 0
        %2403 = vmatprep.subr.bf16.mxu0 0
        %2404 = vmatpush2.bf16.msra.mxu0 0
        %2405 = vmatprep.mubr.bf16.mxu0 0
        %2406 = vmatmul.mubr.bf16.gmra.mxu0 %v1084
        %v2407 = vpop.f32.mrf.mxu0
        %v2408 = vadd.f32 0.0, %v2407
        %v2409 = vpop.f32.mrf.mxu0
        %v2410 = vpop.f32.mrf.mxu0
        %v2411 = vadd.f32 0.0, %v2410
        %v2412 = vpop.f32.mrf.mxu0
        %2413 = vmatprep.mubr.bf16.mxu0 0
        %2414 = vmatmul.mubr.bf16.gmra.mxu0 %v1087
        %v2415 = vpop.f32.mrf.mxu0
        %v2416 = vadd.f32 0.0, %v2415
        %v2417 = vpop.f32.mrf.mxu0
        %v2418 = vpop.f32.mrf.mxu0
        %v2419 = vadd.f32 0.0, %v2418
        %v2420 = vpop.f32.mrf.mxu0
        %2421 = vmatprep.mubr.bf16.mxu0 0
        %2422 = vmatmul.mubr.bf16.gmra.mxu0 %v1090
        %v2423 = vpop.f32.mrf.mxu0
        %v2424 = vadd.f32 0.0, %v2423
        %v2425 = vpop.f32.mrf.mxu0
        %v2426 = vpop.f32.mrf.mxu0
        %v2427 = vadd.f32 0.0, %v2426
        %v2428 = vpop.f32.mrf.mxu0
        %2429 = vmatprep.mubr.bf16.mxu0 0
        %2430 = vmatmul.mubr.bf16.gmra.mxu0 %v1093
        %v2431 = vpop.f32.mrf.mxu0
        %v2432 = vadd.f32 0.0, %v2431
        %v2433 = vpop.f32.mrf.mxu0
        %v2434 = vpop.f32.mrf.mxu0
        %v2435 = vadd.f32 0.0, %v2434
        %v2436 = vpop.f32.mrf.mxu0
        %2437 = vmatprep.mubr.bf16.mxu0 0
        %2438 = vmatmul.mubr.bf16.gmra.mxu0 %v1096
        %v2439 = vpop.f32.mrf.mxu0
        %v2440 = vadd.f32 0.0, %v2439
        %v2441 = vpop.f32.mrf.mxu0
        %v2442 = vpop.f32.mrf.mxu0
        %v2443 = vadd.f32 0.0, %v2442
        %v2444 = vpop.f32.mrf.mxu0
        %2445 = vmatprep.mubr.bf16.mxu0 0
        %2446 = vmatmul.mubr.bf16.gmra.mxu0 %v1099
        %v2447 = vpop.f32.mrf.mxu0
        %v2448 = vadd.f32 0.0, %v2447
        %v2449 = vpop.f32.mrf.mxu0
        %v2450 = vpop.f32.mrf.mxu0
        %v2451 = vadd.f32 0.0, %v2450
        %v2452 = vpop.f32.mrf.mxu0
        %2453 = vmatprep.mubr.bf16.mxu0 0
        %2454 = vmatmul.mubr.bf16.gmra.mxu0 %v1102
        %v2455 = vpop.f32.mrf.mxu0
        %v2456 = vadd.f32 0.0, %v2455
        %v2457 = vpop.f32.mrf.mxu0
        %v2458 = vpop.f32.mrf.mxu0
        %v2459 = vadd.f32 0.0, %v2458
        %v2460 = vpop.f32.mrf.mxu0
        %2461 = vmatprep.mubr.bf16.mxu0 0
        %2462 = vmatmul.mubr.bf16.gmra.mxu0 %v1105
        %v2463 = vpop.f32.mrf.mxu0
        %v2464 = vadd.f32 0.0, %v2463
        %v2465 = vpop.f32.mrf.mxu0
        %v2466 = vpop.f32.mrf.mxu0
        %v2467 = vadd.f32 0.0, %v2466
        %v2468 = vpop.f32.mrf.mxu0
        %2469 = vmatprep.mubr.bf16.mxu0 0
        %2470 = vmatmul.mubr.bf16.gmra.mxu0 %v1108
        %v2471 = vpop.f32.mrf.mxu0
        %v2472 = vadd.f32 0.0, %v2471
        %v2473 = vpop.f32.mrf.mxu0
        %v2474 = vpop.f32.mrf.mxu0
        %v2475 = vadd.f32 0.0, %v2474
        %v2476 = vpop.f32.mrf.mxu0
        %2477 = vmatprep.mubr.bf16.mxu0 0
        %2478 = vmatmul.mubr.bf16.gmra.mxu0 %v1111
        %v2479 = vpop.f32.mrf.mxu0
        %v2480 = vadd.f32 0.0, %v2479
        %v2481 = vpop.f32.mrf.mxu0
        %v2482 = vpop.f32.mrf.mxu0
        %v2483 = vadd.f32 0.0, %v2482
        %v2484 = vpop.f32.mrf.mxu0
        %2485 = vmatprep.mubr.bf16.mxu0 0
        %2486 = vmatmul.mubr.bf16.gmra.mxu0 %v1114
        %v2487 = vpop.f32.mrf.mxu0
        %v2488 = vadd.f32 0.0, %v2487
        %v2489 = vpop.f32.mrf.mxu0
        %v2490 = vpop.f32.mrf.mxu0
        %v2491 = vadd.f32 0.0, %v2490
        %v2492 = vpop.f32.mrf.mxu0
        %2493 = vmatprep.mubr.bf16.mxu0 0
        %2494 = vmatmul.mubr.bf16.gmra.mxu0 %v1117
        %v2495 = vpop.f32.mrf.mxu0
        %v2496 = vadd.f32 0.0, %v2495
        %v2497 = vpop.f32.mrf.mxu0
        %v2498 = vpop.f32.mrf.mxu0
        %v2499 = vadd.f32 0.0, %v2498
        %v2500 = vpop.f32.mrf.mxu0
        %2501 = vmatprep.mubr.bf16.mxu0 0
        %2502 = vmatmul.mubr.bf16.gmra.mxu0 %v1120
        %v2503 = vpop.f32.mrf.mxu0
        %v2504 = vadd.f32 0.0, %v2503
        %v2505 = vpop.f32.mrf.mxu0
        %v2506 = vpop.f32.mrf.mxu0
        %v2507 = vadd.f32 0.0, %v2506
        %v2508 = vpop.f32.mrf.mxu0
        %2509 = vmatprep.mubr.bf16.mxu0 0
        %2510 = vmatmul.mubr.bf16.gmra.mxu0 %v1123
        %v2511 = vpop.f32.mrf.mxu0
        %v2512 = vadd.f32 0.0, %v2511
        %v2513 = vpop.f32.mrf.mxu0
        %v2514 = vpop.f32.mrf.mxu0
        %v2515 = vadd.f32 0.0, %v2514
        %v2516 = vpop.f32.mrf.mxu0
        %2517 = vmatprep.mubr.bf16.mxu0 0
        %2518 = vmatmul.mubr.bf16.gmra.mxu0 %v1722
        %v2519 = vpop.f32.mrf.mxu0
        %v2520 = vadd.f32 0.0, %v2519
        %v2521 = vpop.f32.mrf.mxu0
        %v2522 = vpop.f32.mrf.mxu0
        %v2523 = vadd.f32 0.0, %v2522
        %v2524 = vpop.f32.mrf.mxu0
        %2525 = vmatprep.mubr.bf16.mxu0 0
        %2526 = vmatmul.mubr.bf16.gmra.mxu0 %v2368
        %v2527 = vpop.f32.mrf.mxu0
        %v2528 = vadd.f32 0.0, %v2527
        %v2529 = vpop.f32.mrf.mxu0
        %v2530 = vpop.f32.mrf.mxu0
        %v2531 = vadd.f32 0.0, %v2530
        %v2532 = vpop.f32.mrf.mxu0
        %2533 = vdwg.mxu0
        %v2534 = vadd.f32 %v2328, %v2408
        %v2535 = vadd.f32 %v2329, %v2411
        %v2536 = vadd.f32 %v2330, %v2416
        %v2537 = vadd.f32 %v2331, %v2419
        %v2538 = vadd.f32 %v2332, %v2424
        %v2539 = vadd.f32 %v2333, %v2427
        %v2540 = vadd.f32 %v2334, %v2432
        %v2541 = vadd.f32 %v2335, %v2435
        %v2542 = vadd.f32 %v2336, %v2440
        %v2543 = vadd.f32 %v2337, %v2443
        %v2544 = vadd.f32 %v2338, %v2448
        %v2545 = vadd.f32 %v2339, %v2451
        %v2546 = vadd.f32 %v2340, %v2456
        %v2547 = vadd.f32 %v2341, %v2459
        %v2548 = vadd.f32 %v2342, %v2464
        %v2549 = vadd.f32 %v2343, %v2467
        %v2550 = vadd.f32 %v2344, %v2472
        %v2551 = vadd.f32 %v2345, %v2475
        %v2552 = vadd.f32 %v2346, %v2480
        %v2553 = vadd.f32 %v2347, %v2483
        %v2554 = vadd.f32 %v2348, %v2488
        %v2555 = vadd.f32 %v2349, %v2491
        %v2556 = vadd.f32 %v2350, %v2496
        %v2557 = vadd.f32 %v2351, %v2499
        %v2558 = vadd.f32 %v2352, %v2504
        %v2559 = vadd.f32 %v2353, %v2507
        %v2560 = vadd.f32 %v2354, %v2512
        %v2561 = vadd.f32 %v2355, %v2515
        %v2562 = vadd.f32 %v2356, %v2520
        %v2563 = vadd.f32 %v2357, %v2523
        %v2564 = vadd.f32 %v2358, %v2528
        %v2565 = vadd.f32 %v2359, %v2531
        %v2567 = vshrl.u32 %v342, 16
        %v2569 = vrot.slane %v2567, 4
        %v2570 = vshll.u32 %v342, 16
        %v2572 = vrot.slane %v2570, 5
        %v2573 = vor.u32 %v2569, %v2572
        %v2574 = vrot.slane %v2573, 4
        %v2576 = vshll.u32 %v343, 16
        %v2578 = vrot.slane %v2576, 5
        %v2579 = vsel %vm348, %v2574, %v2578
        %v2580 = vshrl.u32 %v343, 16
        %v2582 = vrot.slane %v2580, 4
        %v2583 = vor.u32 %v2582, %v2578
        %v2584 = vrot.slane %v2583, 4
        %v2586 = vshll.u32 %v344, 16
        %v2588 = vrot.slane %v2586, 5
        %v2589 = vsel %vm348, %v2584, %v2588
        %s2590 = scalar_lea.vmem %s2, 14
        %v2591 = vld [vmem:[%s2590] sm:$0x3]
        %v2592 = vunpack.c.l.b16 %v2579
        %v2593 = vunpack.c.l.b16 %v2589
        %v2594 = vpack.c.b16 %v2593, %v2592
        %v2596 = vsel %vm783, %v2594, 0
        %v2599 = vsel %vm832, %v2591, 0
        %2601 = vmatprep.subr.bf16.mxu0 0
        %2602 = vmatpush1.bf16.msra.mxu0 0
        %2603 = vmatprep.subr.bf16.mxu0 0
        %2604 = vmatpush1.bf16.msra.mxu0 0
        %2605 = vmatprep.subr.bf16.mxu0 0
        %2606 = vmatpush1.bf16.msra.mxu0 0
        %2607 = vmatprep.subr.bf16.mxu0 0
        %2608 = vmatpush1.bf16.msra.mxu0 0
        %2609 = vmatprep.subr.bf16.mxu0 0
        %2610 = vmatpush1.bf16.msra.mxu0 0
        %2611 = vmatprep.subr.bf16.mxu0 0
        %2612 = vmatpush1.bf16.msra.mxu0 0
        %2613 = vmatprep.subr.bf16.mxu0 0
        %2614 = vmatpush1.bf16.msra.mxu0 0
        %2615 = vmatprep.subr.bf16.mxu0 0
        %2616 = vmatpush1.bf16.msra.mxu0 %v2599
        %2617 = vmatprep.subr.bf16.mxu0 0
        %2618 = vmatpush2.bf16.msra.mxu0 0
        %2619 = vmatprep.subr.bf16.mxu0 0
        %2620 = vmatpush2.bf16.msra.mxu0 0
        %2621 = vmatprep.subr.bf16.mxu0 0
        %2622 = vmatpush2.bf16.msra.mxu0 0
        %2623 = vmatprep.subr.bf16.mxu0 0
        %2624 = vmatpush2.bf16.msra.mxu0 0
        %2625 = vmatprep.subr.bf16.mxu0 0
        %2626 = vmatpush2.bf16.msra.mxu0 0
        %2627 = vmatprep.subr.bf16.mxu0 0
        %2628 = vmatpush2.bf16.msra.mxu0 0
        %2629 = vmatprep.subr.bf16.mxu0 0
        %2630 = vmatpush2.bf16.msra.mxu0 0
        %2631 = vmatprep.subr.bf16.mxu0 0
        %2632 = vmatpush2.bf16.msra.mxu0 0
        %2633 = vmatprep.mubr.bf16.mxu0 0
        %2634 = vmatmul.mubr.bf16.gmra.mxu0 %v791
        %v2635 = vpop.f32.mrf.mxu0
        %v2636 = vadd.f32 0.0, %v2635
        %v2637 = vpop.f32.mrf.mxu0
        %v2638 = vpop.f32.mrf.mxu0
        %v2639 = vadd.f32 0.0, %v2638
        %v2640 = vpop.f32.mrf.mxu0
        %2641 = vmatprep.mubr.bf16.mxu0 0
        %2642 = vmatmul.mubr.bf16.gmra.mxu0 %v794
        %v2643 = vpop.f32.mrf.mxu0
        %v2644 = vadd.f32 0.0, %v2643
        %v2645 = vpop.f32.mrf.mxu0
        %v2646 = vpop.f32.mrf.mxu0
        %v2647 = vadd.f32 0.0, %v2646
        %v2648 = vpop.f32.mrf.mxu0
        %2649 = vmatprep.mubr.bf16.mxu0 0
        %2650 = vmatmul.mubr.bf16.gmra.mxu0 %v797
        %v2651 = vpop.f32.mrf.mxu0
        %v2652 = vadd.f32 0.0, %v2651
        %v2653 = vpop.f32.mrf.mxu0
        %v2654 = vpop.f32.mrf.mxu0
        %v2655 = vadd.f32 0.0, %v2654
        %v2656 = vpop.f32.mrf.mxu0
        %2657 = vmatprep.mubr.bf16.mxu0 0
        %2658 = vmatmul.mubr.bf16.gmra.mxu0 %v800
        %v2659 = vpop.f32.mrf.mxu0
        %v2660 = vadd.f32 0.0, %v2659
        %v2661 = vpop.f32.mrf.mxu0
        %v2662 = vpop.f32.mrf.mxu0
        %v2663 = vadd.f32 0.0, %v2662
        %v2664 = vpop.f32.mrf.mxu0
        %2665 = vmatprep.mubr.bf16.mxu0 0
        %2666 = vmatmul.mubr.bf16.gmra.mxu0 %v803
        %v2667 = vpop.f32.mrf.mxu0
        %v2668 = vadd.f32 0.0, %v2667
        %v2669 = vpop.f32.mrf.mxu0
        %v2670 = vpop.f32.mrf.mxu0
        %v2671 = vadd.f32 0.0, %v2670
        %v2672 = vpop.f32.mrf.mxu0
        %2673 = vmatprep.mubr.bf16.mxu0 0
        %2674 = vmatmul.mubr.bf16.gmra.mxu0 %v806
        %v2675 = vpop.f32.mrf.mxu0
        %v2676 = vadd.f32 0.0, %v2675
        %v2677 = vpop.f32.mrf.mxu0
        %v2678 = vpop.f32.mrf.mxu0
        %v2679 = vadd.f32 0.0, %v2678
        %v2680 = vpop.f32.mrf.mxu0
        %2681 = vmatprep.mubr.bf16.mxu0 0
        %2682 = vmatmul.mubr.bf16.gmra.mxu0 %v809
        %v2683 = vpop.f32.mrf.mxu0
        %v2684 = vadd.f32 0.0, %v2683
        %v2685 = vpop.f32.mrf.mxu0
        %v2686 = vpop.f32.mrf.mxu0
        %v2687 = vadd.f32 0.0, %v2686
        %v2688 = vpop.f32.mrf.mxu0
        %2689 = vmatprep.mubr.bf16.mxu0 0
        %2690 = vmatmul.mubr.bf16.gmra.mxu0 %v812
        %v2691 = vpop.f32.mrf.mxu0
        %v2692 = vadd.f32 0.0, %v2691
        %v2693 = vpop.f32.mrf.mxu0
        %v2694 = vpop.f32.mrf.mxu0
        %v2695 = vadd.f32 0.0, %v2694
        %v2696 = vpop.f32.mrf.mxu0
        %2697 = vmatprep.mubr.bf16.mxu0 0
        %2698 = vmatmul.mubr.bf16.gmra.mxu0 %v815
        %v2699 = vpop.f32.mrf.mxu0
        %v2700 = vadd.f32 0.0, %v2699
        %v2701 = vpop.f32.mrf.mxu0
        %v2702 = vpop.f32.mrf.mxu0
        %v2703 = vadd.f32 0.0, %v2702
        %v2704 = vpop.f32.mrf.mxu0
        %2705 = vmatprep.mubr.bf16.mxu0 0
        %2706 = vmatmul.mubr.bf16.gmra.mxu0 %v818
        %v2707 = vpop.f32.mrf.mxu0
        %v2708 = vadd.f32 0.0, %v2707
        %v2709 = vpop.f32.mrf.mxu0
        %v2710 = vpop.f32.mrf.mxu0
        %v2711 = vadd.f32 0.0, %v2710
        %v2712 = vpop.f32.mrf.mxu0
        %2713 = vmatprep.mubr.bf16.mxu0 0
        %2714 = vmatmul.mubr.bf16.gmra.mxu0 %v821
        %v2715 = vpop.f32.mrf.mxu0
        %v2716 = vadd.f32 0.0, %v2715
        %v2717 = vpop.f32.mrf.mxu0
        %v2718 = vpop.f32.mrf.mxu0
        %v2719 = vadd.f32 0.0, %v2718
        %v2720 = vpop.f32.mrf.mxu0
        %2721 = vmatprep.mubr.bf16.mxu0 0
        %2722 = vmatmul.mubr.bf16.gmra.mxu0 %v824
        %v2723 = vpop.f32.mrf.mxu0
        %v2724 = vadd.f32 0.0, %v2723
        %v2725 = vpop.f32.mrf.mxu0
        %v2726 = vpop.f32.mrf.mxu0
        %v2727 = vadd.f32 0.0, %v2726
        %v2728 = vpop.f32.mrf.mxu0
        %2729 = vmatprep.mubr.bf16.mxu0 0
        %2730 = vmatmul.mubr.bf16.gmra.mxu0 %v827
        %v2731 = vpop.f32.mrf.mxu0
        %v2732 = vadd.f32 0.0, %v2731
        %v2733 = vpop.f32.mrf.mxu0
        %v2734 = vpop.f32.mrf.mxu0
        %v2735 = vadd.f32 0.0, %v2734
        %v2736 = vpop.f32.mrf.mxu0
        %2737 = vmatprep.mubr.bf16.mxu0 0
        %2738 = vmatmul.mubr.bf16.gmra.mxu0 %v830
        %v2739 = vpop.f32.mrf.mxu0
        %v2740 = vadd.f32 0.0, %v2739
        %v2741 = vpop.f32.mrf.mxu0
        %v2742 = vpop.f32.mrf.mxu0
        %v2743 = vadd.f32 0.0, %v2742
        %v2744 = vpop.f32.mrf.mxu0
        %2745 = vmatprep.mubr.bf16.mxu0 0
        %2746 = vmatmul.mubr.bf16.gmra.mxu0 %v1950
        %v2747 = vpop.f32.mrf.mxu0
        %v2748 = vadd.f32 0.0, %v2747
        %v2749 = vpop.f32.mrf.mxu0
        %v2750 = vpop.f32.mrf.mxu0
        %v2751 = vadd.f32 0.0, %v2750
        %v2752 = vpop.f32.mrf.mxu0
        %2753 = vmatprep.mubr.bf16.mxu0 0
        %2754 = vmatmul.mubr.bf16.gmra.mxu0 %v2596
        %v2755 = vpop.f32.mrf.mxu0
        %v2756 = vadd.f32 0.0, %v2755
        %v2757 = vpop.f32.mrf.mxu0
        %v2758 = vpop.f32.mrf.mxu0
        %v2759 = vadd.f32 0.0, %v2758
        %v2760 = vpop.f32.mrf.mxu0
        %2761 = vdwg.mxu0
        %v2762 = vadd.f32 %v2534, %v2636
        %v2763 = vadd.f32 %v2535, %v2639
        %v2764 = vadd.f32 %v2536, %v2644
        %v2765 = vadd.f32 %v2537, %v2647
        %v2766 = vadd.f32 %v2538, %v2652
        %v2767 = vadd.f32 %v2539, %v2655
        %v2768 = vadd.f32 %v2540, %v2660
        %v2769 = vadd.f32 %v2541, %v2663
        %v2770 = vadd.f32 %v2542, %v2668
        %v2771 = vadd.f32 %v2543, %v2671
        %v2772 = vadd.f32 %v2544, %v2676
        %v2773 = vadd.f32 %v2545, %v2679
        %v2774 = vadd.f32 %v2546, %v2684
        %v2775 = vadd.f32 %v2547, %v2687
        %v2776 = vadd.f32 %v2548, %v2692
        %v2777 = vadd.f32 %v2549, %v2695
        %v2778 = vadd.f32 %v2550, %v2700
        %v2779 = vadd.f32 %v2551, %v2703
        %v2780 = vadd.f32 %v2552, %v2708
        %v2781 = vadd.f32 %v2553, %v2711
        %v2782 = vadd.f32 %v2554, %v2716
        %v2783 = vadd.f32 %v2555, %v2719
        %v2784 = vadd.f32 %v2556, %v2724
        %v2785 = vadd.f32 %v2557, %v2727
        %v2786 = vadd.f32 %v2558, %v2732
        %v2787 = vadd.f32 %v2559, %v2735
        %v2788 = vadd.f32 %v2560, %v2740
        %v2789 = vadd.f32 %v2561, %v2743
        %v2790 = vadd.f32 %v2562, %v2748
        %v2791 = vadd.f32 %v2563, %v2751
        %v2792 = vadd.f32 %v2564, %v2756
        %v2793 = vadd.f32 %v2565, %v2759
        %v2795 = vrot.slane %v342, 5
        %v2796 = vrot.slane %v2795, 4
        %v2797 = vrot.slane %v343, 5
        %v2798 = vsel %vm1307, %v2796, %v2797
        %v2799 = vrot.slane %v2797, 4
        %v2800 = vrot.slane %v344, 5
        %v2801 = vsel %vm1307, %v2799, %v2800
        %s2802 = scalar_lea.vmem %s2, 16
        %v2803 = vld [vmem:[%s2802] sm:$0x3]
        %v2804 = vunpack.c.l.b16 %v2798
        %v2805 = vunpack.c.l.b16 %v2801
        %v2806 = vpack.c.b16 %v2805, %v2804
        %v2808 = vsel %vm783, %v2806, 0
        %v2811 = vsel %vm832, %v2803, 0
        %2813 = vmatprep.subr.bf16.mxu0 0
        %2814 = vmatpush1.bf16.msra.mxu0 0
        %2815 = vmatprep.subr.bf16.mxu0 0
        %2816 = vmatpush1.bf16.msra.mxu0 0
        %2817 = vmatprep.subr.bf16.mxu0 0
        %2818 = vmatpush1.bf16.msra.mxu0 0
        %2819 = vmatprep.subr.bf16.mxu0 0
        %2820 = vmatpush1.bf16.msra.mxu0 0
        %2821 = vmatprep.subr.bf16.mxu0 0
        %2822 = vmatpush1.bf16.msra.mxu0 0
        %2823 = vmatprep.subr.bf16.mxu0 0
        %2824 = vmatpush1.bf16.msra.mxu0 0
        %2825 = vmatprep.subr.bf16.mxu0 0
        %2826 = vmatpush1.bf16.msra.mxu0 0
        %2827 = vmatprep.subr.bf16.mxu0 0
        %2828 = vmatpush1.bf16.msra.mxu0 %v2811
        %2829 = vmatprep.subr.bf16.mxu0 0
        %2830 = vmatpush2.bf16.msra.mxu0 0
        %2831 = vmatprep.subr.bf16.mxu0 0
        %2832 = vmatpush2.bf16.msra.mxu0 0
        %2833 = vmatprep.subr.bf16.mxu0 0
        %2834 = vmatpush2.bf16.msra.mxu0 0
        %2835 = vmatprep.subr.bf16.mxu0 0
        %2836 = vmatpush2.bf16.msra.mxu0 0
        %2837 = vmatprep.subr.bf16.mxu0 0
        %2838 = vmatpush2.bf16.msra.mxu0 0
        %2839 = vmatprep.subr.bf16.mxu0 0
        %2840 = vmatpush2.bf16.msra.mxu0 0
        %2841 = vmatprep.subr.bf16.mxu0 0
        %2842 = vmatpush2.bf16.msra.mxu0 0
        %2843 = vmatprep.subr.bf16.mxu0 0
        %2844 = vmatpush2.bf16.msra.mxu0 0
        %2845 = vmatprep.mubr.bf16.mxu0 0
        %2846 = vmatmul.mubr.bf16.gmra.mxu0 %v1477
        %v2847 = vpop.f32.mrf.mxu0
        %v2848 = vadd.f32 0.0, %v2847
        %v2849 = vpop.f32.mrf.mxu0
        %v2850 = vpop.f32.mrf.mxu0
        %v2851 = vadd.f32 0.0, %v2850
        %v2852 = vpop.f32.mrf.mxu0
        %2853 = vmatprep.mubr.bf16.mxu0 0
        %2854 = vmatmul.mubr.bf16.gmra.mxu0 %v1480
        %v2855 = vpop.f32.mrf.mxu0
        %v2856 = vadd.f32 0.0, %v2855
        %v2857 = vpop.f32.mrf.mxu0
        %v2858 = vpop.f32.mrf.mxu0
        %v2859 = vadd.f32 0.0, %v2858
        %v2860 = vpop.f32.mrf.mxu0
        %2861 = vmatprep.mubr.bf16.mxu0 0
        %2862 = vmatmul.mubr.bf16.gmra.mxu0 %v1483
        %v2863 = vpop.f32.mrf.mxu0
        %v2864 = vadd.f32 0.0, %v2863
        %v2865 = vpop.f32.mrf.mxu0
        %v2866 = vpop.f32.mrf.mxu0
        %v2867 = vadd.f32 0.0, %v2866
        %v2868 = vpop.f32.mrf.mxu0
        %2869 = vmatprep.mubr.bf16.mxu0 0
        %2870 = vmatmul.mubr.bf16.gmra.mxu0 %v1486
        %v2871 = vpop.f32.mrf.mxu0
        %v2872 = vadd.f32 0.0, %v2871
        %v2873 = vpop.f32.mrf.mxu0
        %v2874 = vpop.f32.mrf.mxu0
        %v2875 = vadd.f32 0.0, %v2874
        %v2876 = vpop.f32.mrf.mxu0
        %2877 = vmatprep.mubr.bf16.mxu0 0
        %2878 = vmatmul.mubr.bf16.gmra.mxu0 %v1489
        %v2879 = vpop.f32.mrf.mxu0
        %v2880 = vadd.f32 0.0, %v2879
        %v2881 = vpop.f32.mrf.mxu0
        %v2882 = vpop.f32.mrf.mxu0
        %v2883 = vadd.f32 0.0, %v2882
        %v2884 = vpop.f32.mrf.mxu0
        %2885 = vmatprep.mubr.bf16.mxu0 0
        %2886 = vmatmul.mubr.bf16.gmra.mxu0 %v1492
        %v2887 = vpop.f32.mrf.mxu0
        %v2888 = vadd.f32 0.0, %v2887
        %v2889 = vpop.f32.mrf.mxu0
        %v2890 = vpop.f32.mrf.mxu0
        %v2891 = vadd.f32 0.0, %v2890
        %v2892 = vpop.f32.mrf.mxu0
        %2893 = vmatprep.mubr.bf16.mxu0 0
        %2894 = vmatmul.mubr.bf16.gmra.mxu0 %v1495
        %v2895 = vpop.f32.mrf.mxu0
        %v2896 = vadd.f32 0.0, %v2895
        %v2897 = vpop.f32.mrf.mxu0
        %v2898 = vpop.f32.mrf.mxu0
        %v2899 = vadd.f32 0.0, %v2898
        %v2900 = vpop.f32.mrf.mxu0
        %2901 = vmatprep.mubr.bf16.mxu0 0
        %2902 = vmatmul.mubr.bf16.gmra.mxu0 %v1498
        %v2903 = vpop.f32.mrf.mxu0
        %v2904 = vadd.f32 0.0, %v2903
        %v2905 = vpop.f32.mrf.mxu0
        %v2906 = vpop.f32.mrf.mxu0
        %v2907 = vadd.f32 0.0, %v2906
        %v2908 = vpop.f32.mrf.mxu0
        %2909 = vmatprep.mubr.bf16.mxu0 0
        %2910 = vmatmul.mubr.bf16.gmra.mxu0 %v1501
        %v2911 = vpop.f32.mrf.mxu0
        %v2912 = vadd.f32 0.0, %v2911
        %v2913 = vpop.f32.mrf.mxu0
        %v2914 = vpop.f32.mrf.mxu0
        %v2915 = vadd.f32 0.0, %v2914
        %v2916 = vpop.f32.mrf.mxu0
        %2917 = vmatprep.mubr.bf16.mxu0 0
        %2918 = vmatmul.mubr.bf16.gmra.mxu0 %v1504
        %v2919 = vpop.f32.mrf.mxu0
        %v2920 = vadd.f32 0.0, %v2919
        %v2921 = vpop.f32.mrf.mxu0
        %v2922 = vpop.f32.mrf.mxu0
        %v2923 = vadd.f32 0.0, %v2922
        %v2924 = vpop.f32.mrf.mxu0
        %2925 = vmatprep.mubr.bf16.mxu0 0
        %2926 = vmatmul.mubr.bf16.gmra.mxu0 %v1507
        %v2927 = vpop.f32.mrf.mxu0
        %v2928 = vadd.f32 0.0, %v2927
        %v2929 = vpop.f32.mrf.mxu0
        %v2930 = vpop.f32.mrf.mxu0
        %v2931 = vadd.f32 0.0, %v2930
        %v2932 = vpop.f32.mrf.mxu0
        %2933 = vmatprep.mubr.bf16.mxu0 0
        %2934 = vmatmul.mubr.bf16.gmra.mxu0 %v1510
        %v2935 = vpop.f32.mrf.mxu0
        %v2936 = vadd.f32 0.0, %v2935
        %v2937 = vpop.f32.mrf.mxu0
        %v2938 = vpop.f32.mrf.mxu0
        %v2939 = vadd.f32 0.0, %v2938
        %v2940 = vpop.f32.mrf.mxu0
        %2941 = vmatprep.mubr.bf16.mxu0 0
        %2942 = vmatmul.mubr.bf16.gmra.mxu0 %v1513
        %v2943 = vpop.f32.mrf.mxu0
        %v2944 = vadd.f32 0.0, %v2943
        %v2945 = vpop.f32.mrf.mxu0
        %v2946 = vpop.f32.mrf.mxu0
        %v2947 = vadd.f32 0.0, %v2946
        %v2948 = vpop.f32.mrf.mxu0
        %2949 = vmatprep.mubr.bf16.mxu0 0
        %2950 = vmatmul.mubr.bf16.gmra.mxu0 %v1516
        %v2951 = vpop.f32.mrf.mxu0
        %v2952 = vadd.f32 0.0, %v2951
        %v2953 = vpop.f32.mrf.mxu0
        %v2954 = vpop.f32.mrf.mxu0
        %v2955 = vadd.f32 0.0, %v2954
        %v2956 = vpop.f32.mrf.mxu0
        %2957 = vmatprep.mubr.bf16.mxu0 0
        %2958 = vmatmul.mubr.bf16.gmra.mxu0 %v2162
        %v2959 = vpop.f32.mrf.mxu0
        %v2960 = vadd.f32 0.0, %v2959
        %v2961 = vpop.f32.mrf.mxu0
        %v2962 = vpop.f32.mrf.mxu0
        %v2963 = vadd.f32 0.0, %v2962
        %v2964 = vpop.f32.mrf.mxu0
        %2965 = vmatprep.mubr.bf16.mxu0 0
        %2966 = vmatmul.mubr.bf16.gmra.mxu0 %v2808
        %v2967 = vpop.f32.mrf.mxu0
        %v2968 = vadd.f32 0.0, %v2967
        %v2969 = vpop.f32.mrf.mxu0
        %v2970 = vpop.f32.mrf.mxu0
        %v2971 = vadd.f32 0.0, %v2970
        %v2972 = vpop.f32.mrf.mxu0
        %2973 = vdwg.mxu0
        %v2974 = vadd.f32 %v2762, %v2848
        %v2975 = vadd.f32 %v2763, %v2851
        %v2976 = vadd.f32 %v2764, %v2856
        %v2977 = vadd.f32 %v2765, %v2859
        %v2978 = vadd.f32 %v2766, %v2864
        %v2979 = vadd.f32 %v2767, %v2867
        %v2980 = vadd.f32 %v2768, %v2872
        %v2981 = vadd.f32 %v2769, %v2875
        %v2982 = vadd.f32 %v2770, %v2880
        %v2983 = vadd.f32 %v2771, %v2883
        %v2984 = vadd.f32 %v2772, %v2888
        %v2985 = vadd.f32 %v2773, %v2891
        %v2986 = vadd.f32 %v2774, %v2896
        %v2987 = vadd.f32 %v2775, %v2899
        %v2988 = vadd.f32 %v2776, %v2904
        %v2989 = vadd.f32 %v2777, %v2907
        %v2990 = vadd.f32 %v2778, %v2912
        %v2991 = vadd.f32 %v2779, %v2915
        %v2992 = vadd.f32 %v2780, %v2920
        %v2993 = vadd.f32 %v2781, %v2923
        %v2994 = vadd.f32 %v2782, %v2928
        %v2995 = vadd.f32 %v2783, %v2931
        %v2996 = vadd.f32 %v2784, %v2936
        %v2997 = vadd.f32 %v2785, %v2939
        %v2998 = vadd.f32 %v2786, %v2944
        %v2999 = vadd.f32 %v2787, %v2947
        %v3000 = vadd.f32 %v2788, %v2952
        %v3001 = vadd.f32 %v2789, %v2955
        %v3002 = vadd.f32 %v2790, %v2960
        %v3003 = vadd.f32 %v2791, %v2963
        %v3004 = vadd.f32 %v2792, %v2968
        %v3005 = vadd.f32 %v2793, %v2971
        %v3006 = vld [vmem:[%s3] sm:$0x1]
        %v3008 = vlaneseq
        %v3009 = vshrl.u32 %v3008, 7
        %v3010 = vsub.s32 0, %v3009
        %v3011 = vrot.slane %v3006, %v3010
        %v3013 = vadd.f32 %v2974, %v3011
        %v3014 = vadd.f32 %v2975, %v3011
        %v3015 = vadd.f32 %v2976, %v3011
        %v3016 = vadd.f32 %v2977, %v3011
        %v3017 = vadd.f32 %v2978, %v3011
        %v3018 = vadd.f32 %v2979, %v3011
        %v3019 = vadd.f32 %v2980, %v3011
        %v3020 = vadd.f32 %v2981, %v3011
        %v3021 = vadd.f32 %v2982, %v3011
        %v3022 = vadd.f32 %v2983, %v3011
        %v3023 = vadd.f32 %v2984, %v3011
        %v3024 = vadd.f32 %v2985, %v3011
        %v3025 = vadd.f32 %v2986, %v3011
        %v3026 = vadd.f32 %v2987, %v3011
        %v3027 = vadd.f32 %v2988, %v3011
        %v3028 = vadd.f32 %v2989, %v3011
        %v3029 = vadd.f32 %v2990, %v3011
        %v3030 = vadd.f32 %v2991, %v3011
        %v3031 = vadd.f32 %v2992, %v3011
        %v3032 = vadd.f32 %v2993, %v3011
        %v3033 = vadd.f32 %v2994, %v3011
        %v3034 = vadd.f32 %v2995, %v3011
        %v3035 = vadd.f32 %v2996, %v3011
        %v3036 = vadd.f32 %v2997, %v3011
        %v3037 = vadd.f32 %v2998, %v3011
        %v3038 = vadd.f32 %v2999, %v3011
        %v3039 = vadd.f32 %v3000, %v3011
        %v3040 = vadd.f32 %v3001, %v3011
        %v3041 = vadd.f32 %v3002, %v3011
        %v3042 = vadd.f32 %v3003, %v3011
        %v3043 = vadd.f32 %v3004, %v3011
        %v3044 = vadd.f32 %v3005, %v3011
        %v3045 = vmax.f32 %v3013, 0.0
        %v3046 = vmax.f32 %v3014, 0.0
        %v3047 = vmax.f32 %v3015, 0.0
        %v3048 = vmax.f32 %v3016, 0.0
        %v3049 = vmax.f32 %v3017, 0.0
        %v3050 = vmax.f32 %v3018, 0.0
        %v3051 = vmax.f32 %v3019, 0.0
        %v3052 = vmax.f32 %v3020, 0.0
        %v3053 = vmax.f32 %v3021, 0.0
        %v3054 = vmax.f32 %v3022, 0.0
        %v3055 = vmax.f32 %v3023, 0.0
        %v3056 = vmax.f32 %v3024, 0.0
        %v3057 = vmax.f32 %v3025, 0.0
        %v3058 = vmax.f32 %v3026, 0.0
        %v3059 = vmax.f32 %v3027, 0.0
        %v3060 = vmax.f32 %v3028, 0.0
        %v3061 = vmax.f32 %v3029, 0.0
        %v3062 = vmax.f32 %v3030, 0.0
        %v3063 = vmax.f32 %v3031, 0.0
        %v3064 = vmax.f32 %v3032, 0.0
        %v3065 = vmax.f32 %v3033, 0.0
        %v3066 = vmax.f32 %v3034, 0.0
        %v3067 = vmax.f32 %v3035, 0.0
        %v3068 = vmax.f32 %v3036, 0.0
        %v3069 = vmax.f32 %v3037, 0.0
        %v3070 = vmax.f32 %v3038, 0.0
        %v3071 = vmax.f32 %v3039, 0.0
        %v3072 = vmax.f32 %v3040, 0.0
        %v3073 = vmax.f32 %v3041, 0.0
        %v3074 = vmax.f32 %v3042, 0.0
        %v3075 = vmax.f32 %v3043, 0.0
        %v3076 = vmax.f32 %v3044, 0.0
        %vm3077 = vcmask 64512
        %v3078 = vsel %vm3077, %v3045, 0.0
        %v3079 = vsel %vm3077, %v3046, 0.0
        %v3080 = vadd.f32 %v3078, %v3079
        %v3081 = vsel %vm3077, %v3047, 0.0
        %v3082 = vadd.f32 %v3080, %v3081
        %v3083 = vsel %vm3077, %v3048, 0.0
        %v3084 = vadd.f32 %v3082, %v3083
        %v3085 = vsel %vm3077, %v3049, 0.0
        %v3086 = vadd.f32 %v3084, %v3085
        %v3087 = vsel %vm3077, %v3050, 0.0
        %v3088 = vadd.f32 %v3086, %v3087
        %v3089 = vsel %vm3077, %v3051, 0.0
        %v3090 = vadd.f32 %v3088, %v3089
        %v3091 = vsel %vm3077, %v3052, 0.0
        %v3092 = vadd.f32 %v3090, %v3091
        %v3093 = vsel %vm3077, %v3053, 0.0
        %v3094 = vadd.f32 %v3092, %v3093
        %v3095 = vsel %vm3077, %v3054, 0.0
        %v3096 = vadd.f32 %v3094, %v3095
        %v3097 = vsel %vm3077, %v3055, 0.0
        %v3098 = vadd.f32 %v3096, %v3097
        %v3099 = vsel %vm3077, %v3056, 0.0
        %v3100 = vadd.f32 %v3098, %v3099
        %v3101 = vsel %vm3077, %v3057, 0.0
        %v3102 = vadd.f32 %v3100, %v3101
        %v3103 = vsel %vm3077, %v3058, 0.0
        %v3104 = vadd.f32 %v3102, %v3103
        %v3105 = vsel %vm3077, %v3059, 0.0
        %v3106 = vadd.f32 %v3104, %v3105
        %v3107 = vsel %vm3077, %v3060, 0.0
        %v3108 = vadd.f32 %v3106, %v3107
        %v3109 = vsel %vm3077, %v3061, 0.0
        %v3110 = vadd.f32 %v3108, %v3109
        %v3111 = vsel %vm3077, %v3062, 0.0
        %v3112 = vadd.f32 %v3110, %v3111
        %v3113 = vsel %vm3077, %v3063, 0.0
        %v3114 = vadd.f32 %v3112, %v3113
        %v3115 = vsel %vm3077, %v3064, 0.0
        %v3116 = vadd.f32 %v3114, %v3115
        %v3117 = vsel %vm3077, %v3065, 0.0
        %v3118 = vadd.f32 %v3116, %v3117
        %v3119 = vsel %vm3077, %v3066, 0.0
        %v3120 = vadd.f32 %v3118, %v3119
        %v3121 = vsel %vm3077, %v3067, 0.0
        %v3122 = vadd.f32 %v3120, %v3121
        %v3123 = vsel %vm3077, %v3068, 0.0
        %v3124 = vadd.f32 %v3122, %v3123
        %v3125 = vsel %vm3077, %v3069, 0.0
        %v3126 = vadd.f32 %v3124, %v3125
        %v3127 = vsel %vm3077, %v3070, 0.0
        %v3128 = vadd.f32 %v3126, %v3127
        %v3129 = vsel %vm3077, %v3071, 0.0
        %v3130 = vadd.f32 %v3128, %v3129
        %v3131 = vsel %vm3077, %v3072, 0.0
        %v3132 = vadd.f32 %v3130, %v3131
        %v3133 = vsel %vm3077, %v3073, 0.0
        %v3134 = vadd.f32 %v3132, %v3133
        %v3135 = vsel %vm3077, %v3074, 0.0
        %v3136 = vadd.f32 %v3134, %v3135
        %v3137 = vsel %vm3077, %v3075, 0.0
        %v3138 = vadd.f32 %v3136, %v3137
        %v3139 = vsel %vm3077, %v3076, 0.0
        %v3140 = vadd.f32 %v3138, %v3139
        %v3141 = vrot.slane %v3140, 4
        %v3142 = vadd.f32 %v3140, %v3141
        %v3143 = vrot.slane %v3142, 2
        %v3144 = vadd.f32 %v3142, %v3143
        %v3145 = vrot.slane %v3144, 1
        %v3146 = vadd.f32 %v3144, %v3145
        %v3147 = vld [vmem:[%s289] sm:$0x1]
        %v3148 = vld [vmem:[%s4] sm:$0xff]
        %v3149 = vld [vmem:[%s5] sm:$0xff]
        %v3150 = vld [vmem:[%s5 + $0x8] sm:$0xff]
        %v3151 = vld [vmem:[%s5 + $0x10] sm:$0xff]
        %v3152 = vld [vmem:[%s5 + $0x18] sm:$0xff]
        %v3153 = vld [vmem:[%s5 + $0x20] sm:$0xff]
        %v3154 = vld [vmem:[%s5 + $0x28] sm:$0xff]
        %v3155 = vld [vmem:[%s5 + $0x30] sm:$0xff]
        %v3156 = vld [vmem:[%s5 + $0x38] sm:$0xff]
        %vm3157 = vcmask 523264
        %v3159 = vsel %vm3157, %v3147, 0
        %3161 = vmatprep.subr.mxu0 0.0
        %3162 = vmatpush1.msra.mxu0 0.0
        %3163 = vmatprep.subr.mxu0 0.0
        %3164 = vmatpush1.msra.mxu0 0.0
        %3165 = vmatprep.subr.mxu0 0.0
        %3166 = vmatpush1.msra.mxu0 0.0
        %3167 = vmatprep.subr.mxu0 0.0
        %3168 = vmatpush1.msra.mxu0 0.0
        %3169 = vmatprep.subr.mxu0 0.0
        %3170 = vmatpush1.msra.mxu0 0.0
        %3171 = vmatprep.subr.mxu0 0.0
        %3172 = vmatpush1.msra.mxu0 0.0
        %3173 = vmatprep.subr.mxu0 0.0
        %3174 = vmatpush1.msra.mxu0 0.0
        %3175 = vmatprep.subr.mxu0 0.0
        %3176 = vmatpush1.msra.mxu0 0.0
        %3177 = vmatprep.subr.mxu0 0.0
        %3178 = vmatpush1.msra.mxu0 %v3156
        %3179 = vmatprep.subr.mxu0 0.0
        %3180 = vmatpush1.msra.mxu0 %v3155
        %3181 = vmatprep.subr.mxu0 0.0
        %3182 = vmatpush1.msra.mxu0 %v3154
        %3183 = vmatprep.subr.mxu0 0.0
        %3184 = vmatpush1.msra.mxu0 %v3153
        %3185 = vmatprep.subr.mxu0 0.0
        %3186 = vmatpush1.msra.mxu0 %v3152
        %3187 = vmatprep.subr.mxu0 0.0
        %3188 = vmatpush1.msra.mxu0 %v3151
        %3189 = vmatprep.subr.mxu0 0.0
        %3190 = vmatpush1.msra.mxu0 %v3150
        %3191 = vmatprep.subr.mxu0 0.0
        %3192 = vmatpush1.msra.mxu0 %v3149
        %3193 = vmatprep.subr.mxu0 0.0
        %3194 = vmatpush2.msra.mxu0 0.0
        %3195 = vmatprep.subr.mxu0 0.0
        %3196 = vmatpush2.msra.mxu0 0.0
        %3197 = vmatprep.subr.mxu0 0.0
        %3198 = vmatpush2.msra.mxu0 0.0
        %3199 = vmatprep.subr.mxu0 0.0
        %3200 = vmatpush2.msra.mxu0 0.0
        %3201 = vmatprep.subr.mxu0 0.0
        %3202 = vmatpush2.msra.mxu0 0.0
        %3203 = vmatprep.subr.mxu0 0.0
        %3204 = vmatpush2.msra.mxu0 0.0
        %3205 = vmatprep.subr.mxu0 0.0
        %3206 = vmatpush2.msra.mxu0 0.0
        %3207 = vmatprep.subr.mxu0 0.0
        %3208 = vmatpush2.msra.mxu0 0.0
        %3209 = vmatprep.subr.mxu0 0.0
        %3210 = vmatpush2.msra.mxu0 0.0
        %3211 = vmatprep.subr.mxu0 0.0
        %3212 = vmatpush2.msra.mxu0 0.0
        %3213 = vmatprep.subr.mxu0 0.0
        %3214 = vmatpush2.msra.mxu0 0.0
        %3215 = vmatprep.subr.mxu0 0.0
        %3216 = vmatpush2.msra.mxu0 0.0
        %3217 = vmatprep.subr.mxu0 0.0
        %3218 = vmatpush2.msra.mxu0 0.0
        %3219 = vmatprep.subr.mxu0 0.0
        %3220 = vmatpush2.msra.mxu0 0.0
        %3221 = vmatprep.subr.mxu0 0.0
        %3222 = vmatpush2.msra.mxu0 0.0
        %3223 = vmatprep.subr.mxu0 0.0
        %3224 = vmatpush2.msra.mxu0 0.0
        %3225 = vmatprep.mubr.f32.mxu0 0.0
        %3226 = vmatmul.mubr.f32.gmra.mxu0 %v3159
        %v3227 = vpop.f32.mrf.mxu0
        %v3228 = vadd.f32 0.0, %v3227
        %v3229 = vpop.f32.mrf.mxu0
        %3230 = vdwg.mxu0
        %v3232 = vsel %vm3077, %v3146, 0
        %3234 = vmatprep.subr.mxu0 0.0
        %3235 = vmatpush1.msra.mxu0 0.0
        %3236 = vmatprep.subr.mxu0 0.0
        %3237 = vmatpush1.msra.mxu0 0.0
        %3238 = vmatprep.subr.mxu0 0.0
        %3239 = vmatpush1.msra.mxu0 0.0
        %3240 = vmatprep.subr.mxu0 0.0
        %3241 = vmatpush1.msra.mxu0 0.0
        %3242 = vmatprep.subr.mxu0 0.0
        %3243 = vmatpush1.msra.mxu0 0.0
        %3244 = vmatprep.subr.mxu0 0.0
        %3245 = vmatpush1.msra.mxu0 0.0
        %3246 = vmatprep.subr.mxu0 0.0
        %3247 = vmatpush1.msra.mxu0 0.0
        %3248 = vmatprep.subr.mxu0 0.0
        %3249 = vmatpush1.msra.mxu0 0.0
        %3250 = vmatprep.subr.mxu0 0.0
        %3251 = vmatpush1.msra.mxu0 0.0
        %3252 = vmatprep.subr.mxu0 0.0
        %3253 = vmatpush1.msra.mxu0 0.0
        %3254 = vmatprep.subr.mxu0 0.0
        %3255 = vmatpush1.msra.mxu0 0.0
        %3256 = vmatprep.subr.mxu0 0.0
        %3257 = vmatpush1.msra.mxu0 0.0
        %3258 = vmatprep.subr.mxu0 0.0
        %3259 = vmatpush1.msra.mxu0 0.0
        %3260 = vmatprep.subr.mxu0 0.0
        %3261 = vmatpush1.msra.mxu0 0.0
        %3262 = vmatprep.subr.mxu0 0.0
        %3263 = vmatpush1.msra.mxu0 0.0
        %3264 = vmatprep.subr.mxu0 0.0
        %3265 = vmatpush1.msra.mxu0 %v3148
        %3266 = vmatprep.subr.mxu0 0.0
        %3267 = vmatpush2.msra.mxu0 0.0
        %3268 = vmatprep.subr.mxu0 0.0
        %3269 = vmatpush2.msra.mxu0 0.0
        %3270 = vmatprep.subr.mxu0 0.0
        %3271 = vmatpush2.msra.mxu0 0.0
        %3272 = vmatprep.subr.mxu0 0.0
        %3273 = vmatpush2.msra.mxu0 0.0
        %3274 = vmatprep.subr.mxu0 0.0
        %3275 = vmatpush2.msra.mxu0 0.0
        %3276 = vmatprep.subr.mxu0 0.0
        %3277 = vmatpush2.msra.mxu0 0.0
        %3278 = vmatprep.subr.mxu0 0.0
        %3279 = vmatpush2.msra.mxu0 0.0
        %3280 = vmatprep.subr.mxu0 0.0
        %3281 = vmatpush2.msra.mxu0 0.0
        %3282 = vmatprep.subr.mxu0 0.0
        %3283 = vmatpush2.msra.mxu0 0.0
        %3284 = vmatprep.subr.mxu0 0.0
        %3285 = vmatpush2.msra.mxu0 0.0
        %3286 = vmatprep.subr.mxu0 0.0
        %3287 = vmatpush2.msra.mxu0 0.0
        %3288 = vmatprep.subr.mxu0 0.0
        %3289 = vmatpush2.msra.mxu0 0.0
        %3290 = vmatprep.subr.mxu0 0.0
        %3291 = vmatpush2.msra.mxu0 0.0
        %3292 = vmatprep.subr.mxu0 0.0
        %3293 = vmatpush2.msra.mxu0 0.0
        %3294 = vmatprep.subr.mxu0 0.0
        %3295 = vmatpush2.msra.mxu0 0.0
        %3296 = vmatprep.subr.mxu0 0.0
        %3297 = vmatpush2.msra.mxu0 0.0
        %3298 = vmatprep.mubr.f32.mxu0 0.0
        %3299 = vmatmul.mubr.f32.gmra.mxu0 %v3232
        %v3300 = vpop.f32.mrf.mxu0
        %v3301 = vadd.f32 %v3228, %v3300
        %v3302 = vpop.f32.mrf.mxu0
        %3303 = vdwg.mxu0
        %v3304 = vld [vmem:[%s6] sm:$0x1]
        %v3305 = vadd.f32 %v3301, %v3304
        %3306 = vst [vmem:[%s281] sm:$0x1] %v3305
        %s3307 = sand.u32 %s186, 1
        %s3308 = scalar_lea.sflag [#allocation3], %s3307
        %s3309 = sand.u32 %s186, 1
        %s3310 = scalar_lea.vmem [#allocation2], %s3309
        // Predicated region
        $region49: #{tpu_custom_call.1} parent=47 // pred_check
          %p3311 = pneg %p196
        $region50: #{tpu_custom_call.1} parent=47 // pred_check_branch
          %3313 = sbr.rel (%p3311) target = $region52
        $region51: #{tpu_custom_call.1} parent=47 // pred_region
          %s3315 = ssub.s32 16, 16
          %3316 = vsyncadd %s3308, %s3315
          %s3317 = smul.addr %s21, 16
          %s3318 = scalar_lea.hbm %s7, %s3317
          %s3320 = sshll.u32 %s3310, 4
          %s3321 = int_to_ptr.vmem [resolvable:$true] %s3320
          %3323 = dma.vmem_to_hbm [thread:$0]  %s3321, 16, %s3318, %s3308
        $region52: #{tpu_custom_call.1} parent=47 // pred_fallthru
          _
      $region48: #{tpu_custom_call.1} parent=5 // pred_fallthru
        _
      %p3324 = scmp.le.s32.totalorder 2, %s16
      // Predicated region
      $region53: #{tpu_custom_call.1} parent=5 // pred_check
        %p3325 = pneg %p3324
      $region54: #{tpu_custom_call.1} parent=5 // pred_check_branch
        %3327 = sbr.rel (%p3325) target = $region56
      $region55: #{tpu_custom_call.1} parent=5 // pred_region
        %s3328 = ssub.s32 %s16, 2
        // Predicated region
        $region57: #{tpu_custom_call.1} parent=55 // pred_check
          %p3329 = pneg %p202
        $region58: #{tpu_custom_call.1} parent=55 // pred_check_branch
          %3331 = sbr.rel (%p3329) target = $region60
        $region59: #{tpu_custom_call.1} parent=55 // pred_region
          %s3332 = sand.u32 %s187, 1
          %s3333 = scalar_lea.sflag [#allocation3], %s3332
          %s3334 = sand.u32 %s187, 1
          %s3335 = scalar_lea.vmem [#allocation2], %s3334
          %3336 = dma.done %s3333, 16
        $region60: #{tpu_custom_call.1} parent=55 // pred_fallthru
          _
      $region56: #{tpu_custom_call.1} parent=5 // pred_fallthru
        _
    $region6: #{tpu_custom_call.1} parent=1 // loop_footer
      %s20 = sadd.s32 1, %s16
    $region7: #{tpu_custom_call.1} parent=1 // loop_footer_branch
      %15 = sbr.rel target = $region3
    $region8: #{tpu_custom_call.1} parent=1 // loop_exit
      _
    %3337 = vsyncpa [#allocation3], 1
    %s3338 = scalar_lea.sflag [#allocation3], 1
    %3339 = vsyncpa %s3338, 1

</llo_original>
